<compile_context>
chip_gen: v7x
topology: tpu7x:2x2x1
jax: 0.10.0
libtpu: 0.0.40
codegen_flags: <defaults>
</compile_context>

<pallas_src>
import numpy as np
import jax
import jax.numpy as jnp
from jax.experimental import pallas as pl
from jax.experimental.pallas import tpu as pltpu

# ----------------------- MipNeRF360MLP default config -----------------------
NETDEPTH = 8
NETWIDTH = 256
BOTTLENECK_WIDTH = 256
NETDEPTH_CONDITION = 1          # default -> single view layer, no dir skip
NETWIDTH_CONDITION = 128
MIN_DEG_POINT = 0
MAX_DEG_POINT = 12
SKIP_LAYER = 4
NUM_RGB_CHANNELS = 3
NUM_DENSITY_CHANNELS = 1
DEG_VIEW = 4
DENSITY_BIAS = -1.0
RGB_PREMULTIPLIER = 1.0
RGB_BIAS = 0.0
RGB_PADDING = 0.001
EMBED_SIZE = 64

BD_WIDTH = 384                  # fused bottleneck(256) + density(1) head, lane-padded
OUT_WIDTH = 128                 # lane-dense combined output: [density, r, g, b, pad...]


# ----------------------- helper.generate_basis (numpy) ----------------------
def generate_basis_icosahedron(subdiv=2):
    """Icosahedron geodesic basis (multinerf-style), returns (3, P) float32."""
    a = (np.sqrt(5.0) + 1.0) / 2.0
    verts = np.array(
        [(-1, 0, a), (1, 0, a), (-1, 0, -a), (1, 0, -a), (0, a, 1), (0, a, -1),
         (0, -a, 1), (0, -a, -1), (a, 1, 0), (-a, 1, 0), (a, -1, 0),
         (-a, -1, 0)], dtype=np.float64) / np.sqrt(a + 2.0)
    faces = np.array(
        [(0, 4, 1), (0, 9, 4), (9, 5, 4), (4, 5, 8), (4, 8, 1), (8, 10, 1),
         (8, 3, 10), (5, 3, 8), (5, 2, 3), (2, 7, 3), (7, 10, 3), (7, 6, 10),
         (7, 11, 6), (11, 0, 6), (0, 1, 6), (6, 1, 10), (9, 0, 11), (9, 11, 2),
         (9, 2, 5), (7, 2, 11)])
    w = []
    for i in range(subdiv + 1):
        for j in range(subdiv + 1 - i):
            w.append((i, j, subdiv - i - j))
    w = np.array(w, dtype=np.float64) / subdiv
    all_v = []
    for f in faces:
        nv = w @ verts[f]
        nv /= np.linalg.norm(nv, axis=1, keepdims=True)
        all_v.append(nv)
    all_v = np.concatenate(all_v, 0)
    eps = 1e-4
    uniq = []
    for p in all_v:                                  # deduplicate
        if not any(np.sum((p - q) ** 2) < eps for q in uniq):
            uniq.append(p)
    uniq = np.array(uniq)
    keep = []
    for i in range(uniq.shape[0]):                   # keep one of each +/- pair
        has_later_antipode = any(
            np.all(np.abs(uniq[i] + uniq[j]) < eps) for j in range(i, uniq.shape[0]))
        if has_later_antipode:
            keep.append(i)
    basis = uniq[keep][:, ::-1]                      # (P, 3)
    return np.ascontiguousarray(basis.T).astype(np.float32)   # (3, P)


# ----------------------- helper fns (plain-JAX glue) -------------------------
def _contract_pt(x):                                 # x: (3,)
    eps = jnp.finfo(jnp.float32).eps
    m = jnp.maximum(eps, jnp.sum(x ** 2))
    return jnp.where(m <= 1.0, x, ((2.0 * jnp.sqrt(m) - 1.0) / m) * x)


def contract_gaussians(means, covs):
    """helper.contract: contraction with Jacobian-tracked covariances."""
    shp = means.shape
    m = means.reshape(-1, 3)
    c = covs.reshape(-1, 3, 3)
    mc = jax.vmap(_contract_pt)(m)
    J = jax.vmap(jax.jacfwd(_contract_pt))(m)        # (N, 3, 3)
    cc = jnp.einsum('nij,njk,nlk->nil', J, c, J)
    return mc.reshape(shp), cc.reshape(covs.shape)


def lift_and_diagonalize(means, covs, basis):        # basis: (3, P)
    fn_mean = jnp.matmul(means, basis)                               # (..., P)
    fn_cov_diag = jnp.sum(basis * jnp.matmul(covs, basis), axis=-2)  # (..., P)
    return fn_mean, fn_cov_diag


def integrated_pos_enc(means, variances, min_deg, max_deg):
    scales = 2.0 ** jnp.arange(min_deg, max_deg, dtype=jnp.float32)  # (D,)
    shape = means.shape[:-1] + (-1,)
    scaled_x = (means[..., None, :] * scales[:, None]).reshape(shape)
    scaled_var = (variances[..., None, :] * scales[:, None] ** 2).reshape(shape)
    x = jnp.concatenate([scaled_x, scaled_x + 0.5 * jnp.pi], axis=-1)
    x_var = jnp.concatenate([scaled_var, scaled_var], axis=-1)
    return jnp.exp(-0.5 * x_var) * jnp.sin(x)        # expected_sin


def pos_enc(x, min_deg, max_deg, append_identity=True):
    scales = 2.0 ** jnp.arange(min_deg, max_deg, dtype=jnp.float32)
    shape = x.shape[:-1] + (-1,)
    scaled_x = (x[..., None, :] * scales[:, None]).reshape(shape)
    four = jnp.sin(jnp.concatenate([scaled_x, scaled_x + 0.5 * jnp.pi], axis=-1))
    if append_identity:
        return jnp.concatenate([x, four], axis=-1)
    return four


# ----------------------- parameter construction ------------------------------
def _linear_params(key, fan_in, fan_out):
    kw, kb = jax.random.split(key)
    wb = np.sqrt(6.0 / fan_in)                       # kaiming_uniform_ bound
    bb = 1.0 / np.sqrt(fan_in)                       # default nn.Linear bias init
    w = jax.random.uniform(kw, (fan_in, fan_out), jnp.float32, -wb, wb)
    b = jax.random.uniform(kb, (1, fan_out), jnp.float32, -bb, bb)
    return w, b


def init_params(key, pos_size, view_pos_size):
    keys = jax.random.split(key, NETDEPTH + 5)
    params = {}
    in_dims = [pos_size] + [NETWIDTH] * (NETDEPTH - 1)
    in_dims[5] = NETWIDTH + pos_size                 # pts_linear[5] sees the skip concat
    params['pts'] = [_linear_params(keys[i], in_dims[i], NETWIDTH)
                     for i in range(NETDEPTH)]
    params['density'] = _linear_params(keys[NETDEPTH], NETWIDTH, NUM_DENSITY_CHANNELS)
    params['bottleneck'] = _linear_params(keys[NETDEPTH + 1], NETWIDTH, BOTTLENECK_WIDTH)
    params['views'] = _linear_params(keys[NETDEPTH + 2],
                                     BOTTLENECK_WIDTH + view_pos_size,
                                     NETWIDTH_CONDITION)
    params['rgb'] = _linear_params(keys[NETDEPTH + 3], NETWIDTH_CONDITION, NUM_RGB_CHANNELS)
    params['bkgd_embed'] = jax.random.normal(keys[NETDEPTH + 4], (EMBED_SIZE,), jnp.float32)
    return params


# ----------------------- kernel-side weight preparation ----------------------
def _prepare_kernel_weights(params, ipe_dim, ipe_pad_dim):
    """Split / fold / pad the torch-layout weights into kernel arguments.

    Returns a flat list: bf16 weights, f32 biases, in kernel-argument order.
    """
    embed = params['bkgd_embed']                                    # (64,)

    # Layer 0: drop embed columns from the input; fold their (constant)
    # contribution into the bias.  Pad the IPE rows to a multiple of 128.
    w0, b0 = params['pts'][0]                                       # (ipe+64, 256)
    w0_x = jnp.pad(w0[:ipe_dim], ((0, ipe_pad_dim - ipe_dim), (0, 0)))
    b0_eff = b0 + embed[None, :] @ w0[ipe_dim:]

    mids = [params['pts'][i] for i in (1, 2, 3, 4, 6, 7)]

    # Layer 5 (skip layer): split concat([h, inputs]) @ W5 into h @ W5_h + x @ W5_x,
    # with the embed part of `inputs` folded into the bias.
    w5, b5 = params['pts'][5]                                       # (256+ipe+64, 256)
    w5_h = w5[:NETWIDTH]
    w5_x = jnp.pad(w5[NETWIDTH:NETWIDTH + ipe_dim],
                   ((0, ipe_pad_dim - ipe_dim), (0, 0)))
    b5_eff = b5 + embed[None, :] @ w5[NETWIDTH + ipe_dim:]

    # Fused bottleneck + density head (lane-aligned 384-wide output).
    wd, bd = params['density']                                      # (256,1),(1,1)
    wb, bb = params['bottleneck']                                   # (256,256),(1,256)
    wbd = jnp.zeros((NETWIDTH, BD_WIDTH), jnp.float32)
    wbd = wbd.at[:, :BOTTLENECK_WIDTH].set(wb)
    wbd = wbd.at[:, BOTTLENECK_WIDTH:BOTTLENECK_WIDTH + NUM_DENSITY_CHANNELS].set(wd)
    bbd = jnp.zeros((1, BD_WIDTH), jnp.float32)
    bbd = bbd.at[:, :BOTTLENECK_WIDTH].set(bb)
    bbd = bbd.at[:, BOTTLENECK_WIDTH:BOTTLENECK_WIDTH + NUM_DENSITY_CHANNELS].set(bd)

    # View layer: only the bottleneck part stays in the kernel; the direction
    # part (K=27) + bias is precomputed per ray in the wrapper.
    wv, _bv = params['views']                                       # (283,128)
    wv_b = wv[:BOTTLENECK_WIDTH]

    # RGB head padded to 128 lanes; rgb occupies columns 1..3 so that the
    # combined output block is [density, r, g, b, pad...].
    wr, br = params['rgb']                                          # (128,3),(1,3)
    wrgb = jnp.zeros((NETWIDTH_CONDITION, OUT_WIDTH), jnp.float32)
    wrgb = wrgb.at[:, 1:1 + NUM_RGB_CHANNELS].set(wr)
    brgb = jnp.zeros((1, OUT_WIDTH), jnp.float32)
    brgb = brgb.at[:, 1:1 + NUM_RGB_CHANNELS].set(br)

    bf = lambda a: a.astype(jnp.bfloat16)
    args = [bf(w0_x), b0_eff]
    for (w, b) in mids[:4]:                                         # layers 1..4
        args += [bf(w), b]
    args += [bf(w5_h), bf(w5_x), b5_eff]                            # layer 5 (skip)
    for (w, b) in mids[4:]:                                         # layers 6, 7
        args += [bf(w), b]
    args += [bf(wbd), bbd, bf(wv_b), bf(wrgb), brgb]
    return args


# ----------------------- Pallas kernel ---------------------------------------
def _mlp_kernel(x_ref, dirc_ref,
                w0_ref, b0_ref,
                w1_ref, b1_ref, w2_ref, b2_ref, w3_ref, b3_ref, w4_ref, b4_ref,
                w5h_ref, w5x_ref, b5_ref,
                w6_ref, b6_ref, w7_ref, b7_ref,
                wbd_ref, bbd_ref, wvb_ref, wrgb_ref, brgb_ref,
                out_ref):
    def dot32(a, w_ref):                             # bf16 x bf16 -> f32 accum
        return jnp.dot(a, w_ref[...], preferred_element_type=jnp.float32)

    def relu_bf16(v):                                # f32 relu, bf16 for next matmul
        return jnp.maximum(v, 0.0).astype(jnp.bfloat16)

    x = x_ref[...]                                   # (TM, IPE_PAD) bf16
    h = relu_bf16(dot32(x, w0_ref) + b0_ref[...])
    h = relu_bf16(dot32(h, w1_ref) + b1_ref[...])
    h = relu_bf16(dot32(h, w2_ref) + b2_ref[...])
    h = relu_bf16(dot32(h, w3_ref) + b3_ref[...])
    h = relu_bf16(dot32(h, w4_ref) + b4_ref[...])
    # Skip connection (idx == 4): concat([h, inputs]) folded into a split matmul.
    h = relu_bf16(dot32(h, w5h_ref) + dot32(x, w5x_ref) + b5_ref[...])
    h = relu_bf16(dot32(h, w6_ref) + b6_ref[...])
    h = relu_bf16(dot32(h, w7_ref) + b7_ref[...])

    # Fused bottleneck(256) + density(1) head, lane-padded to 384.
    bd = dot32(h, wbd_ref) + bbd_ref[...]            # (TM, 384) f32
    density = jax.nn.softplus(
        bd[:, BOTTLENECK_WIDTH:BOTTLENECK_WIDTH + NUM_DENSITY_CHANNELS] + DENSITY_BIAS)
    bottleneck = bd[:, :BOTTLENECK_WIDTH].astype(jnp.bfloat16)

    # View layer (netdepth_condition == 1): dir contribution precomputed per ray.
    hv = relu_bf16(dot32(bottleneck, wvb_ref) + dirc_ref[...])
    rgb_raw = dot32(hv, wrgb_ref) + brgb_ref[...]    # (TM, 128), rgb in cols 1..3
    rgb = jax.nn.sigmoid(RGB_PREMULTIPLIER * rgb_raw + RGB_BIAS)
    rgb = rgb * (1.0 + 2.0 * RGB_PADDING) - RGB_PADDING

    # Lane-dense combined output: column 0 = density, columns 1..3 = rgb.
    lane = jax.lax.broadcasted_iota(jnp.int32, rgb.shape, 1)
    out_ref[...] = jnp.where(lane == 0, density, rgb)


def _choose_tm(n):
    """Large tiles feed the MXU; keep >= 2 grid blocks when possible so the
    'parallel' axis can shard across both TensorCores on v7x."""
    for tm in (512, 256, 128, 64, 32, 16, 8):
        if n >= 2 * tm:
            return tm
    return 8


# ----------------------- forward wrapper -------------------------------------
def mipnerf360_mlp_forward(params, pos_basis_t, means, covs, viewdirs):
    """Forward pass. means: (B,R,3), covs: (B,R,3,3), viewdirs: (B,3)."""
    # TODO(synk): multi-state background embedding selection (transitions_times.json
    # branch) and randomized density/bottleneck noise are not implemented; this is
    # the single-embedding inference path.
    B, R, _ = means.shape
    basis_dim = pos_basis_t.shape[-1]
    ipe_dim = (MAX_DEG_POINT - MIN_DEG_POINT) * 2 * basis_dim
    ipe_pad_dim = ipe_dim + ((-ipe_dim) % 128)

    # ---- predict_density preamble (glue) ----
    c_means, c_covs = contract_gaussians(means, covs)
    lifted_means, lifted_vars = lift_and_diagonalize(c_means, c_covs, pos_basis_t)
    x_ipe = integrated_pos_enc(lifted_means, lifted_vars, MIN_DEG_POINT, MAX_DEG_POINT)

    # Per-ray direction contribution of the view layer, precomputed in f32:
    # dir_enc(B,27) @ Wv_dir(27,128) + bv  ->  (B,128)
    dir_enc = pos_enc(viewdirs, 0, DEG_VIEW, True)                   # (B, 27)
    wv, bv = params['views']
    dir_contrib = dir_enc @ wv[BOTTLENECK_WIDTH:] + bv               # (B, 128)
    dir_contrib = jnp.broadcast_to(dir_contrib[:, None, :],
                                   (B, R, NETWIDTH_CONDITION))

    N = B * R
    TM = _choose_tm(N)
    Np = ((N + TM - 1) // TM) * TM

    x_flat = x_ipe.reshape(N, ipe_dim).astype(jnp.float32)
    x_flat = jnp.pad(x_flat, ((0, Np - N), (0, ipe_pad_dim - ipe_dim)))
    x_flat = x_flat.astype(jnp.bfloat16)                              # (Np, ipe_pad)
    d_flat = jnp.pad(dir_contrib.reshape(N, NETWIDTH_CONDITION).astype(jnp.float32),
                     ((0, Np - N), (0, 0)))                           # (Np, 128)

    weight_args = _prepare_kernel_weights(params, ipe_dim, ipe_pad_dim)

    in_specs = ([pl.BlockSpec((TM, ipe_pad_dim), lambda i: (i, 0)),
                 pl.BlockSpec((TM, NETWIDTH_CONDITION), lambda i: (i, 0))] +
                [pl.BlockSpec(a.shape, lambda i: (0, 0)) for a in weight_args])
    out_specs = pl.BlockSpec((TM, OUT_WIDTH), lambda i: (i, 0))
    out_shape = jax.ShapeDtypeStruct((Np, OUT_WIDTH), jnp.float32)

    out = pl.pallas_call(
        _mlp_kernel,
        out_shape=out_shape,
        grid=(Np // TM,),
        in_specs=in_specs,
        out_specs=out_specs,
        compiler_params=pltpu.CompilerParams(
            dimension_semantics=("parallel",),
            vmem_limit_bytes=48 * 1024 * 1024),
    )(x_flat, d_flat, *weight_args)

    density = out[:N, 0].reshape(B, R)
    rgb = out[:N, 1:1 + NUM_RGB_CHANNELS].reshape(B, R, NUM_RGB_CHANNELS)
    return {'density': density, 'rgb': rgb}


# ----------------------- demo / smoke test -----------------------------------
if __name__ == "__main__":
    key = jax.random.PRNGKey(0)
    k_means, k_cov, k_view, k_params = jax.random.split(key, 4)

    B, R = 2, 64                                  # small batch / samples-per-ray
    means = jax.random.normal(k_means, (B, R, 3), jnp.float32) * 2.0
    A = jax.random.normal(k_cov, (B, R, 3, 3), jnp.float32) * 0.1
    covs = jnp.einsum('...ij,...kj->...ik', A, A) + 1e-3 * jnp.eye(3, dtype=jnp.float32)
    viewdirs = jax.random.normal(k_view, (B, 3), jnp.float32)
    viewdirs = viewdirs / jnp.linalg.norm(viewdirs, axis=-1, keepdims=True)

    pos_basis_t = jnp.asarray(generate_basis_icosahedron(2))          # (3, 21)
    basis_dim = pos_basis_t.shape[-1]
    pos_size = (MAX_DEG_POINT - MIN_DEG_POINT) * 2 * basis_dim + EMBED_SIZE
    view_pos_size = (DEG_VIEW * 2 + 1) * 3

    params = init_params(k_params, pos_size, view_pos_size)

    fwd = jax.jit(mipnerf360_mlp_forward)
    out = fwd(params, pos_basis_t, means, covs, viewdirs)
    jax.block_until_ready(out)

    assert out['density'].shape == (B, R)
    assert out['rgb'].shape == (B, R, 3)
    assert bool(jnp.all(jnp.isfinite(out['density'])))
    assert bool(jnp.all(jnp.isfinite(out['rgb'])))
    print("KERNEL_OK")
</pallas_src>

<mosaic_0001>
module attributes {stable_mosaic.version = 11 : i64} {
  func.func @_mlp_kernel(%arg0: i32, %arg1: memref<64x512xbf16, #tpu.memory_space<vmem>>, %arg2: memref<64x128xf32, #tpu.memory_space<vmem>>, %arg3: memref<512x256xbf16, #tpu.memory_space<vmem>>, %arg4: memref<1x256xf32, #tpu.memory_space<vmem>>, %arg5: memref<256x256xbf16, #tpu.memory_space<vmem>>, %arg6: memref<1x256xf32, #tpu.memory_space<vmem>>, %arg7: memref<256x256xbf16, #tpu.memory_space<vmem>>, %arg8: memref<1x256xf32, #tpu.memory_space<vmem>>, %arg9: memref<256x256xbf16, #tpu.memory_space<vmem>>, %arg10: memref<1x256xf32, #tpu.memory_space<vmem>>, %arg11: memref<256x256xbf16, #tpu.memory_space<vmem>>, %arg12: memref<1x256xf32, #tpu.memory_space<vmem>>, %arg13: memref<256x256xbf16, #tpu.memory_space<vmem>>, %arg14: memref<512x256xbf16, #tpu.memory_space<vmem>>, %arg15: memref<1x256xf32, #tpu.memory_space<vmem>>, %arg16: memref<256x256xbf16, #tpu.memory_space<vmem>>, %arg17: memref<1x256xf32, #tpu.memory_space<vmem>>, %arg18: memref<256x256xbf16, #tpu.memory_space<vmem>>, %arg19: memref<1x256xf32, #tpu.memory_space<vmem>>, %arg20: memref<256x384xbf16, #tpu.memory_space<vmem>>, %arg21: memref<1x384xf32, #tpu.memory_space<vmem>>, %arg22: memref<256x128xbf16, #tpu.memory_space<vmem>>, %arg23: memref<128x128xbf16, #tpu.memory_space<vmem>>, %arg24: memref<1x128xf32, #tpu.memory_space<vmem>>, %arg25: memref<64x128xf32, #tpu.memory_space<vmem>>) attributes {dimension_semantics = [#tpu.dimension_semantics<parallel>], iteration_bounds = array<i64: 2>, scalar_prefetch = 0 : i64, scratch_operands = 0 : i64, tpu.core_type = #tpu.core_type<tc>, window_params = [{transform_indices = @transform_0, window_bounds = array<i64: 64, 512>}, {transform_indices = @transform_1, window_bounds = array<i64: 64, 128>}, {pipeline_mode = #tpu.pipeline_mode<synchronous>, transform_indices = @transform_2, window_bounds = array<i64: 512, 256>}, {pipeline_mode = #tpu.pipeline_mode<synchronous>, transform_indices = @transform_3, window_bounds = array<i64: 1, 256>}, {pipeline_mode = #tpu.pipeline_mode<synchronous>, transform_indices = @transform_4, window_bounds = array<i64: 256, 256>}, {pipeline_mode = #tpu.pipeline_mode<synchronous>, transform_indices = @transform_5, window_bounds = array<i64: 1, 256>}, {pipeline_mode = #tpu.pipeline_mode<synchronous>, transform_indices = @transform_6, window_bounds = array<i64: 256, 256>}, {pipeline_mode = #tpu.pipeline_mode<synchronous>, transform_indices = @transform_7, window_bounds = array<i64: 1, 256>}, {pipeline_mode = #tpu.pipeline_mode<synchronous>, transform_indices = @transform_8, window_bounds = array<i64: 256, 256>}, {pipeline_mode = #tpu.pipeline_mode<synchronous>, transform_indices = @transform_9, window_bounds = array<i64: 1, 256>}, {pipeline_mode = #tpu.pipeline_mode<synchronous>, transform_indices = @transform_10, window_bounds = array<i64: 256, 256>}, {pipeline_mode = #tpu.pipeline_mode<synchronous>, transform_indices = @transform_11, window_bounds = array<i64: 1, 256>}, {pipeline_mode = #tpu.pipeline_mode<synchronous>, transform_indices = @transform_12, window_bounds = array<i64: 256, 256>}, {pipeline_mode = #tpu.pipeline_mode<synchronous>, transform_indices = @transform_13, window_bounds = array<i64: 512, 256>}, {pipeline_mode = #tpu.pipeline_mode<synchronous>, transform_indices = @transform_14, window_bounds = array<i64: 1, 256>}, {pipeline_mode = #tpu.pipeline_mode<synchronous>, transform_indices = @transform_15, window_bounds = array<i64: 256, 256>}, {pipeline_mode = #tpu.pipeline_mode<synchronous>, transform_indices = @transform_16, window_bounds = array<i64: 1, 256>}, {pipeline_mode = #tpu.pipeline_mode<synchronous>, transform_indices = @transform_17, window_bounds = array<i64: 256, 256>}, {pipeline_mode = #tpu.pipeline_mode<synchronous>, transform_indices = @transform_18, window_bounds = array<i64: 1, 256>}, {pipeline_mode = #tpu.pipeline_mode<synchronous>, transform_indices = @transform_19, window_bounds = array<i64: 256, 384>}, {pipeline_mode = #tpu.pipeline_mode<synchronous>, transform_indices = @transform_20, window_bounds = array<i64: 1, 384>}, {pipeline_mode = #tpu.pipeline_mode<synchronous>, transform_indices = @transform_21, window_bounds = array<i64: 256, 128>}, {pipeline_mode = #tpu.pipeline_mode<synchronous>, transform_indices = @transform_22, window_bounds = array<i64: 128, 128>}, {pipeline_mode = #tpu.pipeline_mode<synchronous>, transform_indices = @transform_23, window_bounds = array<i64: 1, 128>}, {transform_indices = @transform_24, window_bounds = array<i64: 64, 128>}]} {
    %c0 = arith.constant 0 : index
    %c0_0 = arith.constant 0 : index
    %0 = vector.load %arg1[%c0, %c0_0] : memref<64x512xbf16, #tpu.memory_space<vmem>>, vector<64x512xbf16>
    %c0_1 = arith.constant 0 : index
    %c0_2 = arith.constant 0 : index
    %1 = vector.load %arg3[%c0_1, %c0_2] : memref<512x256xbf16, #tpu.memory_space<vmem>>, vector<512x256xbf16>
    %cst = arith.constant dense<0.000000e+00> : vector<64x256xf32>
    %2 = tpu.matmul %0, %1, %cst {dimension_numbers = #tpu.dot_dimension_numbers<[1], [0], [0], [1], [0, 0, 1, 1], [], []>} : vector<64x512xbf16>, vector<512x256xbf16>, vector<64x256xf32> -> vector<64x256xf32>
    %c0_3 = arith.constant 0 : index
    %c0_4 = arith.constant 0 : index
    %3 = vector.load %arg4[%c0_3, %c0_4] : memref<1x256xf32, #tpu.memory_space<vmem>>, vector<1x256xf32>
    %4 = vector.broadcast %3 : vector<1x256xf32> to vector<64x256xf32>
    %5 = arith.addf %2, %4 : vector<64x256xf32>
    %cst_5 = arith.constant 0.000000e+00 : f32
    %6 = vector.broadcast %cst_5 : f32 to vector<64x256xf32>
    %7 = arith.maximumf %5, %6 : vector<64x256xf32>
    %8 = arith.truncf %7 : vector<64x256xf32> to vector<64x256xbf16>
    %c0_6 = arith.constant 0 : index
    %c0_7 = arith.constant 0 : index
    %9 = vector.load %arg5[%c0_6, %c0_7] : memref<256x256xbf16, #tpu.memory_space<vmem>>, vector<256x256xbf16>
    %cst_8 = arith.constant dense<0.000000e+00> : vector<64x256xf32>
    %10 = tpu.matmul %8, %9, %cst_8 {dimension_numbers = #tpu.dot_dimension_numbers<[1], [0], [0], [1], [0, 0, 1, 1], [], []>} : vector<64x256xbf16>, vector<256x256xbf16>, vector<64x256xf32> -> vector<64x256xf32>
    %c0_9 = arith.constant 0 : index
    %c0_10 = arith.constant 0 : index
    %11 = vector.load %arg6[%c0_9, %c0_10] : memref<1x256xf32, #tpu.memory_space<vmem>>, vector<1x256xf32>
    %12 = vector.broadcast %11 : vector<1x256xf32> to vector<64x256xf32>
    %13 = arith.addf %10, %12 : vector<64x256xf32>
    %cst_11 = arith.constant 0.000000e+00 : f32
    %14 = vector.broadcast %cst_11 : f32 to vector<64x256xf32>
    %15 = arith.maximumf %13, %14 : vector<64x256xf32>
    %16 = arith.truncf %15 : vector<64x256xf32> to vector<64x256xbf16>
    %c0_12 = arith.constant 0 : index
    %c0_13 = arith.constant 0 : index
    %17 = vector.load %arg7[%c0_12, %c0_13] : memref<256x256xbf16, #tpu.memory_space<vmem>>, vector<256x256xbf16>
    %cst_14 = arith.constant dense<0.000000e+00> : vector<64x256xf32>
    %18 = tpu.matmul %16, %17, %cst_14 {dimension_numbers = #tpu.dot_dimension_numbers<[1], [0], [0], [1], [0, 0, 1, 1], [], []>} : vector<64x256xbf16>, vector<256x256xbf16>, vector<64x256xf32> -> vector<64x256xf32>
    %c0_15 = arith.constant 0 : index
    %c0_16 = arith.constant 0 : index
    %19 = vector.load %arg8[%c0_15, %c0_16] : memref<1x256xf32, #tpu.memory_space<vmem>>, vector<1x256xf32>
    %20 = vector.broadcast %19 : vector<1x256xf32> to vector<64x256xf32>
    %21 = arith.addf %18, %20 : vector<64x256xf32>
    %cst_17 = arith.constant 0.000000e+00 : f32
    %22 = vector.broadcast %cst_17 : f32 to vector<64x256xf32>
    %23 = arith.maximumf %21, %22 : vector<64x256xf32>
    %24 = arith.truncf %23 : vector<64x256xf32> to vector<64x256xbf16>
    %c0_18 = arith.constant 0 : index
    %c0_19 = arith.constant 0 : index
    %25 = vector.load %arg9[%c0_18, %c0_19] : memref<256x256xbf16, #tpu.memory_space<vmem>>, vector<256x256xbf16>
    %cst_20 = arith.constant dense<0.000000e+00> : vector<64x256xf32>
    %26 = tpu.matmul %24, %25, %cst_20 {dimension_numbers = #tpu.dot_dimension_numbers<[1], [0], [0], [1], [0, 0, 1, 1], [], []>} : vector<64x256xbf16>, vector<256x256xbf16>, vector<64x256xf32> -> vector<64x256xf32>
    %c0_21 = arith.constant 0 : index
    %c0_22 = arith.constant 0 : index
    %27 = vector.load %arg10[%c0_21, %c0_22] : memref<1x256xf32, #tpu.memory_space<vmem>>, vector<1x256xf32>
    %28 = vector.broadcast %27 : vector<1x256xf32> to vector<64x256xf32>
    %29 = arith.addf %26, %28 : vector<64x256xf32>
    %cst_23 = arith.constant 0.000000e+00 : f32
    %30 = vector.broadcast %cst_23 : f32 to vector<64x256xf32>
    %31 = arith.maximumf %29, %30 : vector<64x256xf32>
    %32 = arith.truncf %31 : vector<64x256xf32> to vector<64x256xbf16>
    %c0_24 = arith.constant 0 : index
    %c0_25 = arith.constant 0 : index
    %33 = vector.load %arg11[%c0_24, %c0_25] : memref<256x256xbf16, #tpu.memory_space<vmem>>, vector<256x256xbf16>
    %cst_26 = arith.constant dense<0.000000e+00> : vector<64x256xf32>
    %34 = tpu.matmul %32, %33, %cst_26 {dimension_numbers = #tpu.dot_dimension_numbers<[1], [0], [0], [1], [0, 0, 1, 1], [], []>} : vector<64x256xbf16>, vector<256x256xbf16>, vector<64x256xf32> -> vector<64x256xf32>
    %c0_27 = arith.constant 0 : index
    %c0_28 = arith.constant 0 : index
    %35 = vector.load %arg12[%c0_27, %c0_28] : memref<1x256xf32, #tpu.memory_space<vmem>>, vector<1x256xf32>
    %36 = vector.broadcast %35 : vector<1x256xf32> to vector<64x256xf32>
    %37 = arith.addf %34, %36 : vector<64x256xf32>
    %cst_29 = arith.constant 0.000000e+00 : f32
    %38 = vector.broadcast %cst_29 : f32 to vector<64x256xf32>
    %39 = arith.maximumf %37, %38 : vector<64x256xf32>
    %40 = arith.truncf %39 : vector<64x256xf32> to vector<64x256xbf16>
    %c0_30 = arith.constant 0 : index
    %c0_31 = arith.constant 0 : index
    %41 = vector.load %arg13[%c0_30, %c0_31] : memref<256x256xbf16, #tpu.memory_space<vmem>>, vector<256x256xbf16>
    %cst_32 = arith.constant dense<0.000000e+00> : vector<64x256xf32>
    %42 = tpu.matmul %40, %41, %cst_32 {dimension_numbers = #tpu.dot_dimension_numbers<[1], [0], [0], [1], [0, 0, 1, 1], [], []>} : vector<64x256xbf16>, vector<256x256xbf16>, vector<64x256xf32> -> vector<64x256xf32>
    %c0_33 = arith.constant 0 : index
    %c0_34 = arith.constant 0 : index
    %43 = vector.load %arg14[%c0_33, %c0_34] : memref<512x256xbf16, #tpu.memory_space<vmem>>, vector<512x256xbf16>
    %cst_35 = arith.constant dense<0.000000e+00> : vector<64x256xf32>
    %44 = tpu.matmul %0, %43, %cst_35 {dimension_numbers = #tpu.dot_dimension_numbers<[1], [0], [0], [1], [0, 0, 1, 1], [], []>} : vector<64x512xbf16>, vector<512x256xbf16>, vector<64x256xf32> -> vector<64x256xf32>
    %45 = arith.addf %42, %44 : vector<64x256xf32>
    %c0_36 = arith.constant 0 : index
    %c0_37 = arith.constant 0 : index
    %46 = vector.load %arg15[%c0_36, %c0_37] : memref<1x256xf32, #tpu.memory_space<vmem>>, vector<1x256xf32>
    %47 = vector.broadcast %46 : vector<1x256xf32> to vector<64x256xf32>
    %48 = arith.addf %45, %47 : vector<64x256xf32>
    %cst_38 = arith.constant 0.000000e+00 : f32
    %49 = vector.broadcast %cst_38 : f32 to vector<64x256xf32>
    %50 = arith.maximumf %48, %49 : vector<64x256xf32>
    %51 = arith.truncf %50 : vector<64x256xf32> to vector<64x256xbf16>
    %c0_39 = arith.constant 0 : index
    %c0_40 = arith.constant 0 : index
    %52 = vector.load %arg16[%c0_39, %c0_40] : memref<256x256xbf16, #tpu.memory_space<vmem>>, vector<256x256xbf16>
    %cst_41 = arith.constant dense<0.000000e+00> : vector<64x256xf32>
    %53 = tpu.matmul %51, %52, %cst_41 {dimension_numbers = #tpu.dot_dimension_numbers<[1], [0], [0], [1], [0, 0, 1, 1], [], []>} : vector<64x256xbf16>, vector<256x256xbf16>, vector<64x256xf32> -> vector<64x256xf32>
    %c0_42 = arith.constant 0 : index
    %c0_43 = arith.constant 0 : index
    %54 = vector.load %arg17[%c0_42, %c0_43] : memref<1x256xf32, #tpu.memory_space<vmem>>, vector<1x256xf32>
    %55 = vector.broadcast %54 : vector<1x256xf32> to vector<64x256xf32>
    %56 = arith.addf %53, %55 : vector<64x256xf32>
    %cst_44 = arith.constant 0.000000e+00 : f32
    %57 = vector.broadcast %cst_44 : f32 to vector<64x256xf32>
    %58 = arith.maximumf %56, %57 : vector<64x256xf32>
    %59 = arith.truncf %58 : vector<64x256xf32> to vector<64x256xbf16>
    %c0_45 = arith.constant 0 : index
    %c0_46 = arith.constant 0 : index
    %60 = vector.load %arg18[%c0_45, %c0_46] : memref<256x256xbf16, #tpu.memory_space<vmem>>, vector<256x256xbf16>
    %cst_47 = arith.constant dense<0.000000e+00> : vector<64x256xf32>
    %61 = tpu.matmul %59, %60, %cst_47 {dimension_numbers = #tpu.dot_dimension_numbers<[1], [0], [0], [1], [0, 0, 1, 1], [], []>} : vector<64x256xbf16>, vector<256x256xbf16>, vector<64x256xf32> -> vector<64x256xf32>
    %c0_48 = arith.constant 0 : index
    %c0_49 = arith.constant 0 : index
    %62 = vector.load %arg19[%c0_48, %c0_49] : memref<1x256xf32, #tpu.memory_space<vmem>>, vector<1x256xf32>
    %63 = vector.broadcast %62 : vector<1x256xf32> to vector<64x256xf32>
    %64 = arith.addf %61, %63 : vector<64x256xf32>
    %cst_50 = arith.constant 0.000000e+00 : f32
    %65 = vector.broadcast %cst_50 : f32 to vector<64x256xf32>
    %66 = arith.maximumf %64, %65 : vector<64x256xf32>
    %67 = arith.truncf %66 : vector<64x256xf32> to vector<64x256xbf16>
    %c0_51 = arith.constant 0 : index
    %c0_52 = arith.constant 0 : index
    %68 = vector.load %arg20[%c0_51, %c0_52] : memref<256x384xbf16, #tpu.memory_space<vmem>>, vector<256x384xbf16>
    %cst_53 = arith.constant dense<0.000000e+00> : vector<64x384xf32>
    %69 = tpu.matmul %67, %68, %cst_53 {dimension_numbers = #tpu.dot_dimension_numbers<[1], [0], [0], [1], [0, 0, 1, 1], [], []>} : vector<64x256xbf16>, vector<256x384xbf16>, vector<64x384xf32> -> vector<64x384xf32>
    %c0_54 = arith.constant 0 : index
    %c0_55 = arith.constant 0 : index
    %70 = vector.load %arg21[%c0_54, %c0_55] : memref<1x384xf32, #tpu.memory_space<vmem>>, vector<1x384xf32>
    %71 = vector.broadcast %70 : vector<1x384xf32> to vector<64x384xf32>
    %72 = arith.addf %69, %71 : vector<64x384xf32>
    %73 = vector.extract_strided_slice %72 {offsets = [0, 256], sizes = [64, 1], strides = [1, 1]} : vector<64x384xf32> to vector<64x1xf32>
    %cst_56 = arith.constant -1.000000e+00 : f32
    %74 = vector.broadcast %cst_56 : f32 to vector<64x1xf32>
    %75 = arith.addf %73, %74 : vector<64x1xf32>
    %cst_57 = arith.constant 0.000000e+00 : f32
    %76 = vector.broadcast %cst_57 : f32 to vector<64x1xf32>
    %77 = arith.maximumf %75, %76 : vector<64x1xf32>
    %78 = vector.broadcast %cst_57 : f32 to vector<64x1xf32>
    %79 = arith.subf %75, %78 : vector<64x1xf32>
    %80 = arith.cmpf one, %79, %79 : vector<64x1xf32>
    %81 = vector.broadcast %cst_57 : f32 to vector<64x1xf32>
    %82 = arith.addf %75, %81 : vector<64x1xf32>
    %83 = math.absf %79 : vector<64x1xf32>
    %cst_58 = arith.constant 0.000000e+00 : f32
    %84 = vector.broadcast %cst_58 : f32 to vector<64x1xf32>
    %85 = arith.subf %84, %83 : vector<64x1xf32>
    %86 = math.exp %85 : vector<64x1xf32>
    %87 = math.log1p %86 : vector<64x1xf32>
    %88 = arith.addf %77, %87 : vector<64x1xf32>
    %89 = arith.select %80, %82, %88 : vector<64x1xi1>, vector<64x1xf32>
    %90 = vector.extract_strided_slice %72 {offsets = [0, 0], sizes = [64, 256], strides = [1, 1]} : vector<64x384xf32> to vector<64x256xf32>
    %91 = arith.truncf %90 : vector<64x256xf32> to vector<64x256xbf16>
    %c0_59 = arith.constant 0 : index
    %c0_60 = arith.constant 0 : index
    %92 = vector.load %arg22[%c0_59, %c0_60] : memref<256x128xbf16, #tpu.memory_space<vmem>>, vector<256x128xbf16>
    %cst_61 = arith.constant dense<0.000000e+00> : vector<64x128xf32>
    %93 = tpu.matmul %91, %92, %cst_61 {dimension_numbers = #tpu.dot_dimension_numbers<[1], [0], [0], [1], [0, 0, 1, 1], [], []>} : vector<64x256xbf16>, vector<256x128xbf16>, vector<64x128xf32> -> vector<64x128xf32>
    %c0_62 = arith.constant 0 : index
    %c0_63 = arith.constant 0 : index
    %94 = vector.load %arg2[%c0_62, %c0_63] : memref<64x128xf32, #tpu.memory_space<vmem>>, vector<64x128xf32>
    %95 = arith.addf %93, %94 : vector<64x128xf32>
    %cst_64 = arith.constant 0.000000e+00 : f32
    %96 = vector.broadcast %cst_64 : f32 to vector<64x128xf32>
    %97 = arith.maximumf %95, %96 : vector<64x128xf32>
    %98 = arith.truncf %97 : vector<64x128xf32> to vector<64x128xbf16>
    %c0_65 = arith.constant 0 : index
    %c0_66 = arith.constant 0 : index
    %99 = vector.load %arg23[%c0_65, %c0_66] : memref<128x128xbf16, #tpu.memory_space<vmem>>, vector<128x128xbf16>
    %cst_67 = arith.constant dense<0.000000e+00> : vector<64x128xf32>
    %100 = tpu.matmul %98, %99, %cst_67 {dimension_numbers = #tpu.dot_dimension_numbers<[1], [0], [0], [1], [0, 0, 1, 1], [], []>} : vector<64x128xbf16>, vector<128x128xbf16>, vector<64x128xf32> -> vector<64x128xf32>
    %c0_68 = arith.constant 0 : index
    %c0_69 = arith.constant 0 : index
    %101 = vector.load %arg24[%c0_68, %c0_69] : memref<1x128xf32, #tpu.memory_space<vmem>>, vector<1x128xf32>
    %102 = vector.broadcast %101 : vector<1x128xf32> to vector<64x128xf32>
    %103 = arith.addf %100, %102 : vector<64x128xf32>
    %cst_70 = arith.constant 1.000000e+00 : f32
    %104 = vector.broadcast %cst_70 : f32 to vector<64x128xf32>
    %105 = arith.mulf %104, %103 : vector<64x128xf32>
    %cst_71 = arith.constant 0.000000e+00 : f32
    %106 = vector.broadcast %cst_71 : f32 to vector<64x128xf32>
    %107 = arith.addf %105, %106 : vector<64x128xf32>
    %108 = arith.negf %107 : vector<64x128xf32>
    %109 = math.exp %108 : vector<64x128xf32>
    %cst_72 = arith.constant 1.000000e+00 : f32
    %110 = vector.broadcast %cst_72 : f32 to vector<64x128xf32>
    %111 = arith.addf %110, %109 : vector<64x128xf32>
    %112 = arith.divf %110, %111 : vector<64x128xf32>
    %cst_73 = arith.constant 1.002000e+00 : f32
    %113 = vector.broadcast %cst_73 : f32 to vector<64x128xf32>
    %114 = arith.mulf %112, %113 : vector<64x128xf32>
    %cst_74 = arith.constant 1.000000e-03 : f32
    %115 = vector.broadcast %cst_74 : f32 to vector<64x128xf32>
    %116 = arith.subf %114, %115 : vector<64x128xf32>
    %117 = tpu.iota {dimensions = array<i32: 1>} : vector<64x128xi32>
    %c0_i32 = arith.constant 0 : i32
    %118 = vector.broadcast %c0_i32 : i32 to vector<64x128xi32>
    %119 = arith.cmpi eq, %117, %118 : vector<64x128xi32>
    %120 = vector.shape_cast %89 : vector<64x1xf32> to vector<64x1xf32>
    %121 = vector.broadcast %120 : vector<64x1xf32> to vector<64x128xf32>
    %122 = arith.select %119, %121, %116 : vector<64x128xi1>, vector<64x128xf32>
    %c0_75 = arith.constant 0 : index
    %c0_76 = arith.constant 0 : index
    %123 = vector.load %arg25[%c0_75, %c0_76] : memref<64x128xf32, #tpu.memory_space<vmem>>, vector<64x128xf32>
    tpu.vector_store %arg25[%c0_75, %c0_76], %122 {strides = array<i32>} : memref<64x128xf32, #tpu.memory_space<vmem>>, vector<64x128xf32>,
    return
  }
  func.func @transform_0(%arg0: i32) -> (i32, i32) {
    %c0_i32 = arith.constant 0 : i32
    %c0_i32_0 = arith.constant 0 : i32
    return %arg0, %c0_i32 : i32, i32
  }
  func.func @transform_1(%arg0: i32) -> (i32, i32) {
    %c0_i32 = arith.constant 0 : i32
    %c0_i32_0 = arith.constant 0 : i32
    return %arg0, %c0_i32 : i32, i32
  }
  func.func @transform_2(%arg0: i32) -> (i32, i32) {
    %c0_i32 = arith.constant 0 : i32
    %c0_i32_0 = arith.constant 0 : i32
    %c0_i32_1 = arith.constant 0 : i32
    return %c0_i32, %c0_i32_0 : i32, i32
  }
  func.func @transform_3(%arg0: i32) -> (i32, i32) {
    %c0_i32 = arith.constant 0 : i32
    %c0_i32_0 = arith.constant 0 : i32
    %c0_i32_1 = arith.constant 0 : i32
    return %c0_i32, %c0_i32_0 : i32, i32
  }
  func.func @transform_4(%arg0: i32) -> (i32, i32) {
    %c0_i32 = arith.constant 0 : i32
    %c0_i32_0 = arith.constant 0 : i32
    %c0_i32_1 = arith.constant 0 : i32
    return %c0_i32, %c0_i32_0 : i32, i32
  }
  func.func @transform_5(%arg0: i32) -> (i32, i32) {
    %c0_i32 = arith.constant 0 : i32
    %c0_i32_0 = arith.constant 0 : i32
    %c0_i32_1 = arith.constant 0 : i32
    return %c0_i32, %c0_i32_0 : i32, i32
  }
  func.func @transform_6(%arg0: i32) -> (i32, i32) {
    %c0_i32 = arith.constant 0 : i32
    %c0_i32_0 = arith.constant 0 : i32
    %c0_i32_1 = arith.constant 0 : i32
    return %c0_i32, %c0_i32_0 : i32, i32
  }
  func.func @transform_7(%arg0: i32) -> (i32, i32) {
    %c0_i32 = arith.constant 0 : i32
    %c0_i32_0 = arith.constant 0 : i32
    %c0_i32_1 = arith.constant 0 : i32
    return %c0_i32, %c0_i32_0 : i32, i32
  }
  func.func @transform_8(%arg0: i32) -> (i32, i32) {
    %c0_i32 = arith.constant 0 : i32
    %c0_i32_0 = arith.constant 0 : i32
    %c0_i32_1 = arith.constant 0 : i32
    return %c0_i32, %c0_i32_0 : i32, i32
  }
  func.func @transform_9(%arg0: i32) -> (i32, i32) {
    %c0_i32 = arith.constant 0 : i32
    %c0_i32_0 = arith.constant 0 : i32
    %c0_i32_1 = arith.constant 0 : i32
    return %c0_i32, %c0_i32_0 : i32, i32
  }
  func.func @transform_10(%arg0: i32) -> (i32, i32) {
    %c0_i32 = arith.constant 0 : i32
    %c0_i32_0 = arith.constant 0 : i32
    %c0_i32_1 = arith.constant 0 : i32
    return %c0_i32, %c0_i32_0 : i32, i32
  }
  func.func @transform_11(%arg0: i32) -> (i32, i32) {
    %c0_i32 = arith.constant 0 : i32
    %c0_i32_0 = arith.constant 0 : i32
    %c0_i32_1 = arith.constant 0 : i32
    return %c0_i32, %c0_i32_0 : i32, i32
  }
  func.func @transform_12(%arg0: i32) -> (i32, i32) {
    %c0_i32 = arith.constant 0 : i32
    %c0_i32_0 = arith.constant 0 : i32
    %c0_i32_1 = arith.constant 0 : i32
    return %c0_i32, %c0_i32_0 : i32, i32
  }
  func.func @transform_13(%arg0: i32) -> (i32, i32) {
    %c0_i32 = arith.constant 0 : i32
    %c0_i32_0 = arith.constant 0 : i32
    %c0_i32_1 = arith.constant 0 : i32
    return %c0_i32, %c0_i32_0 : i32, i32
  }
  func.func @transform_14(%arg0: i32) -> (i32, i32) {
    %c0_i32 = arith.constant 0 : i32
    %c0_i32_0 = arith.constant 0 : i32
    %c0_i32_1 = arith.constant 0 : i32
    return %c0_i32, %c0_i32_0 : i32, i32
  }
  func.func @transform_15(%arg0: i32) -> (i32, i32) {
    %c0_i32 = arith.constant 0 : i32
    %c0_i32_0 = arith.constant 0 : i32
    %c0_i32_1 = arith.constant 0 : i32
    return %c0_i32, %c0_i32_0 : i32, i32
  }
  func.func @transform_16(%arg0: i32) -> (i32, i32) {
    %c0_i32 = arith.constant 0 : i32
    %c0_i32_0 = arith.constant 0 : i32
    %c0_i32_1 = arith.constant 0 : i32
    return %c0_i32, %c0_i32_0 : i32, i32
  }
  func.func @transform_17(%arg0: i32) -> (i32, i32) {
    %c0_i32 = arith.constant 0 : i32
    %c0_i32_0 = arith.constant 0 : i32
    %c0_i32_1 = arith.constant 0 : i32
    return %c0_i32, %c0_i32_0 : i32, i32
  }
  func.func @transform_18(%arg0: i32) -> (i32, i32) {
    %c0_i32 = arith.constant 0 : i32
    %c0_i32_0 = arith.constant 0 : i32
    %c0_i32_1 = arith.constant 0 : i32
    return %c0_i32, %c0_i32_0 : i32, i32
  }
  func.func @transform_19(%arg0: i32) -> (i32, i32) {
    %c0_i32 = arith.constant 0 : i32
    %c0_i32_0 = arith.constant 0 : i32
    %c0_i32_1 = arith.constant 0 : i32
    return %c0_i32, %c0_i32_0 : i32, i32
  }
  func.func @transform_20(%arg0: i32) -> (i32, i32) {
    %c0_i32 = arith.constant 0 : i32
    %c0_i32_0 = arith.constant 0 : i32
    %c0_i32_1 = arith.constant 0 : i32
    return %c0_i32, %c0_i32_0 : i32, i32
  }
  func.func @transform_21(%arg0: i32) -> (i32, i32) {
    %c0_i32 = arith.constant 0 : i32
    %c0_i32_0 = arith.constant 0 : i32
    %c0_i32_1 = arith.constant 0 : i32
    return %c0_i32, %c0_i32_0 : i32, i32
  }
  func.func @transform_22(%arg0: i32) -> (i32, i32) {
    %c0_i32 = arith.constant 0 : i32
    %c0_i32_0 = arith.constant 0 : i32
    %c0_i32_1 = arith.constant 0 : i32
    return %c0_i32, %c0_i32_0 : i32, i32
  }
  func.func @transform_23(%arg0: i32) -> (i32, i32) {
    %c0_i32 = arith.constant 0 : i32
    %c0_i32_0 = arith.constant 0 : i32
    %c0_i32_1 = arith.constant 0 : i32
    return %c0_i32, %c0_i32_0 : i32, i32
  }
  func.func @transform_24(%arg0: i32) -> (i32, i32) {
    %c0_i32 = arith.constant 0 : i32
    %c0_i32_0 = arith.constant 0 : i32
    return %arg0, %c0_i32 : i32, i32
  }
}

</mosaic_0001>

<llo_original>
// kernel: squeeze.1
$region0: #{squeeze.1}
  %s0 = inlined_call_operand.vmem [shape: f32[128], index: 0, kind: input, shape index: {}]
  %s1 = inlined_call_operand.hbm [shape: f32[2,64], index: 1, kind: output, shape index: {}]
  $region1: #{squeeze.1} parent=0
    #allocation0 [shape = 'u8[1024]{0}', space=vmem, size = 0x400, scoped, tag = 'operand span for operand 1']
    #allocation1 [shape = 's32[1]{0}', space=sflag, size = 0x4, scoped, tag = 'scoped memory for squeeze.1']
    #allocation2 [shape = 'u8[4096]{0}', space=vmem, size = 0x1000, scoped, tag = 'scoped mem for output reshape']
    #allocation3 [shape = 'u8[4096]{0}', space=vmem, size = 0x1000, scoped, tag = 'scoped mem for input reshape']
    %2 = vsyncpa [#allocation1], 0
    %s4 = sshllo.u32 0, 1
    %v5 = vld [vmem:[%s0] sm:%s4]
    %6 = vst [vmem:[#allocation3] sm:%s4] %v5
    %v7 = vld [vmem:[#allocation3] sm:$0x1]
    %vm8 = vcmask 523264
    %9 = vst.msk [vmem:[#allocation2] sm:$0x1] %vm8, %v7
    %v10 = vld [vmem:[#allocation3] sm:$0x1]
    %11 = vrot.lane.b32.xlu0 %v10, 64
    %v12 = vpop.permute.xlu0 %11
    %vm13 = vcmask 523264
    %s14 = scalar_lea.vmem [#allocation2], 1
    %15 = vst.msk [vmem:[%s14] sm:$0x1] %vm13, %v12
    %s17 = sshllo.u32 0, 2
    %v19 = vld [vmem:[#allocation2] sm:%s17]
    %s20 = sshllo.u32 0, 2
    %21 = vst [vmem:[#allocation0] sm:%s20] %v19
    %s23 = ssub.s32 32, 32
    %24 = vsyncadd [#allocation1], %s23
    %s26 = sshll.u32 [#allocation0], 4
    %s27 = int_to_ptr.vmem [resolvable:$true] %s26
    %29 = dma.vmem_to_hbm [thread:$0]  %s27, 32, %s1, [#allocation1]
    %30 = dma.done [#allocation1], 32
    %31 = vsyncpa [#allocation1], 1

// kernel: mipnerf360_mlp_forward.1
$region0: #{mipnerf360_mlp_forward.1}
  #allocation0 [shape = 'u32[]', space=smem, size = 0x4, offset = 0x4, fixed_abs, tag = 'smem constant byte address 0x4 - core index']
  #allocation1 [shape = 'u32[144,128]{1,0:T(1,128)}', space=vmem, size = 0x12000, scoped, tag = 'internal scratch']
  %s0 = inlined_call_operand.vmem [shape: bf16[128,512], index: 0, kind: input, shape index: {}]
  %s1 = inlined_call_operand.vmem [shape: f32[128,128], index: 1, kind: input, shape index: {}]
  %s2 = inlined_call_operand.vmem [shape: bf16[512,256], index: 2, kind: input, shape index: {}]
  %s3 = inlined_call_operand.vmem [shape: f32[1,256], index: 3, kind: input, shape index: {}]
  %s4 = inlined_call_operand.vmem [shape: bf16[256,256], index: 4, kind: input, shape index: {}]
  %s5 = inlined_call_operand.vmem [shape: f32[1,256], index: 5, kind: input, shape index: {}]
  %s6 = inlined_call_operand.vmem [shape: bf16[256,256], index: 6, kind: input, shape index: {}]
  %s7 = inlined_call_operand.vmem [shape: f32[1,256], index: 7, kind: input, shape index: {}]
  %s8 = inlined_call_operand.vmem [shape: bf16[256,256], index: 8, kind: input, shape index: {}]
  %s9 = inlined_call_operand.vmem [shape: f32[1,256], index: 9, kind: input, shape index: {}]
  %s10 = inlined_call_operand.vmem [shape: bf16[256,256], index: 10, kind: input, shape index: {}]
  %s11 = inlined_call_operand.vmem [shape: f32[1,256], index: 11, kind: input, shape index: {}]
  %s12 = inlined_call_operand.vmem [shape: bf16[256,256], index: 12, kind: input, shape index: {}]
  %s13 = inlined_call_operand.vmem [shape: bf16[512,256], index: 13, kind: input, shape index: {}]
  %s14 = inlined_call_operand.vmem [shape: f32[1,256], index: 14, kind: input, shape index: {}]
  %s15 = inlined_call_operand.vmem [shape: bf16[256,256], index: 15, kind: input, shape index: {}]
  %s16 = inlined_call_operand.vmem [shape: f32[1,256], index: 16, kind: input, shape index: {}]
  %s17 = inlined_call_operand.vmem [shape: bf16[256,256], index: 17, kind: input, shape index: {}]
  %s18 = inlined_call_operand.vmem [shape: f32[1,256], index: 18, kind: input, shape index: {}]
  %s19 = inlined_call_operand.vmem [shape: bf16[256,384], index: 19, kind: input, shape index: {}]
  %s20 = inlined_call_operand.vmem [shape: f32[1,384], index: 20, kind: input, shape index: {}]
  %s21 = inlined_call_operand.vmem [shape: bf16[256,128], index: 21, kind: input, shape index: {}]
  %s22 = inlined_call_operand.vmem [shape: bf16[128,128], index: 22, kind: input, shape index: {}]
  %s23 = inlined_call_operand.vmem [shape: f32[1,128], index: 23, kind: input, shape index: {}]
  %s24 = inlined_call_operand.vmem [shape: f32[128,128], index: 24, kind: output, shape index: {}]
  %s25 = sld [smem:[#allocation0]]
  $region129: #{mipnerf360_mlp_forward.1} parent=0
    _
  %s27 = ssub.s32 1, %s25
  %s28 = scalar_select 0, %s27, %s25
  loop: start=0, step=1, limit=4
  $region2: #{mipnerf360_mlp_forward.1} parent=0 // loop_pre_header
    _
  $region3: #{mipnerf360_mlp_forward.1} parent=0 // loop_header
    %s30 = sphi 0, %s34
    %p31 = scmp.ge.s32.totalorder %s30, 4
    %s40 = sphi 0, %s42
    %s43 = sphi 0, %s40
    %s44 = sphi 0, %s43
    %s60 = sphi 0, %s44
    %s66 = sphi 0, %s68
    %s69 = sphi 0, %s66
    %s70 = sphi 0, %s69
    %s86 = sphi 0, %s70
    %s90 = sphi 0, %s90
    %s92 = sphi 0, %s90
    %s93 = sphi 0, %s92
    %s107 = sphi 0, %s93
    %s111 = sphi 0, %s111
    %s113 = sphi 0, %s111
    %s114 = sphi 0, %s113
    %s128 = sphi 0, %s114
    %s132 = sphi 0, %s132
    %s134 = sphi 0, %s132
    %s135 = sphi 0, %s134
    %s149 = sphi 0, %s135
    %s153 = sphi 0, %s153
    %s155 = sphi 0, %s153
    %s156 = sphi 0, %s155
    %s170 = sphi 0, %s156
    %s174 = sphi 0, %s174
    %s176 = sphi 0, %s174
    %s177 = sphi 0, %s176
    %s191 = sphi 0, %s177
    %s195 = sphi 0, %s195
    %s197 = sphi 0, %s195
    %s198 = sphi 0, %s197
    %s212 = sphi 0, %s198
    %s216 = sphi 0, %s216
    %s218 = sphi 0, %s216
    %s219 = sphi 0, %s218
    %s233 = sphi 0, %s219
    %s237 = sphi 0, %s237
    %s239 = sphi 0, %s237
    %s240 = sphi 0, %s239
    %s254 = sphi 0, %s240
    %s258 = sphi 0, %s258
    %s260 = sphi 0, %s258
    %s261 = sphi 0, %s260
    %s275 = sphi 0, %s261
    %s279 = sphi 0, %s279
    %s281 = sphi 0, %s279
    %s282 = sphi 0, %s281
    %s296 = sphi 0, %s282
    %s300 = sphi 0, %s300
    %s302 = sphi 0, %s300
    %s303 = sphi 0, %s302
    %s317 = sphi 0, %s303
    %s321 = sphi 0, %s321
    %s323 = sphi 0, %s321
    %s324 = sphi 0, %s323
    %s338 = sphi 0, %s324
    %s342 = sphi 0, %s342
    %s344 = sphi 0, %s342
    %s345 = sphi 0, %s344
    %s359 = sphi 0, %s345
    %s363 = sphi 0, %s363
    %s365 = sphi 0, %s363
    %s366 = sphi 0, %s365
    %s380 = sphi 0, %s366
    %s384 = sphi 0, %s384
    %s386 = sphi 0, %s384
    %s387 = sphi 0, %s386
    %s401 = sphi 0, %s387
    %s405 = sphi 0, %s405
    %s407 = sphi 0, %s405
    %s408 = sphi 0, %s407
    %s422 = sphi 0, %s408
    %s426 = sphi 0, %s426
    %s428 = sphi 0, %s426
    %s429 = sphi 0, %s428
    %s443 = sphi 0, %s429
    %s447 = sphi 0, %s447
    %s449 = sphi 0, %s447
    %s450 = sphi 0, %s449
    %s464 = sphi 0, %s450
    %s468 = sphi 0, %s468
    %s470 = sphi 0, %s468
    %s471 = sphi 0, %s470
    %s485 = sphi 0, %s471
    %s489 = sphi 0, %s489
    %s491 = sphi 0, %s489
    %s492 = sphi 0, %s491
    %s506 = sphi 0, %s492
    %s510 = sphi 0, %s510
    %s512 = sphi 0, %s510
    %s513 = sphi 0, %s512
    %s527 = sphi 0, %s513
    %s531 = sphi 0, %s531
    %s533 = sphi 0, %s531
    %s534 = sphi 0, %s533
    %s548 = sphi 0, %s534
    %s554 = sphi 0, %s556
    %s557 = sphi 0, %s554
    %s558 = sphi 0, %s557
    %s574 = sphi 0, %s558
  $region4: #{mipnerf360_mlp_forward.1} parent=0 // loop_header_branch
    %33 = sbr.rel (%p31) target = $region8
  $region5: #{mipnerf360_mlp_forward.1} parent=0 // loop_body
    %s35 = ssub.s32 %s30, 1
    %s36 = ssub.s32 %s30, 2
    %s37 = sadd.s32 %s30, 1
    %s38 = ssub.s32 %s30, %s37
    %p39 = scmp.eq.s32.totalorder %s38, 0
    %s41 = sadd.s32 %s40, 1
    %s42 = scalar_select %p39, %s40, %s41
    %p45 = pneg %p39
    %p46 = scmp.eq.s32.totalorder %s30, 1
    %p47 = por %p45, %p46
    %p48 = scmp.ne.s32.totalorder %s40, %s43
    %p49 = scmp.eq.s32.totalorder %s30, 0
    %p50 = por %p48, %p49
    %p51 = scmp.ne.s32.totalorder %s40, %s43
    %p52 = scmp.eq.s32.totalorder %s35, 1
    %p53 = por %p51, %p52
    %p54 = scmp.ne.s32.totalorder %s43, %s44
    %p55 = scmp.eq.s32.totalorder %s35, 0
    %p56 = por %p54, %p55
    %p57 = scmp.ne.s32.totalorder %s43, %s44
    %p58 = scmp.eq.s32.totalorder %s36, 1
    %p59 = por %p57, %p58
    %p61 = scmp.ne.s32.totalorder %s44, %s60
    %p62 = scmp.eq.s32.totalorder %s36, 0
    %p63 = por %p61, %p62
    %s64 = ssub.s32 %s30, %s37
    %p65 = scmp.eq.s32.totalorder %s64, 0
    %s67 = sadd.s32 %s66, 1
    %s68 = scalar_select %p65, %s66, %s67
    %p71 = pneg %p65
    %p72 = scmp.eq.s32.totalorder %s30, 1
    %p73 = por %p71, %p72
    %p74 = scmp.ne.s32.totalorder %s66, %s69
    %p75 = scmp.eq.s32.totalorder %s30, 0
    %p76 = por %p74, %p75
    %p77 = scmp.ne.s32.totalorder %s66, %s69
    %p78 = scmp.eq.s32.totalorder %s35, 1
    %p79 = por %p77, %p78
    %p80 = scmp.ne.s32.totalorder %s69, %s70
    %p81 = scmp.eq.s32.totalorder %s35, 0
    %p82 = por %p80, %p81
    %p83 = scmp.ne.s32.totalorder %s69, %s70
    %p84 = scmp.eq.s32.totalorder %s36, 1
    %p85 = por %p83, %p84
    %p87 = scmp.ne.s32.totalorder %s70, %s86
    %p88 = scmp.eq.s32.totalorder %s36, 0
    %p89 = por %p87, %p88
    %s91 = sadd.s32 %s90, 1
    %p94 = scmp.eq.s32.totalorder %s30, 1
    %p95 = scmp.ne.s32.totalorder %s90, %s92
    %p96 = scmp.eq.s32.totalorder %s30, 0
    %p97 = por %p95, %p96
    %p98 = scmp.ne.s32.totalorder %s90, %s92
    %p99 = scmp.eq.s32.totalorder %s35, 1
    %p100 = por %p98, %p99
    %p101 = scmp.ne.s32.totalorder %s92, %s93
    %p102 = scmp.eq.s32.totalorder %s35, 0
    %p103 = por %p101, %p102
    %p104 = scmp.ne.s32.totalorder %s92, %s93
    %p105 = scmp.eq.s32.totalorder %s36, 1
    %p106 = por %p104, %p105
    %p108 = scmp.ne.s32.totalorder %s93, %s107
    %p109 = scmp.eq.s32.totalorder %s36, 0
    %p110 = por %p108, %p109
    %s112 = sadd.s32 %s111, 1
    %p115 = scmp.eq.s32.totalorder %s30, 1
    %p116 = scmp.ne.s32.totalorder %s111, %s113
    %p117 = scmp.eq.s32.totalorder %s30, 0
    %p118 = por %p116, %p117
    %p119 = scmp.ne.s32.totalorder %s111, %s113
    %p120 = scmp.eq.s32.totalorder %s35, 1
    %p121 = por %p119, %p120
    %p122 = scmp.ne.s32.totalorder %s113, %s114
    %p123 = scmp.eq.s32.totalorder %s35, 0
    %p124 = por %p122, %p123
    %p125 = scmp.ne.s32.totalorder %s113, %s114
    %p126 = scmp.eq.s32.totalorder %s36, 1
    %p127 = por %p125, %p126
    %p129 = scmp.ne.s32.totalorder %s114, %s128
    %p130 = scmp.eq.s32.totalorder %s36, 0
    %p131 = por %p129, %p130
    %s133 = sadd.s32 %s132, 1
    %p136 = scmp.eq.s32.totalorder %s30, 1
    %p137 = scmp.ne.s32.totalorder %s132, %s134
    %p138 = scmp.eq.s32.totalorder %s30, 0
    %p139 = por %p137, %p138
    %p140 = scmp.ne.s32.totalorder %s132, %s134
    %p141 = scmp.eq.s32.totalorder %s35, 1
    %p142 = por %p140, %p141
    %p143 = scmp.ne.s32.totalorder %s134, %s135
    %p144 = scmp.eq.s32.totalorder %s35, 0
    %p145 = por %p143, %p144
    %p146 = scmp.ne.s32.totalorder %s134, %s135
    %p147 = scmp.eq.s32.totalorder %s36, 1
    %p148 = por %p146, %p147
    %p150 = scmp.ne.s32.totalorder %s135, %s149
    %p151 = scmp.eq.s32.totalorder %s36, 0
    %p152 = por %p150, %p151
    %s154 = sadd.s32 %s153, 1
    %p157 = scmp.eq.s32.totalorder %s30, 1
    %p158 = scmp.ne.s32.totalorder %s153, %s155
    %p159 = scmp.eq.s32.totalorder %s30, 0
    %p160 = por %p158, %p159
    %p161 = scmp.ne.s32.totalorder %s153, %s155
    %p162 = scmp.eq.s32.totalorder %s35, 1
    %p163 = por %p161, %p162
    %p164 = scmp.ne.s32.totalorder %s155, %s156
    %p165 = scmp.eq.s32.totalorder %s35, 0
    %p166 = por %p164, %p165
    %p167 = scmp.ne.s32.totalorder %s155, %s156
    %p168 = scmp.eq.s32.totalorder %s36, 1
    %p169 = por %p167, %p168
    %p171 = scmp.ne.s32.totalorder %s156, %s170
    %p172 = scmp.eq.s32.totalorder %s36, 0
    %p173 = por %p171, %p172
    %s175 = sadd.s32 %s174, 1
    %p178 = scmp.eq.s32.totalorder %s30, 1
    %p179 = scmp.ne.s32.totalorder %s174, %s176
    %p180 = scmp.eq.s32.totalorder %s30, 0
    %p181 = por %p179, %p180
    %p182 = scmp.ne.s32.totalorder %s174, %s176
    %p183 = scmp.eq.s32.totalorder %s35, 1
    %p184 = por %p182, %p183
    %p185 = scmp.ne.s32.totalorder %s176, %s177
    %p186 = scmp.eq.s32.totalorder %s35, 0
    %p187 = por %p185, %p186
    %p188 = scmp.ne.s32.totalorder %s176, %s177
    %p189 = scmp.eq.s32.totalorder %s36, 1
    %p190 = por %p188, %p189
    %p192 = scmp.ne.s32.totalorder %s177, %s191
    %p193 = scmp.eq.s32.totalorder %s36, 0
    %p194 = por %p192, %p193
    %s196 = sadd.s32 %s195, 1
    %p199 = scmp.eq.s32.totalorder %s30, 1
    %p200 = scmp.ne.s32.totalorder %s195, %s197
    %p201 = scmp.eq.s32.totalorder %s30, 0
    %p202 = por %p200, %p201
    %p203 = scmp.ne.s32.totalorder %s195, %s197
    %p204 = scmp.eq.s32.totalorder %s35, 1
    %p205 = por %p203, %p204
    %p206 = scmp.ne.s32.totalorder %s197, %s198
    %p207 = scmp.eq.s32.totalorder %s35, 0
    %p208 = por %p206, %p207
    %p209 = scmp.ne.s32.totalorder %s197, %s198
    %p210 = scmp.eq.s32.totalorder %s36, 1
    %p211 = por %p209, %p210
    %p213 = scmp.ne.s32.totalorder %s198, %s212
    %p214 = scmp.eq.s32.totalorder %s36, 0
    %p215 = por %p213, %p214
    %s217 = sadd.s32 %s216, 1
    %p220 = scmp.eq.s32.totalorder %s30, 1
    %p221 = scmp.ne.s32.totalorder %s216, %s218
    %p222 = scmp.eq.s32.totalorder %s30, 0
    %p223 = por %p221, %p222
    %p224 = scmp.ne.s32.totalorder %s216, %s218
    %p225 = scmp.eq.s32.totalorder %s35, 1
    %p226 = por %p224, %p225
    %p227 = scmp.ne.s32.totalorder %s218, %s219
    %p228 = scmp.eq.s32.totalorder %s35, 0
    %p229 = por %p227, %p228
    %p230 = scmp.ne.s32.totalorder %s218, %s219
    %p231 = scmp.eq.s32.totalorder %s36, 1
    %p232 = por %p230, %p231
    %p234 = scmp.ne.s32.totalorder %s219, %s233
    %p235 = scmp.eq.s32.totalorder %s36, 0
    %p236 = por %p234, %p235
    %s238 = sadd.s32 %s237, 1
    %p241 = scmp.eq.s32.totalorder %s30, 1
    %p242 = scmp.ne.s32.totalorder %s237, %s239
    %p243 = scmp.eq.s32.totalorder %s30, 0
    %p244 = por %p242, %p243
    %p245 = scmp.ne.s32.totalorder %s237, %s239
    %p246 = scmp.eq.s32.totalorder %s35, 1
    %p247 = por %p245, %p246
    %p248 = scmp.ne.s32.totalorder %s239, %s240
    %p249 = scmp.eq.s32.totalorder %s35, 0
    %p250 = por %p248, %p249
    %p251 = scmp.ne.s32.totalorder %s239, %s240
    %p252 = scmp.eq.s32.totalorder %s36, 1
    %p253 = por %p251, %p252
    %p255 = scmp.ne.s32.totalorder %s240, %s254
    %p256 = scmp.eq.s32.totalorder %s36, 0
    %p257 = por %p255, %p256
    %s259 = sadd.s32 %s258, 1
    %p262 = scmp.eq.s32.totalorder %s30, 1
    %p263 = scmp.ne.s32.totalorder %s258, %s260
    %p264 = scmp.eq.s32.totalorder %s30, 0
    %p265 = por %p263, %p264
    %p266 = scmp.ne.s32.totalorder %s258, %s260
    %p267 = scmp.eq.s32.totalorder %s35, 1
    %p268 = por %p266, %p267
    %p269 = scmp.ne.s32.totalorder %s260, %s261
    %p270 = scmp.eq.s32.totalorder %s35, 0
    %p271 = por %p269, %p270
    %p272 = scmp.ne.s32.totalorder %s260, %s261
    %p273 = scmp.eq.s32.totalorder %s36, 1
    %p274 = por %p272, %p273
    %p276 = scmp.ne.s32.totalorder %s261, %s275
    %p277 = scmp.eq.s32.totalorder %s36, 0
    %p278 = por %p276, %p277
    %s280 = sadd.s32 %s279, 1
    %p283 = scmp.eq.s32.totalorder %s30, 1
    %p284 = scmp.ne.s32.totalorder %s279, %s281
    %p285 = scmp.eq.s32.totalorder %s30, 0
    %p286 = por %p284, %p285
    %p287 = scmp.ne.s32.totalorder %s279, %s281
    %p288 = scmp.eq.s32.totalorder %s35, 1
    %p289 = por %p287, %p288
    %p290 = scmp.ne.s32.totalorder %s281, %s282
    %p291 = scmp.eq.s32.totalorder %s35, 0
    %p292 = por %p290, %p291
    %p293 = scmp.ne.s32.totalorder %s281, %s282
    %p294 = scmp.eq.s32.totalorder %s36, 1
    %p295 = por %p293, %p294
    %p297 = scmp.ne.s32.totalorder %s282, %s296
    %p298 = scmp.eq.s32.totalorder %s36, 0
    %p299 = por %p297, %p298
    %s301 = sadd.s32 %s300, 1
    %p304 = scmp.eq.s32.totalorder %s30, 1
    %p305 = scmp.ne.s32.totalorder %s300, %s302
    %p306 = scmp.eq.s32.totalorder %s30, 0
    %p307 = por %p305, %p306
    %p308 = scmp.ne.s32.totalorder %s300, %s302
    %p309 = scmp.eq.s32.totalorder %s35, 1
    %p310 = por %p308, %p309
    %p311 = scmp.ne.s32.totalorder %s302, %s303
    %p312 = scmp.eq.s32.totalorder %s35, 0
    %p313 = por %p311, %p312
    %p314 = scmp.ne.s32.totalorder %s302, %s303
    %p315 = scmp.eq.s32.totalorder %s36, 1
    %p316 = por %p314, %p315
    %p318 = scmp.ne.s32.totalorder %s303, %s317
    %p319 = scmp.eq.s32.totalorder %s36, 0
    %p320 = por %p318, %p319
    %s322 = sadd.s32 %s321, 1
    %p325 = scmp.eq.s32.totalorder %s30, 1
    %p326 = scmp.ne.s32.totalorder %s321, %s323
    %p327 = scmp.eq.s32.totalorder %s30, 0
    %p328 = por %p326, %p327
    %p329 = scmp.ne.s32.totalorder %s321, %s323
    %p330 = scmp.eq.s32.totalorder %s35, 1
    %p331 = por %p329, %p330
    %p332 = scmp.ne.s32.totalorder %s323, %s324
    %p333 = scmp.eq.s32.totalorder %s35, 0
    %p334 = por %p332, %p333
    %p335 = scmp.ne.s32.totalorder %s323, %s324
    %p336 = scmp.eq.s32.totalorder %s36, 1
    %p337 = por %p335, %p336
    %p339 = scmp.ne.s32.totalorder %s324, %s338
    %p340 = scmp.eq.s32.totalorder %s36, 0
    %p341 = por %p339, %p340
    %s343 = sadd.s32 %s342, 1
    %p346 = scmp.eq.s32.totalorder %s30, 1
    %p347 = scmp.ne.s32.totalorder %s342, %s344
    %p348 = scmp.eq.s32.totalorder %s30, 0
    %p349 = por %p347, %p348
    %p350 = scmp.ne.s32.totalorder %s342, %s344
    %p351 = scmp.eq.s32.totalorder %s35, 1
    %p352 = por %p350, %p351
    %p353 = scmp.ne.s32.totalorder %s344, %s345
    %p354 = scmp.eq.s32.totalorder %s35, 0
    %p355 = por %p353, %p354
    %p356 = scmp.ne.s32.totalorder %s344, %s345
    %p357 = scmp.eq.s32.totalorder %s36, 1
    %p358 = por %p356, %p357
    %p360 = scmp.ne.s32.totalorder %s345, %s359
    %p361 = scmp.eq.s32.totalorder %s36, 0
    %p362 = por %p360, %p361
    %s364 = sadd.s32 %s363, 1
    %p367 = scmp.eq.s32.totalorder %s30, 1
    %p368 = scmp.ne.s32.totalorder %s363, %s365
    %p369 = scmp.eq.s32.totalorder %s30, 0
    %p370 = por %p368, %p369
    %p371 = scmp.ne.s32.totalorder %s363, %s365
    %p372 = scmp.eq.s32.totalorder %s35, 1
    %p373 = por %p371, %p372
    %p374 = scmp.ne.s32.totalorder %s365, %s366
    %p375 = scmp.eq.s32.totalorder %s35, 0
    %p376 = por %p374, %p375
    %p377 = scmp.ne.s32.totalorder %s365, %s366
    %p378 = scmp.eq.s32.totalorder %s36, 1
    %p379 = por %p377, %p378
    %p381 = scmp.ne.s32.totalorder %s366, %s380
    %p382 = scmp.eq.s32.totalorder %s36, 0
    %p383 = por %p381, %p382
    %s385 = sadd.s32 %s384, 1
    %p388 = scmp.eq.s32.totalorder %s30, 1
    %p389 = scmp.ne.s32.totalorder %s384, %s386
    %p390 = scmp.eq.s32.totalorder %s30, 0
    %p391 = por %p389, %p390
    %p392 = scmp.ne.s32.totalorder %s384, %s386
    %p393 = scmp.eq.s32.totalorder %s35, 1
    %p394 = por %p392, %p393
    %p395 = scmp.ne.s32.totalorder %s386, %s387
    %p396 = scmp.eq.s32.totalorder %s35, 0
    %p397 = por %p395, %p396
    %p398 = scmp.ne.s32.totalorder %s386, %s387
    %p399 = scmp.eq.s32.totalorder %s36, 1
    %p400 = por %p398, %p399
    %p402 = scmp.ne.s32.totalorder %s387, %s401
    %p403 = scmp.eq.s32.totalorder %s36, 0
    %p404 = por %p402, %p403
    %s406 = sadd.s32 %s405, 1
    %p409 = scmp.eq.s32.totalorder %s30, 1
    %p410 = scmp.ne.s32.totalorder %s405, %s407
    %p411 = scmp.eq.s32.totalorder %s30, 0
    %p412 = por %p410, %p411
    %p413 = scmp.ne.s32.totalorder %s405, %s407
    %p414 = scmp.eq.s32.totalorder %s35, 1
    %p415 = por %p413, %p414
    %p416 = scmp.ne.s32.totalorder %s407, %s408
    %p417 = scmp.eq.s32.totalorder %s35, 0
    %p418 = por %p416, %p417
    %p419 = scmp.ne.s32.totalorder %s407, %s408
    %p420 = scmp.eq.s32.totalorder %s36, 1
    %p421 = por %p419, %p420
    %p423 = scmp.ne.s32.totalorder %s408, %s422
    %p424 = scmp.eq.s32.totalorder %s36, 0
    %p425 = por %p423, %p424
    %s427 = sadd.s32 %s426, 1
    %p430 = scmp.eq.s32.totalorder %s30, 1
    %p431 = scmp.ne.s32.totalorder %s426, %s428
    %p432 = scmp.eq.s32.totalorder %s30, 0
    %p433 = por %p431, %p432
    %p434 = scmp.ne.s32.totalorder %s426, %s428
    %p435 = scmp.eq.s32.totalorder %s35, 1
    %p436 = por %p434, %p435
    %p437 = scmp.ne.s32.totalorder %s428, %s429
    %p438 = scmp.eq.s32.totalorder %s35, 0
    %p439 = por %p437, %p438
    %p440 = scmp.ne.s32.totalorder %s428, %s429
    %p441 = scmp.eq.s32.totalorder %s36, 1
    %p442 = por %p440, %p441
    %p444 = scmp.ne.s32.totalorder %s429, %s443
    %p445 = scmp.eq.s32.totalorder %s36, 0
    %p446 = por %p444, %p445
    %s448 = sadd.s32 %s447, 1
    %p451 = scmp.eq.s32.totalorder %s30, 1
    %p452 = scmp.ne.s32.totalorder %s447, %s449
    %p453 = scmp.eq.s32.totalorder %s30, 0
    %p454 = por %p452, %p453
    %p455 = scmp.ne.s32.totalorder %s447, %s449
    %p456 = scmp.eq.s32.totalorder %s35, 1
    %p457 = por %p455, %p456
    %p458 = scmp.ne.s32.totalorder %s449, %s450
    %p459 = scmp.eq.s32.totalorder %s35, 0
    %p460 = por %p458, %p459
    %p461 = scmp.ne.s32.totalorder %s449, %s450
    %p462 = scmp.eq.s32.totalorder %s36, 1
    %p463 = por %p461, %p462
    %p465 = scmp.ne.s32.totalorder %s450, %s464
    %p466 = scmp.eq.s32.totalorder %s36, 0
    %p467 = por %p465, %p466
    %s469 = sadd.s32 %s468, 1
    %p472 = scmp.eq.s32.totalorder %s30, 1
    %p473 = scmp.ne.s32.totalorder %s468, %s470
    %p474 = scmp.eq.s32.totalorder %s30, 0
    %p475 = por %p473, %p474
    %p476 = scmp.ne.s32.totalorder %s468, %s470
    %p477 = scmp.eq.s32.totalorder %s35, 1
    %p478 = por %p476, %p477
    %p479 = scmp.ne.s32.totalorder %s470, %s471
    %p480 = scmp.eq.s32.totalorder %s35, 0
    %p481 = por %p479, %p480
    %p482 = scmp.ne.s32.totalorder %s470, %s471
    %p483 = scmp.eq.s32.totalorder %s36, 1
    %p484 = por %p482, %p483
    %p486 = scmp.ne.s32.totalorder %s471, %s485
    %p487 = scmp.eq.s32.totalorder %s36, 0
    %p488 = por %p486, %p487
    %s490 = sadd.s32 %s489, 1
    %p493 = scmp.eq.s32.totalorder %s30, 1
    %p494 = scmp.ne.s32.totalorder %s489, %s491
    %p495 = scmp.eq.s32.totalorder %s30, 0
    %p496 = por %p494, %p495
    %p497 = scmp.ne.s32.totalorder %s489, %s491
    %p498 = scmp.eq.s32.totalorder %s35, 1
    %p499 = por %p497, %p498
    %p500 = scmp.ne.s32.totalorder %s491, %s492
    %p501 = scmp.eq.s32.totalorder %s35, 0
    %p502 = por %p500, %p501
    %p503 = scmp.ne.s32.totalorder %s491, %s492
    %p504 = scmp.eq.s32.totalorder %s36, 1
    %p505 = por %p503, %p504
    %p507 = scmp.ne.s32.totalorder %s492, %s506
    %p508 = scmp.eq.s32.totalorder %s36, 0
    %p509 = por %p507, %p508
    %s511 = sadd.s32 %s510, 1
    %p514 = scmp.eq.s32.totalorder %s30, 1
    %p515 = scmp.ne.s32.totalorder %s510, %s512
    %p516 = scmp.eq.s32.totalorder %s30, 0
    %p517 = por %p515, %p516
    %p518 = scmp.ne.s32.totalorder %s510, %s512
    %p519 = scmp.eq.s32.totalorder %s35, 1
    %p520 = por %p518, %p519
    %p521 = scmp.ne.s32.totalorder %s512, %s513
    %p522 = scmp.eq.s32.totalorder %s35, 0
    %p523 = por %p521, %p522
    %p524 = scmp.ne.s32.totalorder %s512, %s513
    %p525 = scmp.eq.s32.totalorder %s36, 1
    %p526 = por %p524, %p525
    %p528 = scmp.ne.s32.totalorder %s513, %s527
    %p529 = scmp.eq.s32.totalorder %s36, 0
    %p530 = por %p528, %p529
    %s532 = sadd.s32 %s531, 1
    %p535 = scmp.eq.s32.totalorder %s30, 1
    %p536 = scmp.ne.s32.totalorder %s531, %s533
    %p537 = scmp.eq.s32.totalorder %s30, 0
    %p538 = por %p536, %p537
    %p539 = scmp.ne.s32.totalorder %s531, %s533
    %p540 = scmp.eq.s32.totalorder %s35, 1
    %p541 = por %p539, %p540
    %p542 = scmp.ne.s32.totalorder %s533, %s534
    %p543 = scmp.eq.s32.totalorder %s35, 0
    %p544 = por %p542, %p543
    %p545 = scmp.ne.s32.totalorder %s533, %s534
    %p546 = scmp.eq.s32.totalorder %s36, 1
    %p547 = por %p545, %p546
    %p549 = scmp.ne.s32.totalorder %s534, %s548
    %p550 = scmp.eq.s32.totalorder %s36, 0
    %p551 = por %p549, %p550
    %s552 = ssub.s32 %s30, %s37
    %p553 = scmp.eq.s32.totalorder %s552, 0
    %s555 = sadd.s32 %s554, 1
    %s556 = scalar_select %p553, %s554, %s555
    %p559 = pneg %p553
    %p560 = scmp.eq.s32.totalorder %s30, 1
    %p561 = por %p559, %p560
    %p562 = scmp.ne.s32.totalorder %s554, %s557
    %p563 = scmp.eq.s32.totalorder %s30, 0
    %p564 = por %p562, %p563
    %p565 = scmp.ne.s32.totalorder %s554, %s557
    %p566 = scmp.eq.s32.totalorder %s35, 1
    %p567 = por %p565, %p566
    %p568 = scmp.ne.s32.totalorder %s557, %s558
    %p569 = scmp.eq.s32.totalorder %s35, 0
    %p570 = por %p568, %p569
    %p571 = scmp.ne.s32.totalorder %s557, %s558
    %p572 = scmp.eq.s32.totalorder %s36, 1
    %p573 = por %p571, %p572
    %p575 = scmp.ne.s32.totalorder %s558, %s574
    %p576 = scmp.eq.s32.totalorder %s36, 0
    %p577 = por %p575, %p576
    %p578 = scmp.le.s32.totalorder 1, %s30
    %p579 = scmp.lt.s32.totalorder %s30, 3
    %p580 = pnand %p578, %p579
    %p581 = pneg %p580
    // Predicated region
    $region9: #{mipnerf360_mlp_forward.1} parent=5 // pred_check
      _
    $region10: #{mipnerf360_mlp_forward.1} parent=5 // pred_check_branch
      %583 = sbr.rel (%p580) target = $region12
    $region11: #{mipnerf360_mlp_forward.1} parent=5 // pred_region
      %s584 = ssub.s32 %s30, 1
      // Predicated region
      $region13: #{mipnerf360_mlp_forward.1} parent=11 // pred_check
        %p585 = pneg %p103
      $region14: #{mipnerf360_mlp_forward.1} parent=11 // pred_check_branch
        %587 = sbr.rel (%p585) target = $region16
      $region15: #{mipnerf360_mlp_forward.1} parent=11 // pred_region
        _
      $region16: #{mipnerf360_mlp_forward.1} parent=11 // pred_fallthru
        _
      // Predicated region
      $region17: #{mipnerf360_mlp_forward.1} parent=11 // pred_check
        %p588 = pneg %p124
      $region18: #{mipnerf360_mlp_forward.1} parent=11 // pred_check_branch
        %590 = sbr.rel (%p588) target = $region20
      $region19: #{mipnerf360_mlp_forward.1} parent=11 // pred_region
        _
      $region20: #{mipnerf360_mlp_forward.1} parent=11 // pred_fallthru
        _
      // Predicated region
      $region21: #{mipnerf360_mlp_forward.1} parent=11 // pred_check
        %p591 = pneg %p145
      $region22: #{mipnerf360_mlp_forward.1} parent=11 // pred_check_branch
        %593 = sbr.rel (%p591) target = $region24
      $region23: #{mipnerf360_mlp_forward.1} parent=11 // pred_region
        _
      $region24: #{mipnerf360_mlp_forward.1} parent=11 // pred_fallthru
        _
      // Predicated region
      $region25: #{mipnerf360_mlp_forward.1} parent=11 // pred_check
        %p594 = pneg %p166
      $region26: #{mipnerf360_mlp_forward.1} parent=11 // pred_check_branch
        %596 = sbr.rel (%p594) target = $region28
      $region27: #{mipnerf360_mlp_forward.1} parent=11 // pred_region
        _
      $region28: #{mipnerf360_mlp_forward.1} parent=11 // pred_fallthru
        _
      // Predicated region
      $region29: #{mipnerf360_mlp_forward.1} parent=11 // pred_check
        %p597 = pneg %p187
      $region30: #{mipnerf360_mlp_forward.1} parent=11 // pred_check_branch
        %599 = sbr.rel (%p597) target = $region32
      $region31: #{mipnerf360_mlp_forward.1} parent=11 // pred_region
        _
      $region32: #{mipnerf360_mlp_forward.1} parent=11 // pred_fallthru
        _
      // Predicated region
      $region33: #{mipnerf360_mlp_forward.1} parent=11 // pred_check
        %p600 = pneg %p208
      $region34: #{mipnerf360_mlp_forward.1} parent=11 // pred_check_branch
        %602 = sbr.rel (%p600) target = $region36
      $region35: #{mipnerf360_mlp_forward.1} parent=11 // pred_region
        _
      $region36: #{mipnerf360_mlp_forward.1} parent=11 // pred_fallthru
        _
      // Predicated region
      $region37: #{mipnerf360_mlp_forward.1} parent=11 // pred_check
        %p603 = pneg %p229
      $region38: #{mipnerf360_mlp_forward.1} parent=11 // pred_check_branch
        %605 = sbr.rel (%p603) target = $region40
      $region39: #{mipnerf360_mlp_forward.1} parent=11 // pred_region
        _
      $region40: #{mipnerf360_mlp_forward.1} parent=11 // pred_fallthru
        _
      // Predicated region
      $region41: #{mipnerf360_mlp_forward.1} parent=11 // pred_check
        %p606 = pneg %p250
      $region42: #{mipnerf360_mlp_forward.1} parent=11 // pred_check_branch
        %608 = sbr.rel (%p606) target = $region44
      $region43: #{mipnerf360_mlp_forward.1} parent=11 // pred_region
        _
      $region44: #{mipnerf360_mlp_forward.1} parent=11 // pred_fallthru
        _
      // Predicated region
      $region45: #{mipnerf360_mlp_forward.1} parent=11 // pred_check
        %p609 = pneg %p271
      $region46: #{mipnerf360_mlp_forward.1} parent=11 // pred_check_branch
        %611 = sbr.rel (%p609) target = $region48
      $region47: #{mipnerf360_mlp_forward.1} parent=11 // pred_region
        _
      $region48: #{mipnerf360_mlp_forward.1} parent=11 // pred_fallthru
        _
      // Predicated region
      $region49: #{mipnerf360_mlp_forward.1} parent=11 // pred_check
        %p612 = pneg %p292
      $region50: #{mipnerf360_mlp_forward.1} parent=11 // pred_check_branch
        %614 = sbr.rel (%p612) target = $region52
      $region51: #{mipnerf360_mlp_forward.1} parent=11 // pred_region
        _
      $region52: #{mipnerf360_mlp_forward.1} parent=11 // pred_fallthru
        _
      // Predicated region
      $region53: #{mipnerf360_mlp_forward.1} parent=11 // pred_check
        %p615 = pneg %p313
      $region54: #{mipnerf360_mlp_forward.1} parent=11 // pred_check_branch
        %617 = sbr.rel (%p615) target = $region56
      $region55: #{mipnerf360_mlp_forward.1} parent=11 // pred_region
        _
      $region56: #{mipnerf360_mlp_forward.1} parent=11 // pred_fallthru
        _
      // Predicated region
      $region57: #{mipnerf360_mlp_forward.1} parent=11 // pred_check
        %p618 = pneg %p334
      $region58: #{mipnerf360_mlp_forward.1} parent=11 // pred_check_branch
        %620 = sbr.rel (%p618) target = $region60
      $region59: #{mipnerf360_mlp_forward.1} parent=11 // pred_region
        _
      $region60: #{mipnerf360_mlp_forward.1} parent=11 // pred_fallthru
        _
      // Predicated region
      $region61: #{mipnerf360_mlp_forward.1} parent=11 // pred_check
        %p621 = pneg %p355
      $region62: #{mipnerf360_mlp_forward.1} parent=11 // pred_check_branch
        %623 = sbr.rel (%p621) target = $region64
      $region63: #{mipnerf360_mlp_forward.1} parent=11 // pred_region
        _
      $region64: #{mipnerf360_mlp_forward.1} parent=11 // pred_fallthru
        _
      // Predicated region
      $region65: #{mipnerf360_mlp_forward.1} parent=11 // pred_check
        %p624 = pneg %p376
      $region66: #{mipnerf360_mlp_forward.1} parent=11 // pred_check_branch
        %626 = sbr.rel (%p624) target = $region68
      $region67: #{mipnerf360_mlp_forward.1} parent=11 // pred_region
        _
      $region68: #{mipnerf360_mlp_forward.1} parent=11 // pred_fallthru
        _
      // Predicated region
      $region69: #{mipnerf360_mlp_forward.1} parent=11 // pred_check
        %p627 = pneg %p397
      $region70: #{mipnerf360_mlp_forward.1} parent=11 // pred_check_branch
        %629 = sbr.rel (%p627) target = $region72
      $region71: #{mipnerf360_mlp_forward.1} parent=11 // pred_region
        _
      $region72: #{mipnerf360_mlp_forward.1} parent=11 // pred_fallthru
        _
      // Predicated region
      $region73: #{mipnerf360_mlp_forward.1} parent=11 // pred_check
        %p630 = pneg %p418
      $region74: #{mipnerf360_mlp_forward.1} parent=11 // pred_check_branch
        %632 = sbr.rel (%p630) target = $region76
      $region75: #{mipnerf360_mlp_forward.1} parent=11 // pred_region
        _
      $region76: #{mipnerf360_mlp_forward.1} parent=11 // pred_fallthru
        _
      // Predicated region
      $region77: #{mipnerf360_mlp_forward.1} parent=11 // pred_check
        %p633 = pneg %p439
      $region78: #{mipnerf360_mlp_forward.1} parent=11 // pred_check_branch
        %635 = sbr.rel (%p633) target = $region80
      $region79: #{mipnerf360_mlp_forward.1} parent=11 // pred_region
        _
      $region80: #{mipnerf360_mlp_forward.1} parent=11 // pred_fallthru
        _
      // Predicated region
      $region81: #{mipnerf360_mlp_forward.1} parent=11 // pred_check
        %p636 = pneg %p460
      $region82: #{mipnerf360_mlp_forward.1} parent=11 // pred_check_branch
        %638 = sbr.rel (%p636) target = $region84
      $region83: #{mipnerf360_mlp_forward.1} parent=11 // pred_region
        _
      $region84: #{mipnerf360_mlp_forward.1} parent=11 // pred_fallthru
        _
      // Predicated region
      $region85: #{mipnerf360_mlp_forward.1} parent=11 // pred_check
        %p639 = pneg %p481
      $region86: #{mipnerf360_mlp_forward.1} parent=11 // pred_check_branch
        %641 = sbr.rel (%p639) target = $region88
      $region87: #{mipnerf360_mlp_forward.1} parent=11 // pred_region
        _
      $region88: #{mipnerf360_mlp_forward.1} parent=11 // pred_fallthru
        _
      // Predicated region
      $region89: #{mipnerf360_mlp_forward.1} parent=11 // pred_check
        %p642 = pneg %p502
      $region90: #{mipnerf360_mlp_forward.1} parent=11 // pred_check_branch
        %644 = sbr.rel (%p642) target = $region92
      $region91: #{mipnerf360_mlp_forward.1} parent=11 // pred_region
        _
      $region92: #{mipnerf360_mlp_forward.1} parent=11 // pred_fallthru
        _
      // Predicated region
      $region93: #{mipnerf360_mlp_forward.1} parent=11 // pred_check
        %p645 = pneg %p523
      $region94: #{mipnerf360_mlp_forward.1} parent=11 // pred_check_branch
        %647 = sbr.rel (%p645) target = $region96
      $region95: #{mipnerf360_mlp_forward.1} parent=11 // pred_region
        _
      $region96: #{mipnerf360_mlp_forward.1} parent=11 // pred_fallthru
        _
      // Predicated region
      $region97: #{mipnerf360_mlp_forward.1} parent=11 // pred_check
        %p648 = pneg %p544
      $region98: #{mipnerf360_mlp_forward.1} parent=11 // pred_check_branch
        %650 = sbr.rel (%p648) target = $region100
      $region99: #{mipnerf360_mlp_forward.1} parent=11 // pred_region
        _
      $region100: #{mipnerf360_mlp_forward.1} parent=11 // pred_fallthru
        _
    $region12: #{mipnerf360_mlp_forward.1} parent=5 // pred_fallthru
      _
    %p651 = scmp.lt.s32.totalorder %s30, 2
    // Predicated region
    $region101: #{mipnerf360_mlp_forward.1} parent=5 // pred_check
      %p652 = pneg %p651
    $region102: #{mipnerf360_mlp_forward.1} parent=5 // pred_check_branch
      %654 = sbr.rel (%p652) target = $region104
    $region103: #{mipnerf360_mlp_forward.1} parent=5 // pred_region
      // Predicated region
      $region105: #{mipnerf360_mlp_forward.1} parent=103 // pred_check
        %p655 = pneg %p50
      $region106: #{mipnerf360_mlp_forward.1} parent=103 // pred_check_branch
        %657 = sbr.rel (%p655) target = $region108
      $region107: #{mipnerf360_mlp_forward.1} parent=103 // pred_region
        %s658 = smul.u32 8, %s30
        %p659 = scmp.lt.s32.totalorder %s658, 15
        %s660 = scalar_select %p659, %s658, 15
        %s661 = smul.addr %s660, 4
        %s662 = smul.addr %s661, 4
        %s663 = scalar_lea.vmem %s0, %s662
        %s664 = smul.u32 8, %s30
      $region108: #{mipnerf360_mlp_forward.1} parent=103 // pred_fallthru
        _
      // Predicated region
      $region109: #{mipnerf360_mlp_forward.1} parent=103 // pred_check
        %p665 = pneg %p76
      $region110: #{mipnerf360_mlp_forward.1} parent=103 // pred_check_branch
        %667 = sbr.rel (%p665) target = $region112
      $region111: #{mipnerf360_mlp_forward.1} parent=103 // pred_region
        %s668 = smul.u32 8, %s30
        %p669 = scmp.lt.s32.totalorder %s668, 15
        %s670 = scalar_select %p669, %s668, 15
        %s671 = smul.addr %s670, 8
        %s672 = scalar_lea.vmem %s1, %s671
        %s673 = smul.u32 8, %s30
      $region112: #{mipnerf360_mlp_forward.1} parent=103 // pred_fallthru
        _
    $region104: #{mipnerf360_mlp_forward.1} parent=5 // pred_fallthru
      _
    %p674 = scmp.le.s32.totalorder 1, %s30
    %p675 = scmp.lt.s32.totalorder %s30, 3
    %p676 = pnand %p674, %p675
    %p677 = pneg %p676
    // Predicated region
    $region113: #{mipnerf360_mlp_forward.1} parent=5 // pred_check
      _
    $region114: #{mipnerf360_mlp_forward.1} parent=5 // pred_check_branch
      %679 = sbr.rel (%p676) target = $region116
    $region115: #{mipnerf360_mlp_forward.1} parent=5 // pred_region
      %s680 = ssub.s32 %s30, 1
      %s681 = smul.u32 8, %s35
      %p682 = scmp.lt.s32.totalorder %s681, 15
      %s683 = scalar_select %p682, %s681, 15
      %s684 = smul.addr %s683, 4
      %s685 = smul.addr %s684, 4
      %s686 = scalar_lea.vmem %s0, %s685
      %p687 = pneg %p56
      %p688 = pneg %p53
      %s689 = smul.u32 8, %s35
      %p690 = scmp.lt.s32.totalorder %s689, 15
      %s691 = scalar_select %p690, %s689, 15
      %s692 = smul.addr %s691, 8
      %s693 = scalar_lea.vmem %s1, %s692
      %p694 = pneg %p82
      %p695 = pneg %p79
      %p696 = pneg %p103
      %p697 = pneg %p100
      %p698 = pneg %p124
      %p699 = pneg %p121
      %p700 = pneg %p145
      %p701 = pneg %p142
      %p702 = pneg %p166
      %p703 = pneg %p163
      %p704 = pneg %p187
      %p705 = pneg %p184
      %p706 = pneg %p208
      %p707 = pneg %p205
      %p708 = pneg %p229
      %p709 = pneg %p226
      %p710 = pneg %p250
      %p711 = pneg %p247
      %p712 = pneg %p271
      %p713 = pneg %p268
      %p714 = pneg %p292
      %p715 = pneg %p289
      %p716 = pneg %p313
      %p717 = pneg %p310
      %p718 = pneg %p334
      %p719 = pneg %p331
      %p720 = pneg %p355
      %p721 = pneg %p352
      %p722 = pneg %p376
      %p723 = pneg %p373
      %p724 = pneg %p397
      %p725 = pneg %p394
      %p726 = pneg %p418
      %p727 = pneg %p415
      %p728 = pneg %p439
      %p729 = pneg %p436
      %p730 = pneg %p460
      %p731 = pneg %p457
      %p732 = pneg %p481
      %p733 = pneg %p478
      %p734 = pneg %p502
      %p735 = pneg %p499
      %p736 = pneg %p523
      %p737 = pneg %p520
      %p738 = pneg %p544
      %p739 = pneg %p541
      %p740 = pneg %p570
      %p741 = pneg %p567
      %s742 = smul.u32 8, %s35
      %p743 = scmp.lt.s32.totalorder %s742, 15
      %s744 = scalar_select %p743, %s742, 15
      %s745 = smul.addr %s744, 8
      %s746 = scalar_lea.vmem %s24, %s745
      %s747 = smul.u32 8, %s35
      %p748 = scmp.lt.s32.totalorder %s747, 15
      %s749 = scalar_select %p748, %s747, 15
      %s750 = smul.addr %s749, 4
      %s751 = smul.addr %s750, 4
      %s752 = scalar_lea.vmem %s0, %s751
      %s753 = smul.u32 8, %s35
      %s754 = smul.u32 8, %s35
      %p755 = scmp.lt.s32.totalorder %s754, 15
      %s756 = scalar_select %p755, %s754, 15
      %s757 = smul.addr %s756, 8
      %s758 = scalar_lea.vmem %s1, %s757
      %s759 = smul.u32 8, %s35
      %s760 = smul.u32 8, %s35
      %p761 = scmp.lt.s32.totalorder %s760, 15
      %s762 = scalar_select %p761, %s760, 15
      %s763 = smul.addr %s762, 8
      %s764 = scalar_lea.vmem %s24, %s763
      %s765 = smul.u32 8, %s35
      %v767 = vld [vmem:[%s752] sm:$0xff]
      %v768 = vld [vmem:[%s752 + $0x8] sm:$0xff]
      %v769 = vld [vmem:[%s752 + $0x10] sm:$0xff]
      %v770 = vld [vmem:[%s752 + $0x18] sm:$0xff]
      %v771 = vld [vmem:[%s752 + $0x20] sm:$0xff]
      %v772 = vld [vmem:[%s752 + $0x28] sm:$0xff]
      %v773 = vld [vmem:[%s752 + $0x30] sm:$0xff]
      %v774 = vld [vmem:[%s752 + $0x38] sm:$0xff]
      %v775 = vld [vmem:[%s752 + $0x40] sm:$0xff]
      %v776 = vld [vmem:[%s752 + $0x48] sm:$0xff]
      %v777 = vld [vmem:[%s752 + $0x50] sm:$0xff]
      %v778 = vld [vmem:[%s752 + $0x58] sm:$0xff]
      %v779 = vld [vmem:[%s752 + $0x60] sm:$0xff]
      %v780 = vld [vmem:[%s752 + $0x68] sm:$0xff]
      %v781 = vld [vmem:[%s752 + $0x70] sm:$0xff]
      %v782 = vld [vmem:[%s752 + $0x78] sm:$0xff]
      %v783 = vld [vmem:[%s2] sm:$0xff]
      %v784 = vld [vmem:[%s2 + $0x8] sm:$0xff]
      %v785 = vld [vmem:[%s2 + $0x10] sm:$0xff]
      %v786 = vld [vmem:[%s2 + $0x18] sm:$0xff]
      %v787 = vld [vmem:[%s2 + $0x20] sm:$0xff]
      %v788 = vld [vmem:[%s2 + $0x28] sm:$0xff]
      %v789 = vld [vmem:[%s2 + $0x30] sm:$0xff]
      %v790 = vld [vmem:[%s2 + $0x38] sm:$0xff]
      %v791 = vld [vmem:[%s2 + $0x40] sm:$0xff]
      %v792 = vld [vmem:[%s2 + $0x48] sm:$0xff]
      %v793 = vld [vmem:[%s2 + $0x50] sm:$0xff]
      %v794 = vld [vmem:[%s2 + $0x58] sm:$0xff]
      %v795 = vld [vmem:[%s2 + $0x60] sm:$0xff]
      %v796 = vld [vmem:[%s2 + $0x68] sm:$0xff]
      %v797 = vld [vmem:[%s2 + $0x70] sm:$0xff]
      %v798 = vld [vmem:[%s2 + $0x78] sm:$0xff]
      %v799 = vld [vmem:[%s2 + $0x80] sm:$0xff]
      %v800 = vld [vmem:[%s2 + $0x88] sm:$0xff]
      %v801 = vld [vmem:[%s2 + $0x90] sm:$0xff]
      %v802 = vld [vmem:[%s2 + $0x98] sm:$0xff]
      %v803 = vld [vmem:[%s2 + $0xa0] sm:$0xff]
      %v804 = vld [vmem:[%s2 + $0xa8] sm:$0xff]
      %v805 = vld [vmem:[%s2 + $0xb0] sm:$0xff]
      %v806 = vld [vmem:[%s2 + $0xb8] sm:$0xff]
      %v807 = vld [vmem:[%s2 + $0xc0] sm:$0xff]
      %v808 = vld [vmem:[%s2 + $0xc8] sm:$0xff]
      %v809 = vld [vmem:[%s2 + $0xd0] sm:$0xff]
      %v810 = vld [vmem:[%s2 + $0xd8] sm:$0xff]
      %v811 = vld [vmem:[%s2 + $0xe0] sm:$0xff]
      %v812 = vld [vmem:[%s2 + $0xe8] sm:$0xff]
      %v813 = vld [vmem:[%s2 + $0xf0] sm:$0xff]
      %v814 = vld [vmem:[%s2 + $0xf8] sm:$0xff]
      %v815 = vld [vmem:[%s2 + $0x100] sm:$0xff]
      %v816 = vld [vmem:[%s2 + $0x108] sm:$0xff]
      %v817 = vld [vmem:[%s2 + $0x110] sm:$0xff]
      %v818 = vld [vmem:[%s2 + $0x118] sm:$0xff]
      %v819 = vld [vmem:[%s2 + $0x120] sm:$0xff]
      %v820 = vld [vmem:[%s2 + $0x128] sm:$0xff]
      %v821 = vld [vmem:[%s2 + $0x130] sm:$0xff]
      %v822 = vld [vmem:[%s2 + $0x138] sm:$0xff]
      %v823 = vld [vmem:[%s2 + $0x140] sm:$0xff]
      %v824 = vld [vmem:[%s2 + $0x148] sm:$0xff]
      %v825 = vld [vmem:[%s2 + $0x150] sm:$0xff]
      %v826 = vld [vmem:[%s2 + $0x158] sm:$0xff]
      %v827 = vld [vmem:[%s2 + $0x160] sm:$0xff]
      %v828 = vld [vmem:[%s2 + $0x168] sm:$0xff]
      %v829 = vld [vmem:[%s2 + $0x170] sm:$0xff]
      %v830 = vld [vmem:[%s2 + $0x178] sm:$0xff]
      %v831 = vld [vmem:[%s2 + $0x180] sm:$0xff]
      %v832 = vld [vmem:[%s2 + $0x188] sm:$0xff]
      %v833 = vld [vmem:[%s2 + $0x190] sm:$0xff]
      %v834 = vld [vmem:[%s2 + $0x198] sm:$0xff]
      %v835 = vld [vmem:[%s2 + $0x1a0] sm:$0xff]
      %v836 = vld [vmem:[%s2 + $0x1a8] sm:$0xff]
      %v837 = vld [vmem:[%s2 + $0x1b0] sm:$0xff]
      %v838 = vld [vmem:[%s2 + $0x1b8] sm:$0xff]
      %v839 = vld [vmem:[%s2 + $0x1c0] sm:$0xff]
      %v840 = vld [vmem:[%s2 + $0x1c8] sm:$0xff]
      %v841 = vld [vmem:[%s2 + $0x1d0] sm:$0xff]
      %v842 = vld [vmem:[%s2 + $0x1d8] sm:$0xff]
      %v843 = vld [vmem:[%s2 + $0x1e0] sm:$0xff]
      %v844 = vld [vmem:[%s2 + $0x1e8] sm:$0xff]
      %v845 = vld [vmem:[%s2 + $0x1f0] sm:$0xff]
      %v846 = vld [vmem:[%s2 + $0x1f8] sm:$0xff]
      %v847 = vld [vmem:[%s3] sm:$0x3]
      %v849 = vlaneseq
      %v850 = vshrl.u32 %v849, 7
      %v851 = vsub.s32 0, %v850
      %v852 = vrot.slane %v847, %v851
      %v853 = vlaneseq
      %v854 = vshrl.u32 %v853, 7
      %v855 = vsub.s32 1, %v854
      %v856 = vrot.slane %v847, %v855
      %v875 = vunpack.c.l.b16 %v767
      %v876 = vunpack.c.h.b16 %v767
      %v877 = vunpack.c.l.b16 %v768
      %v878 = vunpack.c.h.b16 %v768
      %v879 = vunpack.c.l.b16 %v769
      %v880 = vunpack.c.h.b16 %v769
      %v881 = vunpack.c.l.b16 %v770
      %v882 = vunpack.c.h.b16 %v770
      %v883 = vunpack.c.l.b16 %v771
      %v884 = vunpack.c.h.b16 %v771
      %v885 = vunpack.c.l.b16 %v772
      %v886 = vunpack.c.h.b16 %v772
      %v887 = vunpack.c.l.b16 %v773
      %v888 = vunpack.c.h.b16 %v773
      %v889 = vunpack.c.l.b16 %v774
      %v890 = vunpack.c.h.b16 %v774
      %v891 = vunpack.c.l.b16 %v775
      %v892 = vunpack.c.h.b16 %v775
      %v893 = vunpack.c.l.b16 %v776
      %v894 = vunpack.c.h.b16 %v776
      %v895 = vunpack.c.l.b16 %v777
      %v896 = vunpack.c.h.b16 %v777
      %v897 = vunpack.c.l.b16 %v778
      %v898 = vunpack.c.h.b16 %v778
      %v899 = vunpack.c.l.b16 %v779
      %v900 = vunpack.c.h.b16 %v779
      %v901 = vunpack.c.l.b16 %v780
      %v902 = vunpack.c.h.b16 %v780
      %v903 = vunpack.c.l.b16 %v781
      %v904 = vunpack.c.h.b16 %v781
      %v905 = vunpack.c.l.b16 %v782
      %v906 = vunpack.c.h.b16 %v782
      %v907 = vpack.c.b16 %v879, %v875
      %v908 = vpack.c.b16 %v880, %v876
      %v909 = vpack.c.b16 %v881, %v877
      %v910 = vpack.c.b16 %v882, %v878
      %v911 = vpack.c.b16 %v887, %v883
      %v912 = vpack.c.b16 %v888, %v884
      %v913 = vpack.c.b16 %v889, %v885
      %v914 = vpack.c.b16 %v890, %v886
      %v915 = vpack.c.b16 %v895, %v891
      %v916 = vpack.c.b16 %v896, %v892
      %v917 = vpack.c.b16 %v897, %v893
      %v918 = vpack.c.b16 %v898, %v894
      %v919 = vpack.c.b16 %v903, %v899
      %v920 = vpack.c.b16 %v904, %v900
      %v921 = vpack.c.b16 %v905, %v901
      %v922 = vpack.c.b16 %v906, %v902
      %v1003 = vunpack.c.l.b16 %v783
      %v1004 = vunpack.c.h.b16 %v783
      %v1005 = vunpack.c.l.b16 %v784
      %v1006 = vunpack.c.h.b16 %v784
      %v1007 = vunpack.c.l.b16 %v785
      %v1008 = vunpack.c.h.b16 %v785
      %v1009 = vunpack.c.l.b16 %v786
      %v1010 = vunpack.c.h.b16 %v786
      %v1011 = vunpack.c.l.b16 %v787
      %v1012 = vunpack.c.h.b16 %v787
      %v1013 = vunpack.c.l.b16 %v788
      %v1014 = vunpack.c.h.b16 %v788
      %v1015 = vunpack.c.l.b16 %v789
      %v1016 = vunpack.c.h.b16 %v789
      %v1017 = vunpack.c.l.b16 %v790
      %v1018 = vunpack.c.h.b16 %v790
      %v1019 = vunpack.c.l.b16 %v791
      %v1020 = vunpack.c.h.b16 %v791
      %v1021 = vunpack.c.l.b16 %v792
      %v1022 = vunpack.c.h.b16 %v792
      %v1023 = vunpack.c.l.b16 %v793
      %v1024 = vunpack.c.h.b16 %v793
      %v1025 = vunpack.c.l.b16 %v794
      %v1026 = vunpack.c.h.b16 %v794
      %v1027 = vunpack.c.l.b16 %v795
      %v1028 = vunpack.c.h.b16 %v795
      %v1029 = vunpack.c.l.b16 %v796
      %v1030 = vunpack.c.h.b16 %v796
      %v1031 = vunpack.c.l.b16 %v797
      %v1032 = vunpack.c.h.b16 %v797
      %v1033 = vunpack.c.l.b16 %v798
      %v1034 = vunpack.c.h.b16 %v798
      %v1035 = vunpack.c.l.b16 %v799
      %v1036 = vunpack.c.h.b16 %v799
      %v1037 = vunpack.c.l.b16 %v800
      %v1038 = vunpack.c.h.b16 %v800
      %v1039 = vunpack.c.l.b16 %v801
      %v1040 = vunpack.c.h.b16 %v801
      %v1041 = vunpack.c.l.b16 %v802
      %v1042 = vunpack.c.h.b16 %v802
      %v1043 = vunpack.c.l.b16 %v803
      %v1044 = vunpack.c.h.b16 %v803
      %v1045 = vunpack.c.l.b16 %v804
      %v1046 = vunpack.c.h.b16 %v804
      %v1047 = vunpack.c.l.b16 %v805
      %v1048 = vunpack.c.h.b16 %v805
      %v1049 = vunpack.c.l.b16 %v806
      %v1050 = vunpack.c.h.b16 %v806
      %v1051 = vunpack.c.l.b16 %v807
      %v1052 = vunpack.c.h.b16 %v807
      %v1053 = vunpack.c.l.b16 %v808
      %v1054 = vunpack.c.h.b16 %v808
      %v1055 = vunpack.c.l.b16 %v809
      %v1056 = vunpack.c.h.b16 %v809
      %v1057 = vunpack.c.l.b16 %v810
      %v1058 = vunpack.c.h.b16 %v810
      %v1059 = vunpack.c.l.b16 %v811
      %v1060 = vunpack.c.h.b16 %v811
      %v1061 = vunpack.c.l.b16 %v812
      %v1062 = vunpack.c.h.b16 %v812
      %v1063 = vunpack.c.l.b16 %v813
      %v1064 = vunpack.c.h.b16 %v813
      %v1065 = vunpack.c.l.b16 %v814
      %v1066 = vunpack.c.h.b16 %v814
      %v1067 = vunpack.c.l.b16 %v815
      %v1068 = vunpack.c.h.b16 %v815
      %v1069 = vunpack.c.l.b16 %v816
      %v1070 = vunpack.c.h.b16 %v816
      %v1071 = vunpack.c.l.b16 %v817
      %v1072 = vunpack.c.h.b16 %v817
      %v1073 = vunpack.c.l.b16 %v818
      %v1074 = vunpack.c.h.b16 %v818
      %v1075 = vunpack.c.l.b16 %v819
      %v1076 = vunpack.c.h.b16 %v819
      %v1077 = vunpack.c.l.b16 %v820
      %v1078 = vunpack.c.h.b16 %v820
      %v1079 = vunpack.c.l.b16 %v821
      %v1080 = vunpack.c.h.b16 %v821
      %v1081 = vunpack.c.l.b16 %v822
      %v1082 = vunpack.c.h.b16 %v822
      %v1083 = vunpack.c.l.b16 %v823
      %v1084 = vunpack.c.h.b16 %v823
      %v1085 = vunpack.c.l.b16 %v824
      %v1086 = vunpack.c.h.b16 %v824
      %v1087 = vunpack.c.l.b16 %v825
      %v1088 = vunpack.c.h.b16 %v825
      %v1089 = vunpack.c.l.b16 %v826
      %v1090 = vunpack.c.h.b16 %v826
      %v1091 = vunpack.c.l.b16 %v827
      %v1092 = vunpack.c.h.b16 %v827
      %v1093 = vunpack.c.l.b16 %v828
      %v1094 = vunpack.c.h.b16 %v828
      %v1095 = vunpack.c.l.b16 %v829
      %v1096 = vunpack.c.h.b16 %v829
      %v1097 = vunpack.c.l.b16 %v830
      %v1098 = vunpack.c.h.b16 %v830
      %v1099 = vunpack.c.l.b16 %v831
      %v1100 = vunpack.c.h.b16 %v831
      %v1101 = vunpack.c.l.b16 %v832
      %v1102 = vunpack.c.h.b16 %v832
      %v1103 = vunpack.c.l.b16 %v833
      %v1104 = vunpack.c.h.b16 %v833
      %v1105 = vunpack.c.l.b16 %v834
      %v1106 = vunpack.c.h.b16 %v834
      %v1107 = vunpack.c.l.b16 %v835
      %v1108 = vunpack.c.h.b16 %v835
      %v1109 = vunpack.c.l.b16 %v836
      %v1110 = vunpack.c.h.b16 %v836
      %v1111 = vunpack.c.l.b16 %v837
      %v1112 = vunpack.c.h.b16 %v837
      %v1113 = vunpack.c.l.b16 %v838
      %v1114 = vunpack.c.h.b16 %v838
      %v1115 = vunpack.c.l.b16 %v839
      %v1116 = vunpack.c.h.b16 %v839
      %v1117 = vunpack.c.l.b16 %v840
      %v1118 = vunpack.c.h.b16 %v840
      %v1119 = vunpack.c.l.b16 %v841
      %v1120 = vunpack.c.h.b16 %v841
      %v1121 = vunpack.c.l.b16 %v842
      %v1122 = vunpack.c.h.b16 %v842
      %v1123 = vunpack.c.l.b16 %v843
      %v1124 = vunpack.c.h.b16 %v843
      %v1125 = vunpack.c.l.b16 %v844
      %v1126 = vunpack.c.h.b16 %v844
      %v1127 = vunpack.c.l.b16 %v845
      %v1128 = vunpack.c.h.b16 %v845
      %v1129 = vunpack.c.l.b16 %v846
      %v1130 = vunpack.c.h.b16 %v846
      %v1131 = vpack.c.b16 %v1005, %v1003
      %v1132 = vpack.c.b16 %v1006, %v1004
      %v1133 = vpack.c.b16 %v1009, %v1007
      %v1134 = vpack.c.b16 %v1010, %v1008
      %v1135 = vpack.c.b16 %v1013, %v1011
      %v1136 = vpack.c.b16 %v1014, %v1012
      %v1137 = vpack.c.b16 %v1017, %v1015
      %v1138 = vpack.c.b16 %v1018, %v1016
      %v1139 = vpack.c.b16 %v1021, %v1019
      %v1140 = vpack.c.b16 %v1022, %v1020
      %v1141 = vpack.c.b16 %v1025, %v1023
      %v1142 = vpack.c.b16 %v1026, %v1024
      %v1143 = vpack.c.b16 %v1029, %v1027
      %v1144 = vpack.c.b16 %v1030, %v1028
      %v1145 = vpack.c.b16 %v1033, %v1031
      %v1146 = vpack.c.b16 %v1034, %v1032
      %v1147 = vpack.c.b16 %v1037, %v1035
      %v1148 = vpack.c.b16 %v1038, %v1036
      %v1149 = vpack.c.b16 %v1041, %v1039
      %v1150 = vpack.c.b16 %v1042, %v1040
      %v1151 = vpack.c.b16 %v1045, %v1043
      %v1152 = vpack.c.b16 %v1046, %v1044
      %v1153 = vpack.c.b16 %v1049, %v1047
      %v1154 = vpack.c.b16 %v1050, %v1048
      %v1155 = vpack.c.b16 %v1053, %v1051
      %v1156 = vpack.c.b16 %v1054, %v1052
      %v1157 = vpack.c.b16 %v1057, %v1055
      %v1158 = vpack.c.b16 %v1058, %v1056
      %v1159 = vpack.c.b16 %v1061, %v1059
      %v1160 = vpack.c.b16 %v1062, %v1060
      %v1161 = vpack.c.b16 %v1065, %v1063
      %v1162 = vpack.c.b16 %v1066, %v1064
      %v1163 = vpack.c.b16 %v1069, %v1067
      %v1164 = vpack.c.b16 %v1070, %v1068
      %v1165 = vpack.c.b16 %v1073, %v1071
      %v1166 = vpack.c.b16 %v1074, %v1072
      %v1167 = vpack.c.b16 %v1077, %v1075
      %v1168 = vpack.c.b16 %v1078, %v1076
      %v1169 = vpack.c.b16 %v1081, %v1079
      %v1170 = vpack.c.b16 %v1082, %v1080
      %v1171 = vpack.c.b16 %v1085, %v1083
      %v1172 = vpack.c.b16 %v1086, %v1084
      %v1173 = vpack.c.b16 %v1089, %v1087
      %v1174 = vpack.c.b16 %v1090, %v1088
      %v1175 = vpack.c.b16 %v1093, %v1091
      %v1176 = vpack.c.b16 %v1094, %v1092
      %v1177 = vpack.c.b16 %v1097, %v1095
      %v1178 = vpack.c.b16 %v1098, %v1096
      %v1179 = vpack.c.b16 %v1101, %v1099
      %v1180 = vpack.c.b16 %v1102, %v1100
      %v1181 = vpack.c.b16 %v1105, %v1103
      %v1182 = vpack.c.b16 %v1106, %v1104
      %v1183 = vpack.c.b16 %v1109, %v1107
      %v1184 = vpack.c.b16 %v1110, %v1108
      %v1185 = vpack.c.b16 %v1113, %v1111
      %v1186 = vpack.c.b16 %v1114, %v1112
      %v1187 = vpack.c.b16 %v1117, %v1115
      %v1188 = vpack.c.b16 %v1118, %v1116
      %v1189 = vpack.c.b16 %v1121, %v1119
      %v1190 = vpack.c.b16 %v1122, %v1120
      %v1191 = vpack.c.b16 %v1125, %v1123
      %v1192 = vpack.c.b16 %v1126, %v1124
      %v1193 = vpack.c.b16 %v1129, %v1127
      %v1194 = vpack.c.b16 %v1130, %v1128
      %1259 = vmatprep.subr.bf16.mxu0 %v1132
      %1260 = vmatpush1.bf16.msra.mxu0 %v1131
      %1261 = vmatprep.subr.bf16.mxu0 %v1134
      %1262 = vmatpush1.bf16.msra.mxu0 %v1133
      %1263 = vmatprep.subr.bf16.mxu0 %v1136
      %1264 = vmatpush1.bf16.msra.mxu0 %v1135
      %1265 = vmatprep.subr.bf16.mxu0 %v1138
      %1266 = vmatpush1.bf16.msra.mxu0 %v1137
      %1267 = vmatprep.subr.bf16.mxu0 %v1140
      %1268 = vmatpush1.bf16.msra.mxu0 %v1139
      %1269 = vmatprep.subr.bf16.mxu0 %v1142
      %1270 = vmatpush1.bf16.msra.mxu0 %v1141
      %1271 = vmatprep.subr.bf16.mxu0 %v1144
      %1272 = vmatpush1.bf16.msra.mxu0 %v1143
      %1273 = vmatprep.subr.bf16.mxu0 %v1146
      %1274 = vmatpush1.bf16.msra.mxu0 %v1145
      %1275 = vmatprep.subr.bf16.mxu0 %v1148
      %1276 = vmatpush1.bf16.msra.mxu0 %v1147
      %1277 = vmatprep.subr.bf16.mxu0 %v1150
      %1278 = vmatpush1.bf16.msra.mxu0 %v1149
      %1279 = vmatprep.subr.bf16.mxu0 %v1152
      %1280 = vmatpush1.bf16.msra.mxu0 %v1151
      %1281 = vmatprep.subr.bf16.mxu0 %v1154
      %1282 = vmatpush1.bf16.msra.mxu0 %v1153
      %1283 = vmatprep.subr.bf16.mxu0 %v1156
      %1284 = vmatpush1.bf16.msra.mxu0 %v1155
      %1285 = vmatprep.subr.bf16.mxu0 %v1158
      %1286 = vmatpush1.bf16.msra.mxu0 %v1157
      %1287 = vmatprep.subr.bf16.mxu0 %v1160
      %1288 = vmatpush1.bf16.msra.mxu0 %v1159
      %1289 = vmatprep.subr.bf16.mxu0 %v1162
      %1290 = vmatpush1.bf16.msra.mxu0 %v1161
      %1291 = vmatprep.mubr.bf16.mxu0 %v908
      %1292 = vmatmul.mubr.bf16.gmra.mrb[0].mxu0 %v907
      %v1293 = vpop.f32.mrb[0].mxu0
      %v1294 = vadd.f32 %v852, %v1293
      %v1295 = vpop.f32.mrb[0].mxu0
      %v1296 = vadd.f32 %v856, %v1295
      %v1297 = vpop.f32.mrb[0].mxu0
      %v1298 = vadd.f32 %v852, %v1297
      %v1299 = vpop.f32.mrb[0].mxu0
      %v1300 = vadd.f32 %v856, %v1299
      %1301 = vmatprep.mubr.bf16.mxu0 %v912
      %1302 = vmatmul.mubr.bf16.gmra.mrb[0].mxu0 %v911
      %v1303 = vpop.f32.mrb[0].mxu0
      %v1304 = vadd.f32 %v852, %v1303
      %v1305 = vpop.f32.mrb[0].mxu0
      %v1306 = vadd.f32 %v856, %v1305
      %v1307 = vpop.f32.mrb[0].mxu0
      %v1308 = vadd.f32 %v852, %v1307
      %v1309 = vpop.f32.mrb[0].mxu0
      %v1310 = vadd.f32 %v856, %v1309
      %1311 = vmatprep.mubr.bf16.mxu0 %v916
      %1312 = vmatmul.mubr.bf16.gmra.mrb[0].mxu0 %v915
      %v1313 = vpop.f32.mrb[0].mxu0
      %v1314 = vadd.f32 %v852, %v1313
      %v1315 = vpop.f32.mrb[0].mxu0
      %v1316 = vadd.f32 %v856, %v1315
      %v1317 = vpop.f32.mrb[0].mxu0
      %v1318 = vadd.f32 %v852, %v1317
      %v1319 = vpop.f32.mrb[0].mxu0
      %v1320 = vadd.f32 %v856, %v1319
      %1321 = vmatprep.mubr.bf16.mxu0 %v920
      %1322 = vmatmul.mubr.bf16.gmra.mrb[0].mxu0 %v919
      %v1323 = vpop.f32.mrb[0].mxu0
      %v1324 = vadd.f32 %v852, %v1323
      %v1325 = vpop.f32.mrb[0].mxu0
      %v1326 = vadd.f32 %v856, %v1325
      %v1327 = vpop.f32.mrb[0].mxu0
      %v1328 = vadd.f32 %v852, %v1327
      %v1329 = vpop.f32.mrb[0].mxu0
      %v1330 = vadd.f32 %v856, %v1329
      %1331 = vdwg.mxu0
      %1332 = vmatprep.subr.bf16.mxu0 %v1164
      %1333 = vmatpush1.bf16.msra.mxu0 %v1163
      %1334 = vmatprep.subr.bf16.mxu0 %v1166
      %1335 = vmatpush1.bf16.msra.mxu0 %v1165
      %1336 = vmatprep.subr.bf16.mxu0 %v1168
      %1337 = vmatpush1.bf16.msra.mxu0 %v1167
      %1338 = vmatprep.subr.bf16.mxu0 %v1170
      %1339 = vmatpush1.bf16.msra.mxu0 %v1169
      %1340 = vmatprep.subr.bf16.mxu0 %v1172
      %1341 = vmatpush1.bf16.msra.mxu0 %v1171
      %1342 = vmatprep.subr.bf16.mxu0 %v1174
      %1343 = vmatpush1.bf16.msra.mxu0 %v1173
      %1344 = vmatprep.subr.bf16.mxu0 %v1176
      %1345 = vmatpush1.bf16.msra.mxu0 %v1175
      %1346 = vmatprep.subr.bf16.mxu0 %v1178
      %1347 = vmatpush1.bf16.msra.mxu0 %v1177
      %1348 = vmatprep.subr.bf16.mxu0 %v1180
      %1349 = vmatpush1.bf16.msra.mxu0 %v1179
      %1350 = vmatprep.subr.bf16.mxu0 %v1182
      %1351 = vmatpush1.bf16.msra.mxu0 %v1181
      %1352 = vmatprep.subr.bf16.mxu0 %v1184
      %1353 = vmatpush1.bf16.msra.mxu0 %v1183
      %1354 = vmatprep.subr.bf16.mxu0 %v1186
      %1355 = vmatpush1.bf16.msra.mxu0 %v1185
      %1356 = vmatprep.subr.bf16.mxu0 %v1188
      %1357 = vmatpush1.bf16.msra.mxu0 %v1187
      %1358 = vmatprep.subr.bf16.mxu0 %v1190
      %1359 = vmatpush1.bf16.msra.mxu0 %v1189
      %1360 = vmatprep.subr.bf16.mxu0 %v1192
      %1361 = vmatpush1.bf16.msra.mxu0 %v1191
      %1362 = vmatprep.subr.bf16.mxu0 %v1194
      %1363 = vmatpush1.bf16.msra.mxu0 %v1193
      %1364 = vmatprep.mubr.bf16.mxu0 %v910
      %1365 = vmatmul.mubr.bf16.gmra.mrb[0].mxu0 %v909
      %v1366 = vpop.f32.mrb[0].mxu0
      %v1367 = vadd.f32 %v1294, %v1366
      %v1368 = vpop.f32.mrb[0].mxu0
      %v1369 = vadd.f32 %v1296, %v1368
      %v1370 = vpop.f32.mrb[0].mxu0
      %v1371 = vadd.f32 %v1298, %v1370
      %v1372 = vpop.f32.mrb[0].mxu0
      %v1373 = vadd.f32 %v1300, %v1372
      %1374 = vmatprep.mubr.bf16.mxu0 %v914
      %1375 = vmatmul.mubr.bf16.gmra.mrb[0].mxu0 %v913
      %v1376 = vpop.f32.mrb[0].mxu0
      %v1377 = vadd.f32 %v1304, %v1376
      %v1378 = vpop.f32.mrb[0].mxu0
      %v1379 = vadd.f32 %v1306, %v1378
      %v1380 = vpop.f32.mrb[0].mxu0
      %v1381 = vadd.f32 %v1308, %v1380
      %v1382 = vpop.f32.mrb[0].mxu0
      %v1383 = vadd.f32 %v1310, %v1382
      %1384 = vmatprep.mubr.bf16.mxu0 %v918
      %1385 = vmatmul.mubr.bf16.gmra.mrb[0].mxu0 %v917
      %v1386 = vpop.f32.mrb[0].mxu0
      %v1387 = vadd.f32 %v1314, %v1386
      %v1388 = vpop.f32.mrb[0].mxu0
      %v1389 = vadd.f32 %v1316, %v1388
      %v1390 = vpop.f32.mrb[0].mxu0
      %v1391 = vadd.f32 %v1318, %v1390
      %v1392 = vpop.f32.mrb[0].mxu0
      %v1393 = vadd.f32 %v1320, %v1392
      %1394 = vmatprep.mubr.bf16.mxu0 %v922
      %1395 = vmatmul.mubr.bf16.gmra.mrb[0].mxu0 %v921
      %v1396 = vpop.f32.mrb[0].mxu0
      %v1397 = vadd.f32 %v1324, %v1396
      %v1398 = vpop.f32.mrb[0].mxu0
      %v1399 = vadd.f32 %v1326, %v1398
      %v1400 = vpop.f32.mrb[0].mxu0
      %v1401 = vadd.f32 %v1328, %v1400
      %v1402 = vpop.f32.mrb[0].mxu0
      %v1403 = vadd.f32 %v1330, %v1402
      %1404 = vdwg.mxu0
      %v1405 = vmax.f32 %v1367, 0.0
      %v1406 = vmax.f32 %v1369, 0.0
      %v1407 = vmax.f32 %v1371, 0.0
      %v1408 = vmax.f32 %v1373, 0.0
      %v1409 = vmax.f32 %v1377, 0.0
      %v1410 = vmax.f32 %v1379, 0.0
      %v1411 = vmax.f32 %v1381, 0.0
      %v1412 = vmax.f32 %v1383, 0.0
      %v1413 = vmax.f32 %v1387, 0.0
      %v1414 = vmax.f32 %v1389, 0.0
      %v1415 = vmax.f32 %v1391, 0.0
      %v1416 = vmax.f32 %v1393, 0.0
      %v1417 = vmax.f32 %v1397, 0.0
      %v1418 = vmax.f32 %v1399, 0.0
      %v1419 = vmax.f32 %v1401, 0.0
      %v1420 = vmax.f32 %v1403, 0.0
      %v1421 = vpack.c.bf16 %v1407, %v1405
      %v1422 = vpack.c.bf16 %v1408, %v1406
      %v1423 = vpack.c.bf16 %v1411, %v1409
      %v1424 = vpack.c.bf16 %v1412, %v1410
      %v1425 = vpack.c.bf16 %v1415, %v1413
      %v1426 = vpack.c.bf16 %v1416, %v1414
      %v1427 = vpack.c.bf16 %v1419, %v1417
      %v1428 = vpack.c.bf16 %v1420, %v1418
      %v1429 = vld [vmem:[%s4] sm:$0xff]
      %v1430 = vld [vmem:[%s4 + $0x8] sm:$0xff]
      %v1431 = vld [vmem:[%s4 + $0x10] sm:$0xff]
      %v1432 = vld [vmem:[%s4 + $0x18] sm:$0xff]
      %v1433 = vld [vmem:[%s4 + $0x20] sm:$0xff]
      %v1434 = vld [vmem:[%s4 + $0x28] sm:$0xff]
      %v1435 = vld [vmem:[%s4 + $0x30] sm:$0xff]
      %v1436 = vld [vmem:[%s4 + $0x38] sm:$0xff]
      %v1437 = vld [vmem:[%s4 + $0x40] sm:$0xff]
      %v1438 = vld [vmem:[%s4 + $0x48] sm:$0xff]
      %v1439 = vld [vmem:[%s4 + $0x50] sm:$0xff]
      %v1440 = vld [vmem:[%s4 + $0x58] sm:$0xff]
      %v1441 = vld [vmem:[%s4 + $0x60] sm:$0xff]
      %v1442 = vld [vmem:[%s4 + $0x68] sm:$0xff]
      %v1443 = vld [vmem:[%s4 + $0x70] sm:$0xff]
      %v1444 = vld [vmem:[%s4 + $0x78] sm:$0xff]
      %v1445 = vld [vmem:[%s4 + $0x80] sm:$0xff]
      %v1446 = vld [vmem:[%s4 + $0x88] sm:$0xff]
      %v1447 = vld [vmem:[%s4 + $0x90] sm:$0xff]
      %v1448 = vld [vmem:[%s4 + $0x98] sm:$0xff]
      %v1449 = vld [vmem:[%s4 + $0xa0] sm:$0xff]
      %v1450 = vld [vmem:[%s4 + $0xa8] sm:$0xff]
      %v1451 = vld [vmem:[%s4 + $0xb0] sm:$0xff]
      %v1452 = vld [vmem:[%s4 + $0xb8] sm:$0xff]
      %v1453 = vld [vmem:[%s4 + $0xc0] sm:$0xff]
      %v1454 = vld [vmem:[%s4 + $0xc8] sm:$0xff]
      %v1455 = vld [vmem:[%s4 + $0xd0] sm:$0xff]
      %v1456 = vld [vmem:[%s4 + $0xd8] sm:$0xff]
      %v1457 = vld [vmem:[%s4 + $0xe0] sm:$0xff]
      %v1458 = vld [vmem:[%s4 + $0xe8] sm:$0xff]
      %v1459 = vld [vmem:[%s4 + $0xf0] sm:$0xff]
      %v1460 = vld [vmem:[%s4 + $0xf8] sm:$0xff]
      %v1461 = vld [vmem:[%s5] sm:$0x3]
      %v1463 = vlaneseq
      %v1464 = vshrl.u32 %v1463, 7
      %v1465 = vsub.s32 0, %v1464
      %v1466 = vrot.slane %v1461, %v1465
      %v1467 = vlaneseq
      %v1468 = vshrl.u32 %v1467, 7
      %v1469 = vsub.s32 1, %v1468
      %v1470 = vrot.slane %v1461, %v1469
      %v1505 = vunpack.c.l.b16 %v1429
      %v1506 = vunpack.c.h.b16 %v1429
      %v1507 = vunpack.c.l.b16 %v1430
      %v1508 = vunpack.c.h.b16 %v1430
      %v1509 = vunpack.c.l.b16 %v1431
      %v1510 = vunpack.c.h.b16 %v1431
      %v1511 = vunpack.c.l.b16 %v1432
      %v1512 = vunpack.c.h.b16 %v1432
      %v1513 = vunpack.c.l.b16 %v1433
      %v1514 = vunpack.c.h.b16 %v1433
      %v1515 = vunpack.c.l.b16 %v1434
      %v1516 = vunpack.c.h.b16 %v1434
      %v1517 = vunpack.c.l.b16 %v1435
      %v1518 = vunpack.c.h.b16 %v1435
      %v1519 = vunpack.c.l.b16 %v1436
      %v1520 = vunpack.c.h.b16 %v1436
      %v1521 = vunpack.c.l.b16 %v1437
      %v1522 = vunpack.c.h.b16 %v1437
      %v1523 = vunpack.c.l.b16 %v1438
      %v1524 = vunpack.c.h.b16 %v1438
      %v1525 = vunpack.c.l.b16 %v1439
      %v1526 = vunpack.c.h.b16 %v1439
      %v1527 = vunpack.c.l.b16 %v1440
      %v1528 = vunpack.c.h.b16 %v1440
      %v1529 = vunpack.c.l.b16 %v1441
      %v1530 = vunpack.c.h.b16 %v1441
      %v1531 = vunpack.c.l.b16 %v1442
      %v1532 = vunpack.c.h.b16 %v1442
      %v1533 = vunpack.c.l.b16 %v1443
      %v1534 = vunpack.c.h.b16 %v1443
      %v1535 = vunpack.c.l.b16 %v1444
      %v1536 = vunpack.c.h.b16 %v1444
      %v1537 = vunpack.c.l.b16 %v1445
      %v1538 = vunpack.c.h.b16 %v1445
      %v1539 = vunpack.c.l.b16 %v1446
      %v1540 = vunpack.c.h.b16 %v1446
      %v1541 = vunpack.c.l.b16 %v1447
      %v1542 = vunpack.c.h.b16 %v1447
      %v1543 = vunpack.c.l.b16 %v1448
      %v1544 = vunpack.c.h.b16 %v1448
      %v1545 = vunpack.c.l.b16 %v1449
      %v1546 = vunpack.c.h.b16 %v1449
      %v1547 = vunpack.c.l.b16 %v1450
      %v1548 = vunpack.c.h.b16 %v1450
      %v1549 = vunpack.c.l.b16 %v1451
      %v1550 = vunpack.c.h.b16 %v1451
      %v1551 = vunpack.c.l.b16 %v1452
      %v1552 = vunpack.c.h.b16 %v1452
      %v1553 = vunpack.c.l.b16 %v1453
      %v1554 = vunpack.c.h.b16 %v1453
      %v1555 = vunpack.c.l.b16 %v1454
      %v1556 = vunpack.c.h.b16 %v1454
      %v1557 = vunpack.c.l.b16 %v1455
      %v1558 = vunpack.c.h.b16 %v1455
      %v1559 = vunpack.c.l.b16 %v1456
      %v1560 = vunpack.c.h.b16 %v1456
      %v1561 = vunpack.c.l.b16 %v1457
      %v1562 = vunpack.c.h.b16 %v1457
      %v1563 = vunpack.c.l.b16 %v1458
      %v1564 = vunpack.c.h.b16 %v1458
      %v1565 = vunpack.c.l.b16 %v1459
      %v1566 = vunpack.c.h.b16 %v1459
      %v1567 = vunpack.c.l.b16 %v1460
      %v1568 = vunpack.c.h.b16 %v1460
      %v1569 = vpack.c.b16 %v1507, %v1505
      %v1570 = vpack.c.b16 %v1508, %v1506
      %v1571 = vpack.c.b16 %v1511, %v1509
      %v1572 = vpack.c.b16 %v1512, %v1510
      %v1573 = vpack.c.b16 %v1515, %v1513
      %v1574 = vpack.c.b16 %v1516, %v1514
      %v1575 = vpack.c.b16 %v1519, %v1517
      %v1576 = vpack.c.b16 %v1520, %v1518
      %v1577 = vpack.c.b16 %v1523, %v1521
      %v1578 = vpack.c.b16 %v1524, %v1522
      %v1579 = vpack.c.b16 %v1527, %v1525
      %v1580 = vpack.c.b16 %v1528, %v1526
      %v1581 = vpack.c.b16 %v1531, %v1529
      %v1582 = vpack.c.b16 %v1532, %v1530
      %v1583 = vpack.c.b16 %v1535, %v1533
      %v1584 = vpack.c.b16 %v1536, %v1534
      %v1585 = vpack.c.b16 %v1539, %v1537
      %v1586 = vpack.c.b16 %v1540, %v1538
      %v1587 = vpack.c.b16 %v1543, %v1541
      %v1588 = vpack.c.b16 %v1544, %v1542
      %v1589 = vpack.c.b16 %v1547, %v1545
      %v1590 = vpack.c.b16 %v1548, %v1546
      %v1591 = vpack.c.b16 %v1551, %v1549
      %v1592 = vpack.c.b16 %v1552, %v1550
      %v1593 = vpack.c.b16 %v1555, %v1553
      %v1594 = vpack.c.b16 %v1556, %v1554
      %v1595 = vpack.c.b16 %v1559, %v1557
      %v1596 = vpack.c.b16 %v1560, %v1558
      %v1597 = vpack.c.b16 %v1563, %v1561
      %v1598 = vpack.c.b16 %v1564, %v1562
      %v1599 = vpack.c.b16 %v1567, %v1565
      %v1600 = vpack.c.b16 %v1568, %v1566
      %1633 = vmatprep.subr.bf16.mxu0 %v1570
      %1634 = vmatpush1.bf16.msra.mxu0 %v1569
      %1635 = vmatprep.subr.bf16.mxu0 %v1572
      %1636 = vmatpush1.bf16.msra.mxu0 %v1571
      %1637 = vmatprep.subr.bf16.mxu0 %v1574
      %1638 = vmatpush1.bf16.msra.mxu0 %v1573
      %1639 = vmatprep.subr.bf16.mxu0 %v1576
      %1640 = vmatpush1.bf16.msra.mxu0 %v1575
      %1641 = vmatprep.subr.bf16.mxu0 %v1578
      %1642 = vmatpush1.bf16.msra.mxu0 %v1577
      %1643 = vmatprep.subr.bf16.mxu0 %v1580
      %1644 = vmatpush1.bf16.msra.mxu0 %v1579
      %1645 = vmatprep.subr.bf16.mxu0 %v1582
      %1646 = vmatpush1.bf16.msra.mxu0 %v1581
      %1647 = vmatprep.subr.bf16.mxu0 %v1584
      %1648 = vmatpush1.bf16.msra.mxu0 %v1583
      %1649 = vmatprep.subr.bf16.mxu0 %v1586
      %1650 = vmatpush1.bf16.msra.mxu0 %v1585
      %1651 = vmatprep.subr.bf16.mxu0 %v1588
      %1652 = vmatpush1.bf16.msra.mxu0 %v1587
      %1653 = vmatprep.subr.bf16.mxu0 %v1590
      %1654 = vmatpush1.bf16.msra.mxu0 %v1589
      %1655 = vmatprep.subr.bf16.mxu0 %v1592
      %1656 = vmatpush1.bf16.msra.mxu0 %v1591
      %1657 = vmatprep.subr.bf16.mxu0 %v1594
      %1658 = vmatpush1.bf16.msra.mxu0 %v1593
      %1659 = vmatprep.subr.bf16.mxu0 %v1596
      %1660 = vmatpush1.bf16.msra.mxu0 %v1595
      %1661 = vmatprep.subr.bf16.mxu0 %v1598
      %1662 = vmatpush1.bf16.msra.mxu0 %v1597
      %1663 = vmatprep.subr.bf16.mxu0 %v1600
      %1664 = vmatpush1.bf16.msra.mxu0 %v1599
      %1665 = vmatprep.mubr.bf16.mxu0 %v1422
      %1666 = vmatmul.mubr.bf16.gmra.mrb[0].mxu0 %v1421
      %v1667 = vpop.f32.mrb[0].mxu0
      %v1668 = vadd.f32 %v1466, %v1667
      %v1669 = vpop.f32.mrb[0].mxu0
      %v1670 = vadd.f32 %v1470, %v1669
      %v1671 = vpop.f32.mrb[0].mxu0
      %v1672 = vadd.f32 %v1466, %v1671
      %v1673 = vpop.f32.mrb[0].mxu0
      %v1674 = vadd.f32 %v1470, %v1673
      %1675 = vmatprep.mubr.bf16.mxu0 %v1424
      %1676 = vmatmul.mubr.bf16.gmra.mrb[0].mxu0 %v1423
      %v1677 = vpop.f32.mrb[0].mxu0
      %v1678 = vadd.f32 %v1466, %v1677
      %v1679 = vpop.f32.mrb[0].mxu0
      %v1680 = vadd.f32 %v1470, %v1679
      %v1681 = vpop.f32.mrb[0].mxu0
      %v1682 = vadd.f32 %v1466, %v1681
      %v1683 = vpop.f32.mrb[0].mxu0
      %v1684 = vadd.f32 %v1470, %v1683
      %1685 = vmatprep.mubr.bf16.mxu0 %v1426
      %1686 = vmatmul.mubr.bf16.gmra.mrb[0].mxu0 %v1425
      %v1687 = vpop.f32.mrb[0].mxu0
      %v1688 = vadd.f32 %v1466, %v1687
      %v1689 = vpop.f32.mrb[0].mxu0
      %v1690 = vadd.f32 %v1470, %v1689
      %v1691 = vpop.f32.mrb[0].mxu0
      %v1692 = vadd.f32 %v1466, %v1691
      %v1693 = vpop.f32.mrb[0].mxu0
      %v1694 = vadd.f32 %v1470, %v1693
      %1695 = vmatprep.mubr.bf16.mxu0 %v1428
      %1696 = vmatmul.mubr.bf16.gmra.mrb[0].mxu0 %v1427
      %v1697 = vpop.f32.mrb[0].mxu0
      %v1698 = vadd.f32 %v1466, %v1697
      %v1699 = vpop.f32.mrb[0].mxu0
      %v1700 = vadd.f32 %v1470, %v1699
      %v1701 = vpop.f32.mrb[0].mxu0
      %v1702 = vadd.f32 %v1466, %v1701
      %v1703 = vpop.f32.mrb[0].mxu0
      %v1704 = vadd.f32 %v1470, %v1703
      %1705 = vdwg.mxu0
      %v1706 = vmax.f32 %v1668, 0.0
      %v1707 = vmax.f32 %v1670, 0.0
      %v1708 = vmax.f32 %v1672, 0.0
      %v1709 = vmax.f32 %v1674, 0.0
      %v1710 = vmax.f32 %v1678, 0.0
      %v1711 = vmax.f32 %v1680, 0.0
      %v1712 = vmax.f32 %v1682, 0.0
      %v1713 = vmax.f32 %v1684, 0.0
      %v1714 = vmax.f32 %v1688, 0.0
      %v1715 = vmax.f32 %v1690, 0.0
      %v1716 = vmax.f32 %v1692, 0.0
      %v1717 = vmax.f32 %v1694, 0.0
      %v1718 = vmax.f32 %v1698, 0.0
      %v1719 = vmax.f32 %v1700, 0.0
      %v1720 = vmax.f32 %v1702, 0.0
      %v1721 = vmax.f32 %v1704, 0.0
      %v1722 = vpack.c.bf16 %v1708, %v1706
      %v1723 = vpack.c.bf16 %v1709, %v1707
      %v1724 = vpack.c.bf16 %v1712, %v1710
      %v1725 = vpack.c.bf16 %v1713, %v1711
      %v1726 = vpack.c.bf16 %v1716, %v1714
      %v1727 = vpack.c.bf16 %v1717, %v1715
      %v1728 = vpack.c.bf16 %v1720, %v1718
      %v1729 = vpack.c.bf16 %v1721, %v1719
      %v1730 = vld [vmem:[%s6] sm:$0xff]
      %v1731 = vld [vmem:[%s6 + $0x8] sm:$0xff]
      %v1732 = vld [vmem:[%s6 + $0x10] sm:$0xff]
      %v1733 = vld [vmem:[%s6 + $0x18] sm:$0xff]
      %v1734 = vld [vmem:[%s6 + $0x20] sm:$0xff]
      %v1735 = vld [vmem:[%s6 + $0x28] sm:$0xff]
      %v1736 = vld [vmem:[%s6 + $0x30] sm:$0xff]
      %v1737 = vld [vmem:[%s6 + $0x38] sm:$0xff]
      %v1738 = vld [vmem:[%s6 + $0x40] sm:$0xff]
      %v1739 = vld [vmem:[%s6 + $0x48] sm:$0xff]
      %v1740 = vld [vmem:[%s6 + $0x50] sm:$0xff]
      %v1741 = vld [vmem:[%s6 + $0x58] sm:$0xff]
      %v1742 = vld [vmem:[%s6 + $0x60] sm:$0xff]
      %v1743 = vld [vmem:[%s6 + $0x68] sm:$0xff]
      %v1744 = vld [vmem:[%s6 + $0x70] sm:$0xff]
      %v1745 = vld [vmem:[%s6 + $0x78] sm:$0xff]
      %v1746 = vld [vmem:[%s6 + $0x80] sm:$0xff]
      %v1747 = vld [vmem:[%s6 + $0x88] sm:$0xff]
      %v1748 = vld [vmem:[%s6 + $0x90] sm:$0xff]
      %v1749 = vld [vmem:[%s6 + $0x98] sm:$0xff]
      %v1750 = vld [vmem:[%s6 + $0xa0] sm:$0xff]
      %v1751 = vld [vmem:[%s6 + $0xa8] sm:$0xff]
      %v1752 = vld [vmem:[%s6 + $0xb0] sm:$0xff]
      %v1753 = vld [vmem:[%s6 + $0xb8] sm:$0xff]
      %v1754 = vld [vmem:[%s6 + $0xc0] sm:$0xff]
      %v1755 = vld [vmem:[%s6 + $0xc8] sm:$0xff]
      %v1756 = vld [vmem:[%s6 + $0xd0] sm:$0xff]
      %v1757 = vld [vmem:[%s6 + $0xd8] sm:$0xff]
      %v1758 = vld [vmem:[%s6 + $0xe0] sm:$0xff]
      %v1759 = vld [vmem:[%s6 + $0xe8] sm:$0xff]
      %v1760 = vld [vmem:[%s6 + $0xf0] sm:$0xff]
      %v1761 = vld [vmem:[%s6 + $0xf8] sm:$0xff]
      %v1762 = vld [vmem:[%s7] sm:$0x3]
      %v1764 = vlaneseq
      %v1765 = vshrl.u32 %v1764, 7
      %v1766 = vsub.s32 0, %v1765
      %v1767 = vrot.slane %v1762, %v1766
      %v1768 = vlaneseq
      %v1769 = vshrl.u32 %v1768, 7
      %v1770 = vsub.s32 1, %v1769
      %v1771 = vrot.slane %v1762, %v1770
      %v1806 = vunpack.c.l.b16 %v1730
      %v1807 = vunpack.c.h.b16 %v1730
      %v1808 = vunpack.c.l.b16 %v1731
      %v1809 = vunpack.c.h.b16 %v1731
      %v1810 = vunpack.c.l.b16 %v1732
      %v1811 = vunpack.c.h.b16 %v1732
      %v1812 = vunpack.c.l.b16 %v1733
      %v1813 = vunpack.c.h.b16 %v1733
      %v1814 = vunpack.c.l.b16 %v1734
      %v1815 = vunpack.c.h.b16 %v1734
      %v1816 = vunpack.c.l.b16 %v1735
      %v1817 = vunpack.c.h.b16 %v1735
      %v1818 = vunpack.c.l.b16 %v1736
      %v1819 = vunpack.c.h.b16 %v1736
      %v1820 = vunpack.c.l.b16 %v1737
      %v1821 = vunpack.c.h.b16 %v1737
      %v1822 = vunpack.c.l.b16 %v1738
      %v1823 = vunpack.c.h.b16 %v1738
      %v1824 = vunpack.c.l.b16 %v1739
      %v1825 = vunpack.c.h.b16 %v1739
      %v1826 = vunpack.c.l.b16 %v1740
      %v1827 = vunpack.c.h.b16 %v1740
      %v1828 = vunpack.c.l.b16 %v1741
      %v1829 = vunpack.c.h.b16 %v1741
      %v1830 = vunpack.c.l.b16 %v1742
      %v1831 = vunpack.c.h.b16 %v1742
      %v1832 = vunpack.c.l.b16 %v1743
      %v1833 = vunpack.c.h.b16 %v1743
      %v1834 = vunpack.c.l.b16 %v1744
      %v1835 = vunpack.c.h.b16 %v1744
      %v1836 = vunpack.c.l.b16 %v1745
      %v1837 = vunpack.c.h.b16 %v1745
      %v1838 = vunpack.c.l.b16 %v1746
      %v1839 = vunpack.c.h.b16 %v1746
      %v1840 = vunpack.c.l.b16 %v1747
      %v1841 = vunpack.c.h.b16 %v1747
      %v1842 = vunpack.c.l.b16 %v1748
      %v1843 = vunpack.c.h.b16 %v1748
      %v1844 = vunpack.c.l.b16 %v1749
      %v1845 = vunpack.c.h.b16 %v1749
      %v1846 = vunpack.c.l.b16 %v1750
      %v1847 = vunpack.c.h.b16 %v1750
      %v1848 = vunpack.c.l.b16 %v1751
      %v1849 = vunpack.c.h.b16 %v1751
      %v1850 = vunpack.c.l.b16 %v1752
      %v1851 = vunpack.c.h.b16 %v1752
      %v1852 = vunpack.c.l.b16 %v1753
      %v1853 = vunpack.c.h.b16 %v1753
      %v1854 = vunpack.c.l.b16 %v1754
      %v1855 = vunpack.c.h.b16 %v1754
      %v1856 = vunpack.c.l.b16 %v1755
      %v1857 = vunpack.c.h.b16 %v1755
      %v1858 = vunpack.c.l.b16 %v1756
      %v1859 = vunpack.c.h.b16 %v1756
      %v1860 = vunpack.c.l.b16 %v1757
      %v1861 = vunpack.c.h.b16 %v1757
      %v1862 = vunpack.c.l.b16 %v1758
      %v1863 = vunpack.c.h.b16 %v1758
      %v1864 = vunpack.c.l.b16 %v1759
      %v1865 = vunpack.c.h.b16 %v1759
      %v1866 = vunpack.c.l.b16 %v1760
      %v1867 = vunpack.c.h.b16 %v1760
      %v1868 = vunpack.c.l.b16 %v1761
      %v1869 = vunpack.c.h.b16 %v1761
      %v1870 = vpack.c.b16 %v1808, %v1806
      %v1871 = vpack.c.b16 %v1809, %v1807
      %v1872 = vpack.c.b16 %v1812, %v1810
      %v1873 = vpack.c.b16 %v1813, %v1811
      %v1874 = vpack.c.b16 %v1816, %v1814
      %v1875 = vpack.c.b16 %v1817, %v1815
      %v1876 = vpack.c.b16 %v1820, %v1818
      %v1877 = vpack.c.b16 %v1821, %v1819
      %v1878 = vpack.c.b16 %v1824, %v1822
      %v1879 = vpack.c.b16 %v1825, %v1823
      %v1880 = vpack.c.b16 %v1828, %v1826
      %v1881 = vpack.c.b16 %v1829, %v1827
      %v1882 = vpack.c.b16 %v1832, %v1830
      %v1883 = vpack.c.b16 %v1833, %v1831
      %v1884 = vpack.c.b16 %v1836, %v1834
      %v1885 = vpack.c.b16 %v1837, %v1835
      %v1886 = vpack.c.b16 %v1840, %v1838
      %v1887 = vpack.c.b16 %v1841, %v1839
      %v1888 = vpack.c.b16 %v1844, %v1842
      %v1889 = vpack.c.b16 %v1845, %v1843
      %v1890 = vpack.c.b16 %v1848, %v1846
      %v1891 = vpack.c.b16 %v1849, %v1847
      %v1892 = vpack.c.b16 %v1852, %v1850
      %v1893 = vpack.c.b16 %v1853, %v1851
      %v1894 = vpack.c.b16 %v1856, %v1854
      %v1895 = vpack.c.b16 %v1857, %v1855
      %v1896 = vpack.c.b16 %v1860, %v1858
      %v1897 = vpack.c.b16 %v1861, %v1859
      %v1898 = vpack.c.b16 %v1864, %v1862
      %v1899 = vpack.c.b16 %v1865, %v1863
      %v1900 = vpack.c.b16 %v1868, %v1866
      %v1901 = vpack.c.b16 %v1869, %v1867
      %1934 = vmatprep.subr.bf16.mxu0 %v1871
      %1935 = vmatpush1.bf16.msra.mxu0 %v1870
      %1936 = vmatprep.subr.bf16.mxu0 %v1873
      %1937 = vmatpush1.bf16.msra.mxu0 %v1872
      %1938 = vmatprep.subr.bf16.mxu0 %v1875
      %1939 = vmatpush1.bf16.msra.mxu0 %v1874
      %1940 = vmatprep.subr.bf16.mxu0 %v1877
      %1941 = vmatpush1.bf16.msra.mxu0 %v1876
      %1942 = vmatprep.subr.bf16.mxu0 %v1879
      %1943 = vmatpush1.bf16.msra.mxu0 %v1878
      %1944 = vmatprep.subr.bf16.mxu0 %v1881
      %1945 = vmatpush1.bf16.msra.mxu0 %v1880
      %1946 = vmatprep.subr.bf16.mxu0 %v1883
      %1947 = vmatpush1.bf16.msra.mxu0 %v1882
      %1948 = vmatprep.subr.bf16.mxu0 %v1885
      %1949 = vmatpush1.bf16.msra.mxu0 %v1884
      %1950 = vmatprep.subr.bf16.mxu0 %v1887
      %1951 = vmatpush1.bf16.msra.mxu0 %v1886
      %1952 = vmatprep.subr.bf16.mxu0 %v1889
      %1953 = vmatpush1.bf16.msra.mxu0 %v1888
      %1954 = vmatprep.subr.bf16.mxu0 %v1891
      %1955 = vmatpush1.bf16.msra.mxu0 %v1890
      %1956 = vmatprep.subr.bf16.mxu0 %v1893
      %1957 = vmatpush1.bf16.msra.mxu0 %v1892
      %1958 = vmatprep.subr.bf16.mxu0 %v1895
      %1959 = vmatpush1.bf16.msra.mxu0 %v1894
      %1960 = vmatprep.subr.bf16.mxu0 %v1897
      %1961 = vmatpush1.bf16.msra.mxu0 %v1896
      %1962 = vmatprep.subr.bf16.mxu0 %v1899
      %1963 = vmatpush1.bf16.msra.mxu0 %v1898
      %1964 = vmatprep.subr.bf16.mxu0 %v1901
      %1965 = vmatpush1.bf16.msra.mxu0 %v1900
      %1966 = vmatprep.mubr.bf16.mxu0 %v1723
      %1967 = vmatmul.mubr.bf16.gmra.mrb[0].mxu0 %v1722
      %v1968 = vpop.f32.mrb[0].mxu0
      %v1969 = vadd.f32 %v1767, %v1968
      %v1970 = vpop.f32.mrb[0].mxu0
      %v1971 = vadd.f32 %v1771, %v1970
      %v1972 = vpop.f32.mrb[0].mxu0
      %v1973 = vadd.f32 %v1767, %v1972
      %v1974 = vpop.f32.mrb[0].mxu0
      %v1975 = vadd.f32 %v1771, %v1974
      %1976 = vmatprep.mubr.bf16.mxu0 %v1725
      %1977 = vmatmul.mubr.bf16.gmra.mrb[0].mxu0 %v1724
      %v1978 = vpop.f32.mrb[0].mxu0
      %v1979 = vadd.f32 %v1767, %v1978
      %v1980 = vpop.f32.mrb[0].mxu0
      %v1981 = vadd.f32 %v1771, %v1980
      %v1982 = vpop.f32.mrb[0].mxu0
      %v1983 = vadd.f32 %v1767, %v1982
      %v1984 = vpop.f32.mrb[0].mxu0
      %v1985 = vadd.f32 %v1771, %v1984
      %1986 = vmatprep.mubr.bf16.mxu0 %v1727
      %1987 = vmatmul.mubr.bf16.gmra.mrb[0].mxu0 %v1726
      %v1988 = vpop.f32.mrb[0].mxu0
      %v1989 = vadd.f32 %v1767, %v1988
      %v1990 = vpop.f32.mrb[0].mxu0
      %v1991 = vadd.f32 %v1771, %v1990
      %v1992 = vpop.f32.mrb[0].mxu0
      %v1993 = vadd.f32 %v1767, %v1992
      %v1994 = vpop.f32.mrb[0].mxu0
      %v1995 = vadd.f32 %v1771, %v1994
      %1996 = vmatprep.mubr.bf16.mxu0 %v1729
      %1997 = vmatmul.mubr.bf16.gmra.mrb[0].mxu0 %v1728
      %v1998 = vpop.f32.mrb[0].mxu0
      %v1999 = vadd.f32 %v1767, %v1998
      %v2000 = vpop.f32.mrb[0].mxu0
      %v2001 = vadd.f32 %v1771, %v2000
      %v2002 = vpop.f32.mrb[0].mxu0
      %v2003 = vadd.f32 %v1767, %v2002
      %v2004 = vpop.f32.mrb[0].mxu0
      %v2005 = vadd.f32 %v1771, %v2004
      %2006 = vdwg.mxu0
      %v2007 = vmax.f32 %v1969, 0.0
      %v2008 = vmax.f32 %v1971, 0.0
      %v2009 = vmax.f32 %v1973, 0.0
      %v2010 = vmax.f32 %v1975, 0.0
      %v2011 = vmax.f32 %v1979, 0.0
      %v2012 = vmax.f32 %v1981, 0.0
      %v2013 = vmax.f32 %v1983, 0.0
      %v2014 = vmax.f32 %v1985, 0.0
      %v2015 = vmax.f32 %v1989, 0.0
      %v2016 = vmax.f32 %v1991, 0.0
      %v2017 = vmax.f32 %v1993, 0.0
      %v2018 = vmax.f32 %v1995, 0.0
      %v2019 = vmax.f32 %v1999, 0.0
      %v2020 = vmax.f32 %v2001, 0.0
      %v2021 = vmax.f32 %v2003, 0.0
      %v2022 = vmax.f32 %v2005, 0.0
      %v2023 = vpack.c.bf16 %v2009, %v2007
      %v2024 = vpack.c.bf16 %v2010, %v2008
      %v2025 = vpack.c.bf16 %v2013, %v2011
      %v2026 = vpack.c.bf16 %v2014, %v2012
      %v2027 = vpack.c.bf16 %v2017, %v2015
      %v2028 = vpack.c.bf16 %v2018, %v2016
      %v2029 = vpack.c.bf16 %v2021, %v2019
      %v2030 = vpack.c.bf16 %v2022, %v2020
      %v2031 = vld [vmem:[%s8] sm:$0xff]
      %v2032 = vld [vmem:[%s8 + $0x8] sm:$0xff]
      %v2033 = vld [vmem:[%s8 + $0x10] sm:$0xff]
      %v2034 = vld [vmem:[%s8 + $0x18] sm:$0xff]
      %v2035 = vld [vmem:[%s8 + $0x20] sm:$0xff]
      %v2036 = vld [vmem:[%s8 + $0x28] sm:$0xff]
      %v2037 = vld [vmem:[%s8 + $0x30] sm:$0xff]
      %v2038 = vld [vmem:[%s8 + $0x38] sm:$0xff]
      %v2039 = vld [vmem:[%s8 + $0x40] sm:$0xff]
      %v2040 = vld [vmem:[%s8 + $0x48] sm:$0xff]
      %v2041 = vld [vmem:[%s8 + $0x50] sm:$0xff]
      %v2042 = vld [vmem:[%s8 + $0x58] sm:$0xff]
      %v2043 = vld [vmem:[%s8 + $0x60] sm:$0xff]
      %v2044 = vld [vmem:[%s8 + $0x68] sm:$0xff]
      %v2045 = vld [vmem:[%s8 + $0x70] sm:$0xff]
      %v2046 = vld [vmem:[%s8 + $0x78] sm:$0xff]
      %v2047 = vld [vmem:[%s8 + $0x80] sm:$0xff]
      %v2048 = vld [vmem:[%s8 + $0x88] sm:$0xff]
      %v2049 = vld [vmem:[%s8 + $0x90] sm:$0xff]
      %v2050 = vld [vmem:[%s8 + $0x98] sm:$0xff]
      %v2051 = vld [vmem:[%s8 + $0xa0] sm:$0xff]
      %v2052 = vld [vmem:[%s8 + $0xa8] sm:$0xff]
      %v2053 = vld [vmem:[%s8 + $0xb0] sm:$0xff]
      %v2054 = vld [vmem:[%s8 + $0xb8] sm:$0xff]
      %v2055 = vld [vmem:[%s8 + $0xc0] sm:$0xff]
      %v2056 = vld [vmem:[%s8 + $0xc8] sm:$0xff]
      %v2057 = vld [vmem:[%s8 + $0xd0] sm:$0xff]
      %v2058 = vld [vmem:[%s8 + $0xd8] sm:$0xff]
      %v2059 = vld [vmem:[%s8 + $0xe0] sm:$0xff]
      %v2060 = vld [vmem:[%s8 + $0xe8] sm:$0xff]
      %v2061 = vld [vmem:[%s8 + $0xf0] sm:$0xff]
      %v2062 = vld [vmem:[%s8 + $0xf8] sm:$0xff]
      %v2063 = vld [vmem:[%s9] sm:$0x3]
      %v2065 = vlaneseq
      %v2066 = vshrl.u32 %v2065, 7
      %v2067 = vsub.s32 0, %v2066
      %v2068 = vrot.slane %v2063, %v2067
      %v2069 = vlaneseq
      %v2070 = vshrl.u32 %v2069, 7
      %v2071 = vsub.s32 1, %v2070
      %v2072 = vrot.slane %v2063, %v2071
      %v2107 = vunpack.c.l.b16 %v2031
      %v2108 = vunpack.c.h.b16 %v2031
      %v2109 = vunpack.c.l.b16 %v2032
      %v2110 = vunpack.c.h.b16 %v2032
      %v2111 = vunpack.c.l.b16 %v2033
      %v2112 = vunpack.c.h.b16 %v2033
      %v2113 = vunpack.c.l.b16 %v2034
      %v2114 = vunpack.c.h.b16 %v2034
      %v2115 = vunpack.c.l.b16 %v2035
      %v2116 = vunpack.c.h.b16 %v2035
      %v2117 = vunpack.c.l.b16 %v2036
      %v2118 = vunpack.c.h.b16 %v2036
      %v2119 = vunpack.c.l.b16 %v2037
      %v2120 = vunpack.c.h.b16 %v2037
      %v2121 = vunpack.c.l.b16 %v2038
      %v2122 = vunpack.c.h.b16 %v2038
      %v2123 = vunpack.c.l.b16 %v2039
      %v2124 = vunpack.c.h.b16 %v2039
      %v2125 = vunpack.c.l.b16 %v2040
      %v2126 = vunpack.c.h.b16 %v2040
      %v2127 = vunpack.c.l.b16 %v2041
      %v2128 = vunpack.c.h.b16 %v2041
      %v2129 = vunpack.c.l.b16 %v2042
      %v2130 = vunpack.c.h.b16 %v2042
      %v2131 = vunpack.c.l.b16 %v2043
      %v2132 = vunpack.c.h.b16 %v2043
      %v2133 = vunpack.c.l.b16 %v2044
      %v2134 = vunpack.c.h.b16 %v2044
      %v2135 = vunpack.c.l.b16 %v2045
      %v2136 = vunpack.c.h.b16 %v2045
      %v2137 = vunpack.c.l.b16 %v2046
      %v2138 = vunpack.c.h.b16 %v2046
      %v2139 = vunpack.c.l.b16 %v2047
      %v2140 = vunpack.c.h.b16 %v2047
      %v2141 = vunpack.c.l.b16 %v2048
      %v2142 = vunpack.c.h.b16 %v2048
      %v2143 = vunpack.c.l.b16 %v2049
      %v2144 = vunpack.c.h.b16 %v2049
      %v2145 = vunpack.c.l.b16 %v2050
      %v2146 = vunpack.c.h.b16 %v2050
      %v2147 = vunpack.c.l.b16 %v2051
      %v2148 = vunpack.c.h.b16 %v2051
      %v2149 = vunpack.c.l.b16 %v2052
      %v2150 = vunpack.c.h.b16 %v2052
      %v2151 = vunpack.c.l.b16 %v2053
      %v2152 = vunpack.c.h.b16 %v2053
      %v2153 = vunpack.c.l.b16 %v2054
      %v2154 = vunpack.c.h.b16 %v2054
      %v2155 = vunpack.c.l.b16 %v2055
      %v2156 = vunpack.c.h.b16 %v2055
      %v2157 = vunpack.c.l.b16 %v2056
      %v2158 = vunpack.c.h.b16 %v2056
      %v2159 = vunpack.c.l.b16 %v2057
      %v2160 = vunpack.c.h.b16 %v2057
      %v2161 = vunpack.c.l.b16 %v2058
      %v2162 = vunpack.c.h.b16 %v2058
      %v2163 = vunpack.c.l.b16 %v2059
      %v2164 = vunpack.c.h.b16 %v2059
      %v2165 = vunpack.c.l.b16 %v2060
      %v2166 = vunpack.c.h.b16 %v2060
      %v2167 = vunpack.c.l.b16 %v2061
      %v2168 = vunpack.c.h.b16 %v2061
      %v2169 = vunpack.c.l.b16 %v2062
      %v2170 = vunpack.c.h.b16 %v2062
      %v2171 = vpack.c.b16 %v2109, %v2107
      %v2172 = vpack.c.b16 %v2110, %v2108
      %v2173 = vpack.c.b16 %v2113, %v2111
      %v2174 = vpack.c.b16 %v2114, %v2112
      %v2175 = vpack.c.b16 %v2117, %v2115
      %v2176 = vpack.c.b16 %v2118, %v2116
      %v2177 = vpack.c.b16 %v2121, %v2119
      %v2178 = vpack.c.b16 %v2122, %v2120
      %v2179 = vpack.c.b16 %v2125, %v2123
      %v2180 = vpack.c.b16 %v2126, %v2124
      %v2181 = vpack.c.b16 %v2129, %v2127
      %v2182 = vpack.c.b16 %v2130, %v2128
      %v2183 = vpack.c.b16 %v2133, %v2131
      %v2184 = vpack.c.b16 %v2134, %v2132
      %v2185 = vpack.c.b16 %v2137, %v2135
      %v2186 = vpack.c.b16 %v2138, %v2136
      %v2187 = vpack.c.b16 %v2141, %v2139
      %v2188 = vpack.c.b16 %v2142, %v2140
      %v2189 = vpack.c.b16 %v2145, %v2143
      %v2190 = vpack.c.b16 %v2146, %v2144
      %v2191 = vpack.c.b16 %v2149, %v2147
      %v2192 = vpack.c.b16 %v2150, %v2148
      %v2193 = vpack.c.b16 %v2153, %v2151
      %v2194 = vpack.c.b16 %v2154, %v2152
      %v2195 = vpack.c.b16 %v2157, %v2155
      %v2196 = vpack.c.b16 %v2158, %v2156
      %v2197 = vpack.c.b16 %v2161, %v2159
      %v2198 = vpack.c.b16 %v2162, %v2160
      %v2199 = vpack.c.b16 %v2165, %v2163
      %v2200 = vpack.c.b16 %v2166, %v2164
      %v2201 = vpack.c.b16 %v2169, %v2167
      %v2202 = vpack.c.b16 %v2170, %v2168
      %2235 = vmatprep.subr.bf16.mxu0 %v2172
      %2236 = vmatpush1.bf16.msra.mxu0 %v2171
      %2237 = vmatprep.subr.bf16.mxu0 %v2174
      %2238 = vmatpush1.bf16.msra.mxu0 %v2173
      %2239 = vmatprep.subr.bf16.mxu0 %v2176
      %2240 = vmatpush1.bf16.msra.mxu0 %v2175
      %2241 = vmatprep.subr.bf16.mxu0 %v2178
      %2242 = vmatpush1.bf16.msra.mxu0 %v2177
      %2243 = vmatprep.subr.bf16.mxu0 %v2180
      %2244 = vmatpush1.bf16.msra.mxu0 %v2179
      %2245 = vmatprep.subr.bf16.mxu0 %v2182
      %2246 = vmatpush1.bf16.msra.mxu0 %v2181
      %2247 = vmatprep.subr.bf16.mxu0 %v2184
      %2248 = vmatpush1.bf16.msra.mxu0 %v2183
      %2249 = vmatprep.subr.bf16.mxu0 %v2186
      %2250 = vmatpush1.bf16.msra.mxu0 %v2185
      %2251 = vmatprep.subr.bf16.mxu0 %v2188
      %2252 = vmatpush1.bf16.msra.mxu0 %v2187
      %2253 = vmatprep.subr.bf16.mxu0 %v2190
      %2254 = vmatpush1.bf16.msra.mxu0 %v2189
      %2255 = vmatprep.subr.bf16.mxu0 %v2192
      %2256 = vmatpush1.bf16.msra.mxu0 %v2191
      %2257 = vmatprep.subr.bf16.mxu0 %v2194
      %2258 = vmatpush1.bf16.msra.mxu0 %v2193
      %2259 = vmatprep.subr.bf16.mxu0 %v2196
      %2260 = vmatpush1.bf16.msra.mxu0 %v2195
      %2261 = vmatprep.subr.bf16.mxu0 %v2198
      %2262 = vmatpush1.bf16.msra.mxu0 %v2197
      %2263 = vmatprep.subr.bf16.mxu0 %v2200
      %2264 = vmatpush1.bf16.msra.mxu0 %v2199
      %2265 = vmatprep.subr.bf16.mxu0 %v2202
      %2266 = vmatpush1.bf16.msra.mxu0 %v2201
      %2267 = vmatprep.mubr.bf16.mxu0 %v2024
      %2268 = vmatmul.mubr.bf16.gmra.mrb[0].mxu0 %v2023
      %v2269 = vpop.f32.mrb[0].mxu0
      %v2270 = vadd.f32 %v2068, %v2269
      %v2271 = vpop.f32.mrb[0].mxu0
      %v2272 = vadd.f32 %v2072, %v2271
      %v2273 = vpop.f32.mrb[0].mxu0
      %v2274 = vadd.f32 %v2068, %v2273
      %v2275 = vpop.f32.mrb[0].mxu0
      %v2276 = vadd.f32 %v2072, %v2275
      %2277 = vmatprep.mubr.bf16.mxu0 %v2026
      %2278 = vmatmul.mubr.bf16.gmra.mrb[0].mxu0 %v2025
      %v2279 = vpop.f32.mrb[0].mxu0
      %v2280 = vadd.f32 %v2068, %v2279
      %v2281 = vpop.f32.mrb[0].mxu0
      %v2282 = vadd.f32 %v2072, %v2281
      %v2283 = vpop.f32.mrb[0].mxu0
      %v2284 = vadd.f32 %v2068, %v2283
      %v2285 = vpop.f32.mrb[0].mxu0
      %v2286 = vadd.f32 %v2072, %v2285
      %2287 = vmatprep.mubr.bf16.mxu0 %v2028
      %2288 = vmatmul.mubr.bf16.gmra.mrb[0].mxu0 %v2027
      %v2289 = vpop.f32.mrb[0].mxu0
      %v2290 = vadd.f32 %v2068, %v2289
      %v2291 = vpop.f32.mrb[0].mxu0
      %v2292 = vadd.f32 %v2072, %v2291
      %v2293 = vpop.f32.mrb[0].mxu0
      %v2294 = vadd.f32 %v2068, %v2293
      %v2295 = vpop.f32.mrb[0].mxu0
      %v2296 = vadd.f32 %v2072, %v2295
      %2297 = vmatprep.mubr.bf16.mxu0 %v2030
      %2298 = vmatmul.mubr.bf16.gmra.mrb[0].mxu0 %v2029
      %v2299 = vpop.f32.mrb[0].mxu0
      %v2300 = vadd.f32 %v2068, %v2299
      %v2301 = vpop.f32.mrb[0].mxu0
      %v2302 = vadd.f32 %v2072, %v2301
      %v2303 = vpop.f32.mrb[0].mxu0
      %v2304 = vadd.f32 %v2068, %v2303
      %v2305 = vpop.f32.mrb[0].mxu0
      %v2306 = vadd.f32 %v2072, %v2305
      %2307 = vdwg.mxu0
      %v2308 = vmax.f32 %v2270, 0.0
      %v2309 = vmax.f32 %v2272, 0.0
      %v2310 = vmax.f32 %v2274, 0.0
      %v2311 = vmax.f32 %v2276, 0.0
      %v2312 = vmax.f32 %v2280, 0.0
      %v2313 = vmax.f32 %v2282, 0.0
      %v2314 = vmax.f32 %v2284, 0.0
      %v2315 = vmax.f32 %v2286, 0.0
      %v2316 = vmax.f32 %v2290, 0.0
      %v2317 = vmax.f32 %v2292, 0.0
      %v2318 = vmax.f32 %v2294, 0.0
      %v2319 = vmax.f32 %v2296, 0.0
      %v2320 = vmax.f32 %v2300, 0.0
      %v2321 = vmax.f32 %v2302, 0.0
      %v2322 = vmax.f32 %v2304, 0.0
      %v2323 = vmax.f32 %v2306, 0.0
      %v2324 = vpack.c.bf16 %v2310, %v2308
      %v2325 = vpack.c.bf16 %v2311, %v2309
      %v2326 = vpack.c.bf16 %v2314, %v2312
      %v2327 = vpack.c.bf16 %v2315, %v2313
      %v2328 = vpack.c.bf16 %v2318, %v2316
      %v2329 = vpack.c.bf16 %v2319, %v2317
      %v2330 = vpack.c.bf16 %v2322, %v2320
      %v2331 = vpack.c.bf16 %v2323, %v2321
      %v2332 = vld [vmem:[%s10] sm:$0xff]
      %v2333 = vld [vmem:[%s10 + $0x8] sm:$0xff]
      %v2334 = vld [vmem:[%s10 + $0x10] sm:$0xff]
      %v2335 = vld [vmem:[%s10 + $0x18] sm:$0xff]
      %v2336 = vld [vmem:[%s10 + $0x20] sm:$0xff]
      %v2337 = vld [vmem:[%s10 + $0x28] sm:$0xff]
      %v2338 = vld [vmem:[%s10 + $0x30] sm:$0xff]
      %v2339 = vld [vmem:[%s10 + $0x38] sm:$0xff]
      %v2340 = vld [vmem:[%s10 + $0x40] sm:$0xff]
      %v2341 = vld [vmem:[%s10 + $0x48] sm:$0xff]
      %v2342 = vld [vmem:[%s10 + $0x50] sm:$0xff]
      %v2343 = vld [vmem:[%s10 + $0x58] sm:$0xff]
      %v2344 = vld [vmem:[%s10 + $0x60] sm:$0xff]
      %v2345 = vld [vmem:[%s10 + $0x68] sm:$0xff]
      %v2346 = vld [vmem:[%s10 + $0x70] sm:$0xff]
      %v2347 = vld [vmem:[%s10 + $0x78] sm:$0xff]
      %v2348 = vld [vmem:[%s10 + $0x80] sm:$0xff]
      %v2349 = vld [vmem:[%s10 + $0x88] sm:$0xff]
      %v2350 = vld [vmem:[%s10 + $0x90] sm:$0xff]
      %v2351 = vld [vmem:[%s10 + $0x98] sm:$0xff]
      %v2352 = vld [vmem:[%s10 + $0xa0] sm:$0xff]
      %v2353 = vld [vmem:[%s10 + $0xa8] sm:$0xff]
      %v2354 = vld [vmem:[%s10 + $0xb0] sm:$0xff]
      %v2355 = vld [vmem:[%s10 + $0xb8] sm:$0xff]
      %v2356 = vld [vmem:[%s10 + $0xc0] sm:$0xff]
      %v2357 = vld [vmem:[%s10 + $0xc8] sm:$0xff]
      %v2358 = vld [vmem:[%s10 + $0xd0] sm:$0xff]
      %v2359 = vld [vmem:[%s10 + $0xd8] sm:$0xff]
      %v2360 = vld [vmem:[%s10 + $0xe0] sm:$0xff]
      %v2361 = vld [vmem:[%s10 + $0xe8] sm:$0xff]
      %v2362 = vld [vmem:[%s10 + $0xf0] sm:$0xff]
      %v2363 = vld [vmem:[%s10 + $0xf8] sm:$0xff]
      %v2364 = vld [vmem:[%s11] sm:$0x3]
      %v2366 = vlaneseq
      %v2367 = vshrl.u32 %v2366, 7
      %v2368 = vsub.s32 0, %v2367
      %v2369 = vrot.slane %v2364, %v2368
      %v2370 = vlaneseq
      %v2371 = vshrl.u32 %v2370, 7
      %v2372 = vsub.s32 1, %v2371
      %v2373 = vrot.slane %v2364, %v2372
      %v2408 = vunpack.c.l.b16 %v2332
      %v2409 = vunpack.c.h.b16 %v2332
      %v2410 = vunpack.c.l.b16 %v2333
      %v2411 = vunpack.c.h.b16 %v2333
      %v2412 = vunpack.c.l.b16 %v2334
      %v2413 = vunpack.c.h.b16 %v2334
      %v2414 = vunpack.c.l.b16 %v2335
      %v2415 = vunpack.c.h.b16 %v2335
      %v2416 = vunpack.c.l.b16 %v2336
      %v2417 = vunpack.c.h.b16 %v2336
      %v2418 = vunpack.c.l.b16 %v2337
      %v2419 = vunpack.c.h.b16 %v2337
      %v2420 = vunpack.c.l.b16 %v2338
      %v2421 = vunpack.c.h.b16 %v2338
      %v2422 = vunpack.c.l.b16 %v2339
      %v2423 = vunpack.c.h.b16 %v2339
      %v2424 = vunpack.c.l.b16 %v2340
      %v2425 = vunpack.c.h.b16 %v2340
      %v2426 = vunpack.c.l.b16 %v2341
      %v2427 = vunpack.c.h.b16 %v2341
      %v2428 = vunpack.c.l.b16 %v2342
      %v2429 = vunpack.c.h.b16 %v2342
      %v2430 = vunpack.c.l.b16 %v2343
      %v2431 = vunpack.c.h.b16 %v2343
      %v2432 = vunpack.c.l.b16 %v2344
      %v2433 = vunpack.c.h.b16 %v2344
      %v2434 = vunpack.c.l.b16 %v2345
      %v2435 = vunpack.c.h.b16 %v2345
      %v2436 = vunpack.c.l.b16 %v2346
      %v2437 = vunpack.c.h.b16 %v2346
      %v2438 = vunpack.c.l.b16 %v2347
      %v2439 = vunpack.c.h.b16 %v2347
      %v2440 = vunpack.c.l.b16 %v2348
      %v2441 = vunpack.c.h.b16 %v2348
      %v2442 = vunpack.c.l.b16 %v2349
      %v2443 = vunpack.c.h.b16 %v2349
      %v2444 = vunpack.c.l.b16 %v2350
      %v2445 = vunpack.c.h.b16 %v2350
      %v2446 = vunpack.c.l.b16 %v2351
      %v2447 = vunpack.c.h.b16 %v2351
      %v2448 = vunpack.c.l.b16 %v2352
      %v2449 = vunpack.c.h.b16 %v2352
      %v2450 = vunpack.c.l.b16 %v2353
      %v2451 = vunpack.c.h.b16 %v2353
      %v2452 = vunpack.c.l.b16 %v2354
      %v2453 = vunpack.c.h.b16 %v2354
      %v2454 = vunpack.c.l.b16 %v2355
      %v2455 = vunpack.c.h.b16 %v2355
      %v2456 = vunpack.c.l.b16 %v2356
      %v2457 = vunpack.c.h.b16 %v2356
      %v2458 = vunpack.c.l.b16 %v2357
      %v2459 = vunpack.c.h.b16 %v2357
      %v2460 = vunpack.c.l.b16 %v2358
      %v2461 = vunpack.c.h.b16 %v2358
      %v2462 = vunpack.c.l.b16 %v2359
      %v2463 = vunpack.c.h.b16 %v2359
      %v2464 = vunpack.c.l.b16 %v2360
      %v2465 = vunpack.c.h.b16 %v2360
      %v2466 = vunpack.c.l.b16 %v2361
      %v2467 = vunpack.c.h.b16 %v2361
      %v2468 = vunpack.c.l.b16 %v2362
      %v2469 = vunpack.c.h.b16 %v2362
      %v2470 = vunpack.c.l.b16 %v2363
      %v2471 = vunpack.c.h.b16 %v2363
      %v2472 = vpack.c.b16 %v2410, %v2408
      %v2473 = vpack.c.b16 %v2411, %v2409
      %v2474 = vpack.c.b16 %v2414, %v2412
      %v2475 = vpack.c.b16 %v2415, %v2413
      %v2476 = vpack.c.b16 %v2418, %v2416
      %v2477 = vpack.c.b16 %v2419, %v2417
      %v2478 = vpack.c.b16 %v2422, %v2420
      %v2479 = vpack.c.b16 %v2423, %v2421
      %v2480 = vpack.c.b16 %v2426, %v2424
      %v2481 = vpack.c.b16 %v2427, %v2425
      %v2482 = vpack.c.b16 %v2430, %v2428
      %v2483 = vpack.c.b16 %v2431, %v2429
      %v2484 = vpack.c.b16 %v2434, %v2432
      %v2485 = vpack.c.b16 %v2435, %v2433
      %v2486 = vpack.c.b16 %v2438, %v2436
      %v2487 = vpack.c.b16 %v2439, %v2437
      %v2488 = vpack.c.b16 %v2442, %v2440
      %v2489 = vpack.c.b16 %v2443, %v2441
      %v2490 = vpack.c.b16 %v2446, %v2444
      %v2491 = vpack.c.b16 %v2447, %v2445
      %v2492 = vpack.c.b16 %v2450, %v2448
      %v2493 = vpack.c.b16 %v2451, %v2449
      %v2494 = vpack.c.b16 %v2454, %v2452
      %v2495 = vpack.c.b16 %v2455, %v2453
      %v2496 = vpack.c.b16 %v2458, %v2456
      %v2497 = vpack.c.b16 %v2459, %v2457
      %v2498 = vpack.c.b16 %v2462, %v2460
      %v2499 = vpack.c.b16 %v2463, %v2461
      %v2500 = vpack.c.b16 %v2466, %v2464
      %v2501 = vpack.c.b16 %v2467, %v2465
      %v2502 = vpack.c.b16 %v2470, %v2468
      %v2503 = vpack.c.b16 %v2471, %v2469
      %2536 = vmatprep.subr.bf16.mxu0 %v2473
      %2537 = vmatpush1.bf16.msra.mxu0 %v2472
      %2538 = vmatprep.subr.bf16.mxu0 %v2475
      %2539 = vmatpush1.bf16.msra.mxu0 %v2474
      %2540 = vmatprep.subr.bf16.mxu0 %v2477
      %2541 = vmatpush1.bf16.msra.mxu0 %v2476
      %2542 = vmatprep.subr.bf16.mxu0 %v2479
      %2543 = vmatpush1.bf16.msra.mxu0 %v2478
      %2544 = vmatprep.subr.bf16.mxu0 %v2481
      %2545 = vmatpush1.bf16.msra.mxu0 %v2480
      %2546 = vmatprep.subr.bf16.mxu0 %v2483
      %2547 = vmatpush1.bf16.msra.mxu0 %v2482
      %2548 = vmatprep.subr.bf16.mxu0 %v2485
      %2549 = vmatpush1.bf16.msra.mxu0 %v2484
      %2550 = vmatprep.subr.bf16.mxu0 %v2487
      %2551 = vmatpush1.bf16.msra.mxu0 %v2486
      %2552 = vmatprep.subr.bf16.mxu0 %v2489
      %2553 = vmatpush1.bf16.msra.mxu0 %v2488
      %2554 = vmatprep.subr.bf16.mxu0 %v2491
      %2555 = vmatpush1.bf16.msra.mxu0 %v2490
      %2556 = vmatprep.subr.bf16.mxu0 %v2493
      %2557 = vmatpush1.bf16.msra.mxu0 %v2492
      %2558 = vmatprep.subr.bf16.mxu0 %v2495
      %2559 = vmatpush1.bf16.msra.mxu0 %v2494
      %2560 = vmatprep.subr.bf16.mxu0 %v2497
      %2561 = vmatpush1.bf16.msra.mxu0 %v2496
      %2562 = vmatprep.subr.bf16.mxu0 %v2499
      %2563 = vmatpush1.bf16.msra.mxu0 %v2498
      %2564 = vmatprep.subr.bf16.mxu0 %v2501
      %2565 = vmatpush1.bf16.msra.mxu0 %v2500
      %2566 = vmatprep.subr.bf16.mxu0 %v2503
      %2567 = vmatpush1.bf16.msra.mxu0 %v2502
      %2568 = vmatprep.mubr.bf16.mxu0 %v2325
      %2569 = vmatmul.mubr.bf16.gmra.mrb[0].mxu0 %v2324
      %v2570 = vpop.f32.mrb[0].mxu0
      %v2571 = vadd.f32 %v2369, %v2570
      %v2572 = vpop.f32.mrb[0].mxu0
      %v2573 = vadd.f32 %v2373, %v2572
      %v2574 = vpop.f32.mrb[0].mxu0
      %v2575 = vadd.f32 %v2369, %v2574
      %v2576 = vpop.f32.mrb[0].mxu0
      %v2577 = vadd.f32 %v2373, %v2576
      %2578 = vmatprep.mubr.bf16.mxu0 %v2327
      %2579 = vmatmul.mubr.bf16.gmra.mrb[0].mxu0 %v2326
      %v2580 = vpop.f32.mrb[0].mxu0
      %v2581 = vadd.f32 %v2369, %v2580
      %v2582 = vpop.f32.mrb[0].mxu0
      %v2583 = vadd.f32 %v2373, %v2582
      %v2584 = vpop.f32.mrb[0].mxu0
      %v2585 = vadd.f32 %v2369, %v2584
      %v2586 = vpop.f32.mrb[0].mxu0
      %v2587 = vadd.f32 %v2373, %v2586
      %2588 = vmatprep.mubr.bf16.mxu0 %v2329
      %2589 = vmatmul.mubr.bf16.gmra.mrb[0].mxu0 %v2328
      %v2590 = vpop.f32.mrb[0].mxu0
      %v2591 = vadd.f32 %v2369, %v2590
      %v2592 = vpop.f32.mrb[0].mxu0
      %v2593 = vadd.f32 %v2373, %v2592
      %v2594 = vpop.f32.mrb[0].mxu0
      %v2595 = vadd.f32 %v2369, %v2594
      %v2596 = vpop.f32.mrb[0].mxu0
      %v2597 = vadd.f32 %v2373, %v2596
      %2598 = vmatprep.mubr.bf16.mxu0 %v2331
      %2599 = vmatmul.mubr.bf16.gmra.mrb[0].mxu0 %v2330
      %v2600 = vpop.f32.mrb[0].mxu0
      %v2601 = vadd.f32 %v2369, %v2600
      %v2602 = vpop.f32.mrb[0].mxu0
      %v2603 = vadd.f32 %v2373, %v2602
      %v2604 = vpop.f32.mrb[0].mxu0
      %v2605 = vadd.f32 %v2369, %v2604
      %v2606 = vpop.f32.mrb[0].mxu0
      %v2607 = vadd.f32 %v2373, %v2606
      %2608 = vdwg.mxu0
      %v2609 = vmax.f32 %v2571, 0.0
      %v2610 = vmax.f32 %v2573, 0.0
      %v2611 = vmax.f32 %v2575, 0.0
      %v2612 = vmax.f32 %v2577, 0.0
      %v2613 = vmax.f32 %v2581, 0.0
      %v2614 = vmax.f32 %v2583, 0.0
      %v2615 = vmax.f32 %v2585, 0.0
      %v2616 = vmax.f32 %v2587, 0.0
      %v2617 = vmax.f32 %v2591, 0.0
      %v2618 = vmax.f32 %v2593, 0.0
      %v2619 = vmax.f32 %v2595, 0.0
      %v2620 = vmax.f32 %v2597, 0.0
      %v2621 = vmax.f32 %v2601, 0.0
      %v2622 = vmax.f32 %v2603, 0.0
      %v2623 = vmax.f32 %v2605, 0.0
      %v2624 = vmax.f32 %v2607, 0.0
      %v2625 = vpack.c.bf16 %v2611, %v2609
      %v2626 = vpack.c.bf16 %v2612, %v2610
      %v2627 = vpack.c.bf16 %v2615, %v2613
      %v2628 = vpack.c.bf16 %v2616, %v2614
      %v2629 = vpack.c.bf16 %v2619, %v2617
      %v2630 = vpack.c.bf16 %v2620, %v2618
      %v2631 = vpack.c.bf16 %v2623, %v2621
      %v2632 = vpack.c.bf16 %v2624, %v2622
      %v2633 = vld [vmem:[%s12] sm:$0xff]
      %v2634 = vld [vmem:[%s12 + $0x8] sm:$0xff]
      %v2635 = vld [vmem:[%s12 + $0x10] sm:$0xff]
      %v2636 = vld [vmem:[%s12 + $0x18] sm:$0xff]
      %v2637 = vld [vmem:[%s12 + $0x20] sm:$0xff]
      %v2638 = vld [vmem:[%s12 + $0x28] sm:$0xff]
      %v2639 = vld [vmem:[%s12 + $0x30] sm:$0xff]
      %v2640 = vld [vmem:[%s12 + $0x38] sm:$0xff]
      %v2641 = vld [vmem:[%s12 + $0x40] sm:$0xff]
      %v2642 = vld [vmem:[%s12 + $0x48] sm:$0xff]
      %v2643 = vld [vmem:[%s12 + $0x50] sm:$0xff]
      %v2644 = vld [vmem:[%s12 + $0x58] sm:$0xff]
      %v2645 = vld [vmem:[%s12 + $0x60] sm:$0xff]
      %v2646 = vld [vmem:[%s12 + $0x68] sm:$0xff]
      %v2647 = vld [vmem:[%s12 + $0x70] sm:$0xff]
      %v2648 = vld [vmem:[%s12 + $0x78] sm:$0xff]
      %v2649 = vld [vmem:[%s12 + $0x80] sm:$0xff]
      %v2650 = vld [vmem:[%s12 + $0x88] sm:$0xff]
      %v2651 = vld [vmem:[%s12 + $0x90] sm:$0xff]
      %v2652 = vld [vmem:[%s12 + $0x98] sm:$0xff]
      %v2653 = vld [vmem:[%s12 + $0xa0] sm:$0xff]
      %v2654 = vld [vmem:[%s12 + $0xa8] sm:$0xff]
      %v2655 = vld [vmem:[%s12 + $0xb0] sm:$0xff]
      %v2656 = vld [vmem:[%s12 + $0xb8] sm:$0xff]
      %v2657 = vld [vmem:[%s12 + $0xc0] sm:$0xff]
      %v2658 = vld [vmem:[%s12 + $0xc8] sm:$0xff]
      %v2659 = vld [vmem:[%s12 + $0xd0] sm:$0xff]
      %v2660 = vld [vmem:[%s12 + $0xd8] sm:$0xff]
      %v2661 = vld [vmem:[%s12 + $0xe0] sm:$0xff]
      %v2662 = vld [vmem:[%s12 + $0xe8] sm:$0xff]
      %v2663 = vld [vmem:[%s12 + $0xf0] sm:$0xff]
      %v2664 = vld [vmem:[%s12 + $0xf8] sm:$0xff]
      %v2665 = vld [vmem:[%s13] sm:$0xff]
      %v2666 = vld [vmem:[%s13 + $0x8] sm:$0xff]
      %v2667 = vld [vmem:[%s13 + $0x10] sm:$0xff]
      %v2668 = vld [vmem:[%s13 + $0x18] sm:$0xff]
      %v2669 = vld [vmem:[%s13 + $0x20] sm:$0xff]
      %v2670 = vld [vmem:[%s13 + $0x28] sm:$0xff]
      %v2671 = vld [vmem:[%s13 + $0x30] sm:$0xff]
      %v2672 = vld [vmem:[%s13 + $0x38] sm:$0xff]
      %v2673 = vld [vmem:[%s13 + $0x40] sm:$0xff]
      %v2674 = vld [vmem:[%s13 + $0x48] sm:$0xff]
      %v2675 = vld [vmem:[%s13 + $0x50] sm:$0xff]
      %v2676 = vld [vmem:[%s13 + $0x58] sm:$0xff]
      %v2677 = vld [vmem:[%s13 + $0x60] sm:$0xff]
      %v2678 = vld [vmem:[%s13 + $0x68] sm:$0xff]
      %v2679 = vld [vmem:[%s13 + $0x70] sm:$0xff]
      %v2680 = vld [vmem:[%s13 + $0x78] sm:$0xff]
      %v2681 = vld [vmem:[%s13 + $0x80] sm:$0xff]
      %v2682 = vld [vmem:[%s13 + $0x88] sm:$0xff]
      %v2683 = vld [vmem:[%s13 + $0x90] sm:$0xff]
      %v2684 = vld [vmem:[%s13 + $0x98] sm:$0xff]
      %v2685 = vld [vmem:[%s13 + $0xa0] sm:$0xff]
      %v2686 = vld [vmem:[%s13 + $0xa8] sm:$0xff]
      %v2687 = vld [vmem:[%s13 + $0xb0] sm:$0xff]
      %v2688 = vld [vmem:[%s13 + $0xb8] sm:$0xff]
      %v2689 = vld [vmem:[%s13 + $0xc0] sm:$0xff]
      %v2690 = vld [vmem:[%s13 + $0xc8] sm:$0xff]
      %v2691 = vld [vmem:[%s13 + $0xd0] sm:$0xff]
      %v2692 = vld [vmem:[%s13 + $0xd8] sm:$0xff]
      %v2693 = vld [vmem:[%s13 + $0xe0] sm:$0xff]
      %v2694 = vld [vmem:[%s13 + $0xe8] sm:$0xff]
      %v2695 = vld [vmem:[%s13 + $0xf0] sm:$0xff]
      %v2696 = vld [vmem:[%s13 + $0xf8] sm:$0xff]
      %v2697 = vld [vmem:[%s13 + $0x100] sm:$0xff]
      %v2698 = vld [vmem:[%s13 + $0x108] sm:$0xff]
      %v2699 = vld [vmem:[%s13 + $0x110] sm:$0xff]
      %v2700 = vld [vmem:[%s13 + $0x118] sm:$0xff]
      %v2701 = vld [vmem:[%s13 + $0x120] sm:$0xff]
      %v2702 = vld [vmem:[%s13 + $0x128] sm:$0xff]
      %v2703 = vld [vmem:[%s13 + $0x130] sm:$0xff]
      %v2704 = vld [vmem:[%s13 + $0x138] sm:$0xff]
      %v2705 = vld [vmem:[%s13 + $0x140] sm:$0xff]
      %v2706 = vld [vmem:[%s13 + $0x148] sm:$0xff]
      %v2707 = vld [vmem:[%s13 + $0x150] sm:$0xff]
      %v2708 = vld [vmem:[%s13 + $0x158] sm:$0xff]
      %v2709 = vld [vmem:[%s13 + $0x160] sm:$0xff]
      %v2710 = vld [vmem:[%s13 + $0x168] sm:$0xff]
      %v2711 = vld [vmem:[%s13 + $0x170] sm:$0xff]
      %v2712 = vld [vmem:[%s13 + $0x178] sm:$0xff]
      %v2713 = vld [vmem:[%s13 + $0x180] sm:$0xff]
      %v2714 = vld [vmem:[%s13 + $0x188] sm:$0xff]
      %v2715 = vld [vmem:[%s13 + $0x190] sm:$0xff]
      %v2716 = vld [vmem:[%s13 + $0x198] sm:$0xff]
      %v2717 = vld [vmem:[%s13 + $0x1a0] sm:$0xff]
      %v2718 = vld [vmem:[%s13 + $0x1a8] sm:$0xff]
      %v2719 = vld [vmem:[%s13 + $0x1b0] sm:$0xff]
      %v2720 = vld [vmem:[%s13 + $0x1b8] sm:$0xff]
      %v2721 = vld [vmem:[%s13 + $0x1c0] sm:$0xff]
      %v2722 = vld [vmem:[%s13 + $0x1c8] sm:$0xff]
      %v2723 = vld [vmem:[%s13 + $0x1d0] sm:$0xff]
      %v2724 = vld [vmem:[%s13 + $0x1d8] sm:$0xff]
      %v2725 = vld [vmem:[%s13 + $0x1e0] sm:$0xff]
      %v2726 = vld [vmem:[%s13 + $0x1e8] sm:$0xff]
      %v2727 = vld [vmem:[%s13 + $0x1f0] sm:$0xff]
      %v2728 = vld [vmem:[%s13 + $0x1f8] sm:$0xff]
      %v2793 = vunpack.c.l.b16 %v2665
      %v2794 = vunpack.c.h.b16 %v2665
      %v2795 = vunpack.c.l.b16 %v2666
      %v2796 = vunpack.c.h.b16 %v2666
      %v2797 = vunpack.c.l.b16 %v2667
      %v2798 = vunpack.c.h.b16 %v2667
      %v2799 = vunpack.c.l.b16 %v2668
      %v2800 = vunpack.c.h.b16 %v2668
      %v2801 = vunpack.c.l.b16 %v2669
      %v2802 = vunpack.c.h.b16 %v2669
      %v2803 = vunpack.c.l.b16 %v2670
      %v2804 = vunpack.c.h.b16 %v2670
      %v2805 = vunpack.c.l.b16 %v2671
      %v2806 = vunpack.c.h.b16 %v2671
      %v2807 = vunpack.c.l.b16 %v2672
      %v2808 = vunpack.c.h.b16 %v2672
      %v2809 = vunpack.c.l.b16 %v2673
      %v2810 = vunpack.c.h.b16 %v2673
      %v2811 = vunpack.c.l.b16 %v2674
      %v2812 = vunpack.c.h.b16 %v2674
      %v2813 = vunpack.c.l.b16 %v2675
      %v2814 = vunpack.c.h.b16 %v2675
      %v2815 = vunpack.c.l.b16 %v2676
      %v2816 = vunpack.c.h.b16 %v2676
      %v2817 = vunpack.c.l.b16 %v2677
      %v2818 = vunpack.c.h.b16 %v2677
      %v2819 = vunpack.c.l.b16 %v2678
      %v2820 = vunpack.c.h.b16 %v2678
      %v2821 = vunpack.c.l.b16 %v2679
      %v2822 = vunpack.c.h.b16 %v2679
      %v2823 = vunpack.c.l.b16 %v2680
      %v2824 = vunpack.c.h.b16 %v2680
      %v2825 = vunpack.c.l.b16 %v2681
      %v2826 = vunpack.c.h.b16 %v2681
      %v2827 = vunpack.c.l.b16 %v2682
      %v2828 = vunpack.c.h.b16 %v2682
      %v2829 = vunpack.c.l.b16 %v2683
      %v2830 = vunpack.c.h.b16 %v2683
      %v2831 = vunpack.c.l.b16 %v2684
      %v2832 = vunpack.c.h.b16 %v2684
      %v2833 = vunpack.c.l.b16 %v2685
      %v2834 = vunpack.c.h.b16 %v2685
      %v2835 = vunpack.c.l.b16 %v2686
      %v2836 = vunpack.c.h.b16 %v2686
      %v2837 = vunpack.c.l.b16 %v2687
      %v2838 = vunpack.c.h.b16 %v2687
      %v2839 = vunpack.c.l.b16 %v2688
      %v2840 = vunpack.c.h.b16 %v2688
      %v2841 = vunpack.c.l.b16 %v2689
      %v2842 = vunpack.c.h.b16 %v2689
      %v2843 = vunpack.c.l.b16 %v2690
      %v2844 = vunpack.c.h.b16 %v2690
      %v2845 = vunpack.c.l.b16 %v2691
      %v2846 = vunpack.c.h.b16 %v2691
      %v2847 = vunpack.c.l.b16 %v2692
      %v2848 = vunpack.c.h.b16 %v2692
      %v2849 = vunpack.c.l.b16 %v2693
      %v2850 = vunpack.c.h.b16 %v2693
      %v2851 = vunpack.c.l.b16 %v2694
      %v2852 = vunpack.c.h.b16 %v2694
      %v2853 = vunpack.c.l.b16 %v2695
      %v2854 = vunpack.c.h.b16 %v2695
      %v2855 = vunpack.c.l.b16 %v2696
      %v2856 = vunpack.c.h.b16 %v2696
      %v2857 = vunpack.c.l.b16 %v2697
      %v2858 = vunpack.c.h.b16 %v2697
      %v2859 = vunpack.c.l.b16 %v2698
      %v2860 = vunpack.c.h.b16 %v2698
      %v2861 = vunpack.c.l.b16 %v2699
      %v2862 = vunpack.c.h.b16 %v2699
      %v2863 = vunpack.c.l.b16 %v2700
      %v2864 = vunpack.c.h.b16 %v2700
      %v2865 = vunpack.c.l.b16 %v2701
      %v2866 = vunpack.c.h.b16 %v2701
      %v2867 = vunpack.c.l.b16 %v2702
      %v2868 = vunpack.c.h.b16 %v2702
      %v2869 = vunpack.c.l.b16 %v2703
      %v2870 = vunpack.c.h.b16 %v2703
      %v2871 = vunpack.c.l.b16 %v2704
      %v2872 = vunpack.c.h.b16 %v2704
      %v2873 = vunpack.c.l.b16 %v2705
      %v2874 = vunpack.c.h.b16 %v2705
      %v2875 = vunpack.c.l.b16 %v2706
      %v2876 = vunpack.c.h.b16 %v2706
      %v2877 = vunpack.c.l.b16 %v2707
      %v2878 = vunpack.c.h.b16 %v2707
      %v2879 = vunpack.c.l.b16 %v2708
      %v2880 = vunpack.c.h.b16 %v2708
      %v2881 = vunpack.c.l.b16 %v2709
      %v2882 = vunpack.c.h.b16 %v2709
      %v2883 = vunpack.c.l.b16 %v2710
      %v2884 = vunpack.c.h.b16 %v2710
      %v2885 = vunpack.c.l.b16 %v2711
      %v2886 = vunpack.c.h.b16 %v2711
      %v2887 = vunpack.c.l.b16 %v2712
      %v2888 = vunpack.c.h.b16 %v2712
      %v2889 = vunpack.c.l.b16 %v2713
      %v2890 = vunpack.c.h.b16 %v2713
      %v2891 = vunpack.c.l.b16 %v2714
      %v2892 = vunpack.c.h.b16 %v2714
      %v2893 = vunpack.c.l.b16 %v2715
      %v2894 = vunpack.c.h.b16 %v2715
      %v2895 = vunpack.c.l.b16 %v2716
      %v2896 = vunpack.c.h.b16 %v2716
      %v2897 = vunpack.c.l.b16 %v2717
      %v2898 = vunpack.c.h.b16 %v2717
      %v2899 = vunpack.c.l.b16 %v2718
      %v2900 = vunpack.c.h.b16 %v2718
      %v2901 = vunpack.c.l.b16 %v2719
      %v2902 = vunpack.c.h.b16 %v2719
      %v2903 = vunpack.c.l.b16 %v2720
      %v2904 = vunpack.c.h.b16 %v2720
      %v2905 = vunpack.c.l.b16 %v2721
      %v2906 = vunpack.c.h.b16 %v2721
      %v2907 = vunpack.c.l.b16 %v2722
      %v2908 = vunpack.c.h.b16 %v2722
      %v2909 = vunpack.c.l.b16 %v2723
      %v2910 = vunpack.c.h.b16 %v2723
      %v2911 = vunpack.c.l.b16 %v2724
      %v2912 = vunpack.c.h.b16 %v2724
      %v2913 = vunpack.c.l.b16 %v2725
      %v2914 = vunpack.c.h.b16 %v2725
      %v2915 = vunpack.c.l.b16 %v2726
      %v2916 = vunpack.c.h.b16 %v2726
      %v2917 = vunpack.c.l.b16 %v2727
      %v2918 = vunpack.c.h.b16 %v2727
      %v2919 = vunpack.c.l.b16 %v2728
      %v2920 = vunpack.c.h.b16 %v2728
      %v2921 = vpack.c.b16 %v2795, %v2793
      %v2922 = vpack.c.b16 %v2796, %v2794
      %v2923 = vpack.c.b16 %v2799, %v2797
      %v2924 = vpack.c.b16 %v2800, %v2798
      %v2925 = vpack.c.b16 %v2803, %v2801
      %v2926 = vpack.c.b16 %v2804, %v2802
      %v2927 = vpack.c.b16 %v2807, %v2805
      %v2928 = vpack.c.b16 %v2808, %v2806
      %v2929 = vpack.c.b16 %v2811, %v2809
      %v2930 = vpack.c.b16 %v2812, %v2810
      %v2931 = vpack.c.b16 %v2815, %v2813
      %v2932 = vpack.c.b16 %v2816, %v2814
      %v2933 = vpack.c.b16 %v2819, %v2817
      %v2934 = vpack.c.b16 %v2820, %v2818
      %v2935 = vpack.c.b16 %v2823, %v2821
      %v2936 = vpack.c.b16 %v2824, %v2822
      %v2937 = vpack.c.b16 %v2827, %v2825
      %v2938 = vpack.c.b16 %v2828, %v2826
      %v2939 = vpack.c.b16 %v2831, %v2829
      %v2940 = vpack.c.b16 %v2832, %v2830
      %v2941 = vpack.c.b16 %v2835, %v2833
      %v2942 = vpack.c.b16 %v2836, %v2834
      %v2943 = vpack.c.b16 %v2839, %v2837
      %v2944 = vpack.c.b16 %v2840, %v2838
      %v2945 = vpack.c.b16 %v2843, %v2841
      %v2946 = vpack.c.b16 %v2844, %v2842
      %v2947 = vpack.c.b16 %v2847, %v2845
      %v2948 = vpack.c.b16 %v2848, %v2846
      %v2949 = vpack.c.b16 %v2851, %v2849
      %v2950 = vpack.c.b16 %v2852, %v2850
      %v2951 = vpack.c.b16 %v2855, %v2853
      %v2952 = vpack.c.b16 %v2856, %v2854
      %v2953 = vpack.c.b16 %v2859, %v2857
      %v2954 = vpack.c.b16 %v2860, %v2858
      %v2955 = vpack.c.b16 %v2863, %v2861
      %v2956 = vpack.c.b16 %v2864, %v2862
      %v2957 = vpack.c.b16 %v2867, %v2865
      %v2958 = vpack.c.b16 %v2868, %v2866
      %v2959 = vpack.c.b16 %v2871, %v2869
      %v2960 = vpack.c.b16 %v2872, %v2870
      %v2961 = vpack.c.b16 %v2875, %v2873
      %v2962 = vpack.c.b16 %v2876, %v2874
      %v2963 = vpack.c.b16 %v2879, %v2877
      %v2964 = vpack.c.b16 %v2880, %v2878
      %v2965 = vpack.c.b16 %v2883, %v2881
      %v2966 = vpack.c.b16 %v2884, %v2882
      %v2967 = vpack.c.b16 %v2887, %v2885
      %v2968 = vpack.c.b16 %v2888, %v2886
      %v2969 = vpack.c.b16 %v2891, %v2889
      %v2970 = vpack.c.b16 %v2892, %v2890
      %v2971 = vpack.c.b16 %v2895, %v2893
      %v2972 = vpack.c.b16 %v2896, %v2894
      %v2973 = vpack.c.b16 %v2899, %v2897
      %v2974 = vpack.c.b16 %v2900, %v2898
      %v2975 = vpack.c.b16 %v2903, %v2901
      %v2976 = vpack.c.b16 %v2904, %v2902
      %v2977 = vpack.c.b16 %v2907, %v2905
      %v2978 = vpack.c.b16 %v2908, %v2906
      %v2979 = vpack.c.b16 %v2911, %v2909
      %v2980 = vpack.c.b16 %v2912, %v2910
      %v2981 = vpack.c.b16 %v2915, %v2913
      %v2982 = vpack.c.b16 %v2916, %v2914
      %v2983 = vpack.c.b16 %v2919, %v2917
      %v2984 = vpack.c.b16 %v2920, %v2918
      %3049 = vmatprep.subr.bf16.mxu0 %v2922
      %3050 = vmatpush1.bf16.msra.mxu0 %v2921
      %3051 = vmatprep.subr.bf16.mxu0 %v2924
      %3052 = vmatpush1.bf16.msra.mxu0 %v2923
      %3053 = vmatprep.subr.bf16.mxu0 %v2926
      %3054 = vmatpush1.bf16.msra.mxu0 %v2925
      %3055 = vmatprep.subr.bf16.mxu0 %v2928
      %3056 = vmatpush1.bf16.msra.mxu0 %v2927
      %3057 = vmatprep.subr.bf16.mxu0 %v2930
      %3058 = vmatpush1.bf16.msra.mxu0 %v2929
      %3059 = vmatprep.subr.bf16.mxu0 %v2932
      %3060 = vmatpush1.bf16.msra.mxu0 %v2931
      %3061 = vmatprep.subr.bf16.mxu0 %v2934
      %3062 = vmatpush1.bf16.msra.mxu0 %v2933
      %3063 = vmatprep.subr.bf16.mxu0 %v2936
      %3064 = vmatpush1.bf16.msra.mxu0 %v2935
      %3065 = vmatprep.subr.bf16.mxu0 %v2938
      %3066 = vmatpush1.bf16.msra.mxu0 %v2937
      %3067 = vmatprep.subr.bf16.mxu0 %v2940
      %3068 = vmatpush1.bf16.msra.mxu0 %v2939
      %3069 = vmatprep.subr.bf16.mxu0 %v2942
      %3070 = vmatpush1.bf16.msra.mxu0 %v2941
      %3071 = vmatprep.subr.bf16.mxu0 %v2944
      %3072 = vmatpush1.bf16.msra.mxu0 %v2943
      %3073 = vmatprep.subr.bf16.mxu0 %v2946
      %3074 = vmatpush1.bf16.msra.mxu0 %v2945
      %3075 = vmatprep.subr.bf16.mxu0 %v2948
      %3076 = vmatpush1.bf16.msra.mxu0 %v2947
      %3077 = vmatprep.subr.bf16.mxu0 %v2950
      %3078 = vmatpush1.bf16.msra.mxu0 %v2949
      %3079 = vmatprep.subr.bf16.mxu0 %v2952
      %3080 = vmatpush1.bf16.msra.mxu0 %v2951
      %3081 = vmatprep.mubr.bf16.mxu0 %v908
      %3082 = vmatmul.mubr.bf16.gmra.mrb[0].mxu0 %v907
      %v3083 = vpop.f32.mrb[0].mxu0
      %v3084 = vadd.f32 0.0, %v3083
      %v3085 = vpop.f32.mrb[0].mxu0
      %v3086 = vadd.f32 0.0, %v3085
      %v3087 = vpop.f32.mrb[0].mxu0
      %v3088 = vadd.f32 0.0, %v3087
      %v3089 = vpop.f32.mrb[0].mxu0
      %v3090 = vadd.f32 0.0, %v3089
      %3091 = vmatprep.mubr.bf16.mxu0 %v912
      %3092 = vmatmul.mubr.bf16.gmra.mrb[0].mxu0 %v911
      %v3093 = vpop.f32.mrb[0].mxu0
      %v3094 = vadd.f32 0.0, %v3093
      %v3095 = vpop.f32.mrb[0].mxu0
      %v3096 = vadd.f32 0.0, %v3095
      %v3097 = vpop.f32.mrb[0].mxu0
      %v3098 = vadd.f32 0.0, %v3097
      %v3099 = vpop.f32.mrb[0].mxu0
      %v3100 = vadd.f32 0.0, %v3099
      %3101 = vmatprep.mubr.bf16.mxu0 %v916
      %3102 = vmatmul.mubr.bf16.gmra.mrb[0].mxu0 %v915
      %v3103 = vpop.f32.mrb[0].mxu0
      %v3104 = vadd.f32 0.0, %v3103
      %v3105 = vpop.f32.mrb[0].mxu0
      %v3106 = vadd.f32 0.0, %v3105
      %v3107 = vpop.f32.mrb[0].mxu0
      %v3108 = vadd.f32 0.0, %v3107
      %v3109 = vpop.f32.mrb[0].mxu0
      %v3110 = vadd.f32 0.0, %v3109
      %3111 = vmatprep.mubr.bf16.mxu0 %v920
      %3112 = vmatmul.mubr.bf16.gmra.mrb[0].mxu0 %v919
      %v3113 = vpop.f32.mrb[0].mxu0
      %v3114 = vadd.f32 0.0, %v3113
      %v3115 = vpop.f32.mrb[0].mxu0
      %v3116 = vadd.f32 0.0, %v3115
      %v3117 = vpop.f32.mrb[0].mxu0
      %v3118 = vadd.f32 0.0, %v3117
      %v3119 = vpop.f32.mrb[0].mxu0
      %v3120 = vadd.f32 0.0, %v3119
      %3121 = vdwg.mxu0
      %3122 = vmatprep.subr.bf16.mxu0 %v2954
      %3123 = vmatpush1.bf16.msra.mxu0 %v2953
      %3124 = vmatprep.subr.bf16.mxu0 %v2956
      %3125 = vmatpush1.bf16.msra.mxu0 %v2955
      %3126 = vmatprep.subr.bf16.mxu0 %v2958
      %3127 = vmatpush1.bf16.msra.mxu0 %v2957
      %3128 = vmatprep.subr.bf16.mxu0 %v2960
      %3129 = vmatpush1.bf16.msra.mxu0 %v2959
      %3130 = vmatprep.subr.bf16.mxu0 %v2962
      %3131 = vmatpush1.bf16.msra.mxu0 %v2961
      %3132 = vmatprep.subr.bf16.mxu0 %v2964
      %3133 = vmatpush1.bf16.msra.mxu0 %v2963
      %3134 = vmatprep.subr.bf16.mxu0 %v2966
      %3135 = vmatpush1.bf16.msra.mxu0 %v2965
      %3136 = vmatprep.subr.bf16.mxu0 %v2968
      %3137 = vmatpush1.bf16.msra.mxu0 %v2967
      %3138 = vmatprep.subr.bf16.mxu0 %v2970
      %3139 = vmatpush1.bf16.msra.mxu0 %v2969
      %3140 = vmatprep.subr.bf16.mxu0 %v2972
      %3141 = vmatpush1.bf16.msra.mxu0 %v2971
      %3142 = vmatprep.subr.bf16.mxu0 %v2974
      %3143 = vmatpush1.bf16.msra.mxu0 %v2973
      %3144 = vmatprep.subr.bf16.mxu0 %v2976
      %3145 = vmatpush1.bf16.msra.mxu0 %v2975
      %3146 = vmatprep.subr.bf16.mxu0 %v2978
      %3147 = vmatpush1.bf16.msra.mxu0 %v2977
      %3148 = vmatprep.subr.bf16.mxu0 %v2980
      %3149 = vmatpush1.bf16.msra.mxu0 %v2979
      %3150 = vmatprep.subr.bf16.mxu0 %v2982
      %3151 = vmatpush1.bf16.msra.mxu0 %v2981
      %3152 = vmatprep.subr.bf16.mxu0 %v2984
      %3153 = vmatpush1.bf16.msra.mxu0 %v2983
      %3154 = vmatprep.mubr.bf16.mxu0 %v910
      %3155 = vmatmul.mubr.bf16.gmra.mrb[0].mxu0 %v909
      %v3156 = vpop.f32.mrb[0].mxu0
      %v3157 = vadd.f32 %v3084, %v3156
      %v3158 = vpop.f32.mrb[0].mxu0
      %v3159 = vadd.f32 %v3086, %v3158
      %v3160 = vpop.f32.mrb[0].mxu0
      %v3161 = vadd.f32 %v3088, %v3160
      %v3162 = vpop.f32.mrb[0].mxu0
      %v3163 = vadd.f32 %v3090, %v3162
      %3164 = vmatprep.mubr.bf16.mxu0 %v914
      %3165 = vmatmul.mubr.bf16.gmra.mrb[0].mxu0 %v913
      %v3166 = vpop.f32.mrb[0].mxu0
      %v3167 = vadd.f32 %v3094, %v3166
      %v3168 = vpop.f32.mrb[0].mxu0
      %v3169 = vadd.f32 %v3096, %v3168
      %v3170 = vpop.f32.mrb[0].mxu0
      %v3171 = vadd.f32 %v3098, %v3170
      %v3172 = vpop.f32.mrb[0].mxu0
      %v3173 = vadd.f32 %v3100, %v3172
      %3174 = vmatprep.mubr.bf16.mxu0 %v918
      %3175 = vmatmul.mubr.bf16.gmra.mrb[0].mxu0 %v917
      %v3176 = vpop.f32.mrb[0].mxu0
      %v3177 = vadd.f32 %v3104, %v3176
      %v3178 = vpop.f32.mrb[0].mxu0
      %v3179 = vadd.f32 %v3106, %v3178
      %v3180 = vpop.f32.mrb[0].mxu0
      %v3181 = vadd.f32 %v3108, %v3180
      %v3182 = vpop.f32.mrb[0].mxu0
      %v3183 = vadd.f32 %v3110, %v3182
      %3184 = vmatprep.mubr.bf16.mxu0 %v922
      %3185 = vmatmul.mubr.bf16.gmra.mrb[0].mxu0 %v921
      %v3186 = vpop.f32.mrb[0].mxu0
      %v3187 = vadd.f32 %v3114, %v3186
      %v3188 = vpop.f32.mrb[0].mxu0
      %v3189 = vadd.f32 %v3116, %v3188
      %v3190 = vpop.f32.mrb[0].mxu0
      %v3191 = vadd.f32 %v3118, %v3190
      %v3192 = vpop.f32.mrb[0].mxu0
      %v3193 = vadd.f32 %v3120, %v3192
      %3194 = vdwg.mxu0
      %v3227 = vunpack.c.l.b16 %v2633
      %v3228 = vunpack.c.h.b16 %v2633
      %v3229 = vunpack.c.l.b16 %v2634
      %v3230 = vunpack.c.h.b16 %v2634
      %v3231 = vunpack.c.l.b16 %v2635
      %v3232 = vunpack.c.h.b16 %v2635
      %v3233 = vunpack.c.l.b16 %v2636
      %v3234 = vunpack.c.h.b16 %v2636
      %v3235 = vunpack.c.l.b16 %v2637
      %v3236 = vunpack.c.h.b16 %v2637
      %v3237 = vunpack.c.l.b16 %v2638
      %v3238 = vunpack.c.h.b16 %v2638
      %v3239 = vunpack.c.l.b16 %v2639
      %v3240 = vunpack.c.h.b16 %v2639
      %v3241 = vunpack.c.l.b16 %v2640
      %v3242 = vunpack.c.h.b16 %v2640
      %v3243 = vunpack.c.l.b16 %v2641
      %v3244 = vunpack.c.h.b16 %v2641
      %v3245 = vunpack.c.l.b16 %v2642
      %v3246 = vunpack.c.h.b16 %v2642
      %v3247 = vunpack.c.l.b16 %v2643
      %v3248 = vunpack.c.h.b16 %v2643
      %v3249 = vunpack.c.l.b16 %v2644
      %v3250 = vunpack.c.h.b16 %v2644
      %v3251 = vunpack.c.l.b16 %v2645
      %v3252 = vunpack.c.h.b16 %v2645
      %v3253 = vunpack.c.l.b16 %v2646
      %v3254 = vunpack.c.h.b16 %v2646
      %v3255 = vunpack.c.l.b16 %v2647
      %v3256 = vunpack.c.h.b16 %v2647
      %v3257 = vunpack.c.l.b16 %v2648
      %v3258 = vunpack.c.h.b16 %v2648
      %v3259 = vunpack.c.l.b16 %v2649
      %v3260 = vunpack.c.h.b16 %v2649
      %v3261 = vunpack.c.l.b16 %v2650
      %v3262 = vunpack.c.h.b16 %v2650
      %v3263 = vunpack.c.l.b16 %v2651
      %v3264 = vunpack.c.h.b16 %v2651
      %v3265 = vunpack.c.l.b16 %v2652
      %v3266 = vunpack.c.h.b16 %v2652
      %v3267 = vunpack.c.l.b16 %v2653
      %v3268 = vunpack.c.h.b16 %v2653
      %v3269 = vunpack.c.l.b16 %v2654
      %v3270 = vunpack.c.h.b16 %v2654
      %v3271 = vunpack.c.l.b16 %v2655
      %v3272 = vunpack.c.h.b16 %v2655
      %v3273 = vunpack.c.l.b16 %v2656
      %v3274 = vunpack.c.h.b16 %v2656
      %v3275 = vunpack.c.l.b16 %v2657
      %v3276 = vunpack.c.h.b16 %v2657
      %v3277 = vunpack.c.l.b16 %v2658
      %v3278 = vunpack.c.h.b16 %v2658
      %v3279 = vunpack.c.l.b16 %v2659
      %v3280 = vunpack.c.h.b16 %v2659
      %v3281 = vunpack.c.l.b16 %v2660
      %v3282 = vunpack.c.h.b16 %v2660
      %v3283 = vunpack.c.l.b16 %v2661
      %v3284 = vunpack.c.h.b16 %v2661
      %v3285 = vunpack.c.l.b16 %v2662
      %v3286 = vunpack.c.h.b16 %v2662
      %v3287 = vunpack.c.l.b16 %v2663
      %v3288 = vunpack.c.h.b16 %v2663
      %v3289 = vunpack.c.l.b16 %v2664
      %v3290 = vunpack.c.h.b16 %v2664
      %v3291 = vpack.c.b16 %v3229, %v3227
      %v3292 = vpack.c.b16 %v3230, %v3228
      %v3293 = vpack.c.b16 %v3233, %v3231
      %v3294 = vpack.c.b16 %v3234, %v3232
      %v3295 = vpack.c.b16 %v3237, %v3235
      %v3296 = vpack.c.b16 %v3238, %v3236
      %v3297 = vpack.c.b16 %v3241, %v3239
      %v3298 = vpack.c.b16 %v3242, %v3240
      %v3299 = vpack.c.b16 %v3245, %v3243
      %v3300 = vpack.c.b16 %v3246, %v3244
      %v3301 = vpack.c.b16 %v3249, %v3247
      %v3302 = vpack.c.b16 %v3250, %v3248
      %v3303 = vpack.c.b16 %v3253, %v3251
      %v3304 = vpack.c.b16 %v3254, %v3252
      %v3305 = vpack.c.b16 %v3257, %v3255
      %v3306 = vpack.c.b16 %v3258, %v3256
      %v3307 = vpack.c.b16 %v3261, %v3259
      %v3308 = vpack.c.b16 %v3262, %v3260
      %v3309 = vpack.c.b16 %v3265, %v3263
      %v3310 = vpack.c.b16 %v3266, %v3264
      %v3311 = vpack.c.b16 %v3269, %v3267
      %v3312 = vpack.c.b16 %v3270, %v3268
      %v3313 = vpack.c.b16 %v3273, %v3271
      %v3314 = vpack.c.b16 %v3274, %v3272
      %v3315 = vpack.c.b16 %v3277, %v3275
      %v3316 = vpack.c.b16 %v3278, %v3276
      %v3317 = vpack.c.b16 %v3281, %v3279
      %v3318 = vpack.c.b16 %v3282, %v3280
      %v3319 = vpack.c.b16 %v3285, %v3283
      %v3320 = vpack.c.b16 %v3286, %v3284
      %v3321 = vpack.c.b16 %v3289, %v3287
      %v3322 = vpack.c.b16 %v3290, %v3288
      %3355 = vmatprep.subr.bf16.mxu0 %v3292
      %3356 = vmatpush1.bf16.msra.mxu0 %v3291
      %3357 = vmatprep.subr.bf16.mxu0 %v3294
      %3358 = vmatpush1.bf16.msra.mxu0 %v3293
      %3359 = vmatprep.subr.bf16.mxu0 %v3296
      %3360 = vmatpush1.bf16.msra.mxu0 %v3295
      %3361 = vmatprep.subr.bf16.mxu0 %v3298
      %3362 = vmatpush1.bf16.msra.mxu0 %v3297
      %3363 = vmatprep.subr.bf16.mxu0 %v3300
      %3364 = vmatpush1.bf16.msra.mxu0 %v3299
      %3365 = vmatprep.subr.bf16.mxu0 %v3302
      %3366 = vmatpush1.bf16.msra.mxu0 %v3301
      %3367 = vmatprep.subr.bf16.mxu0 %v3304
      %3368 = vmatpush1.bf16.msra.mxu0 %v3303
      %3369 = vmatprep.subr.bf16.mxu0 %v3306
      %3370 = vmatpush1.bf16.msra.mxu0 %v3305
      %3371 = vmatprep.subr.bf16.mxu0 %v3308
      %3372 = vmatpush1.bf16.msra.mxu0 %v3307
      %3373 = vmatprep.subr.bf16.mxu0 %v3310
      %3374 = vmatpush1.bf16.msra.mxu0 %v3309
      %3375 = vmatprep.subr.bf16.mxu0 %v3312
      %3376 = vmatpush1.bf16.msra.mxu0 %v3311
      %3377 = vmatprep.subr.bf16.mxu0 %v3314
      %3378 = vmatpush1.bf16.msra.mxu0 %v3313
      %3379 = vmatprep.subr.bf16.mxu0 %v3316
      %3380 = vmatpush1.bf16.msra.mxu0 %v3315
      %3381 = vmatprep.subr.bf16.mxu0 %v3318
      %3382 = vmatpush1.bf16.msra.mxu0 %v3317
      %3383 = vmatprep.subr.bf16.mxu0 %v3320
      %3384 = vmatpush1.bf16.msra.mxu0 %v3319
      %3385 = vmatprep.subr.bf16.mxu0 %v3322
      %3386 = vmatpush1.bf16.msra.mxu0 %v3321
      %3387 = vmatprep.mubr.bf16.mxu0 %v2626
      %3388 = vmatmul.mubr.bf16.gmra.mrb[0].mxu0 %v2625
      %v3389 = vpop.f32.mrb[0].mxu0
      %v3390 = vadd.f32 %v3157, %v3389
      %v3391 = vpop.f32.mrb[0].mxu0
      %v3392 = vadd.f32 %v3159, %v3391
      %v3393 = vpop.f32.mrb[0].mxu0
      %v3394 = vadd.f32 %v3161, %v3393
      %v3395 = vpop.f32.mrb[0].mxu0
      %v3396 = vadd.f32 %v3163, %v3395
      %3397 = vmatprep.mubr.bf16.mxu0 %v2628
      %3398 = vmatmul.mubr.bf16.gmra.mrb[0].mxu0 %v2627
      %v3399 = vpop.f32.mrb[0].mxu0
      %v3400 = vadd.f32 %v3167, %v3399
      %v3401 = vpop.f32.mrb[0].mxu0
      %v3402 = vadd.f32 %v3169, %v3401
      %v3403 = vpop.f32.mrb[0].mxu0
      %v3404 = vadd.f32 %v3171, %v3403
      %v3405 = vpop.f32.mrb[0].mxu0
      %v3406 = vadd.f32 %v3173, %v3405
      %3407 = vmatprep.mubr.bf16.mxu0 %v2630
      %3408 = vmatmul.mubr.bf16.gmra.mrb[0].mxu0 %v2629
      %v3409 = vpop.f32.mrb[0].mxu0
      %v3410 = vadd.f32 %v3177, %v3409
      %v3411 = vpop.f32.mrb[0].mxu0
      %v3412 = vadd.f32 %v3179, %v3411
      %v3413 = vpop.f32.mrb[0].mxu0
      %v3414 = vadd.f32 %v3181, %v3413
      %v3415 = vpop.f32.mrb[0].mxu0
      %v3416 = vadd.f32 %v3183, %v3415
      %3417 = vmatprep.mubr.bf16.mxu0 %v2632
      %3418 = vmatmul.mubr.bf16.gmra.mrb[0].mxu0 %v2631
      %v3419 = vpop.f32.mrb[0].mxu0
      %v3420 = vadd.f32 %v3187, %v3419
      %v3421 = vpop.f32.mrb[0].mxu0
      %v3422 = vadd.f32 %v3189, %v3421
      %v3423 = vpop.f32.mrb[0].mxu0
      %v3424 = vadd.f32 %v3191, %v3423
      %v3425 = vpop.f32.mrb[0].mxu0
      %v3426 = vadd.f32 %v3193, %v3425
      %3427 = vdwg.mxu0
      %v3428 = vld [vmem:[%s14] sm:$0x3]
      %v3430 = vlaneseq
      %v3431 = vshrl.u32 %v3430, 7
      %v3432 = vsub.s32 0, %v3431
      %v3433 = vrot.slane %v3428, %v3432
      %v3434 = vlaneseq
      %v3435 = vshrl.u32 %v3434, 7
      %v3436 = vsub.s32 1, %v3435
      %v3437 = vrot.slane %v3428, %v3436
      %v3440 = vadd.f32 %v3390, %v3433
      %v3441 = vadd.f32 %v3392, %v3437
      %v3442 = vadd.f32 %v3394, %v3433
      %v3443 = vadd.f32 %v3396, %v3437
      %v3444 = vadd.f32 %v3400, %v3433
      %v3445 = vadd.f32 %v3402, %v3437
      %v3446 = vadd.f32 %v3404, %v3433
      %v3447 = vadd.f32 %v3406, %v3437
      %v3448 = vadd.f32 %v3410, %v3433
      %v3449 = vadd.f32 %v3412, %v3437
      %v3450 = vadd.f32 %v3414, %v3433
      %v3451 = vadd.f32 %v3416, %v3437
      %v3452 = vadd.f32 %v3420, %v3433
      %v3453 = vadd.f32 %v3422, %v3437
      %v3454 = vadd.f32 %v3424, %v3433
      %v3455 = vadd.f32 %v3426, %v3437
      %v3456 = vmax.f32 %v3440, 0.0
      %v3457 = vmax.f32 %v3441, 0.0
      %v3458 = vmax.f32 %v3442, 0.0
      %v3459 = vmax.f32 %v3443, 0.0
      %v3460 = vmax.f32 %v3444, 0.0
      %v3461 = vmax.f32 %v3445, 0.0
      %v3462 = vmax.f32 %v3446, 0.0
      %v3463 = vmax.f32 %v3447, 0.0
      %v3464 = vmax.f32 %v3448, 0.0
      %v3465 = vmax.f32 %v3449, 0.0
      %v3466 = vmax.f32 %v3450, 0.0
      %v3467 = vmax.f32 %v3451, 0.0
      %v3468 = vmax.f32 %v3452, 0.0
      %v3469 = vmax.f32 %v3453, 0.0
      %v3470 = vmax.f32 %v3454, 0.0
      %v3471 = vmax.f32 %v3455, 0.0
      %v3472 = vpack.c.bf16 %v3458, %v3456
      %v3473 = vpack.c.bf16 %v3459, %v3457
      %v3474 = vpack.c.bf16 %v3462, %v3460
      %v3475 = vpack.c.bf16 %v3463, %v3461
      %v3476 = vpack.c.bf16 %v3466, %v3464
      %v3477 = vpack.c.bf16 %v3467, %v3465
      %v3478 = vpack.c.bf16 %v3470, %v3468
      %v3479 = vpack.c.bf16 %v3471, %v3469
      %v3480 = vld [vmem:[%s15] sm:$0xff]
      %v3481 = vld [vmem:[%s15 + $0x8] sm:$0xff]
      %v3482 = vld [vmem:[%s15 + $0x10] sm:$0xff]
      %v3483 = vld [vmem:[%s15 + $0x18] sm:$0xff]
      %v3484 = vld [vmem:[%s15 + $0x20] sm:$0xff]
      %v3485 = vld [vmem:[%s15 + $0x28] sm:$0xff]
      %v3486 = vld [vmem:[%s15 + $0x30] sm:$0xff]
      %v3487 = vld [vmem:[%s15 + $0x38] sm:$0xff]
      %v3488 = vld [vmem:[%s15 + $0x40] sm:$0xff]
      %v3489 = vld [vmem:[%s15 + $0x48] sm:$0xff]
      %v3490 = vld [vmem:[%s15 + $0x50] sm:$0xff]
      %v3491 = vld [vmem:[%s15 + $0x58] sm:$0xff]
      %v3492 = vld [vmem:[%s15 + $0x60] sm:$0xff]
      %v3493 = vld [vmem:[%s15 + $0x68] sm:$0xff]
      %v3494 = vld [vmem:[%s15 + $0x70] sm:$0xff]
      %v3495 = vld [vmem:[%s15 + $0x78] sm:$0xff]
      %v3496 = vld [vmem:[%s15 + $0x80] sm:$0xff]
      %v3497 = vld [vmem:[%s15 + $0x88] sm:$0xff]
      %v3498 = vld [vmem:[%s15 + $0x90] sm:$0xff]
      %v3499 = vld [vmem:[%s15 + $0x98] sm:$0xff]
      %v3500 = vld [vmem:[%s15 + $0xa0] sm:$0xff]
      %v3501 = vld [vmem:[%s15 + $0xa8] sm:$0xff]
      %v3502 = vld [vmem:[%s15 + $0xb0] sm:$0xff]
      %v3503 = vld [vmem:[%s15 + $0xb8] sm:$0xff]
      %v3504 = vld [vmem:[%s15 + $0xc0] sm:$0xff]
      %v3505 = vld [vmem:[%s15 + $0xc8] sm:$0xff]
      %v3506 = vld [vmem:[%s15 + $0xd0] sm:$0xff]
      %v3507 = vld [vmem:[%s15 + $0xd8] sm:$0xff]
      %v3508 = vld [vmem:[%s15 + $0xe0] sm:$0xff]
      %v3509 = vld [vmem:[%s15 + $0xe8] sm:$0xff]
      %v3510 = vld [vmem:[%s15 + $0xf0] sm:$0xff]
      %v3511 = vld [vmem:[%s15 + $0xf8] sm:$0xff]
      %v3512 = vld [vmem:[%s16] sm:$0x3]
      %v3514 = vlaneseq
      %v3515 = vshrl.u32 %v3514, 7
      %v3516 = vsub.s32 0, %v3515
      %v3517 = vrot.slane %v3512, %v3516
      %v3518 = vlaneseq
      %v3519 = vshrl.u32 %v3518, 7
      %v3520 = vsub.s32 1, %v3519
      %v3521 = vrot.slane %v3512, %v3520
      %v3556 = vunpack.c.l.b16 %v3480
      %v3557 = vunpack.c.h.b16 %v3480
      %v3558 = vunpack.c.l.b16 %v3481
      %v3559 = vunpack.c.h.b16 %v3481
      %v3560 = vunpack.c.l.b16 %v3482
      %v3561 = vunpack.c.h.b16 %v3482
      %v3562 = vunpack.c.l.b16 %v3483
      %v3563 = vunpack.c.h.b16 %v3483
      %v3564 = vunpack.c.l.b16 %v3484
      %v3565 = vunpack.c.h.b16 %v3484
      %v3566 = vunpack.c.l.b16 %v3485
      %v3567 = vunpack.c.h.b16 %v3485
      %v3568 = vunpack.c.l.b16 %v3486
      %v3569 = vunpack.c.h.b16 %v3486
      %v3570 = vunpack.c.l.b16 %v3487
      %v3571 = vunpack.c.h.b16 %v3487
      %v3572 = vunpack.c.l.b16 %v3488
      %v3573 = vunpack.c.h.b16 %v3488
      %v3574 = vunpack.c.l.b16 %v3489
      %v3575 = vunpack.c.h.b16 %v3489
      %v3576 = vunpack.c.l.b16 %v3490
      %v3577 = vunpack.c.h.b16 %v3490
      %v3578 = vunpack.c.l.b16 %v3491
      %v3579 = vunpack.c.h.b16 %v3491
      %v3580 = vunpack.c.l.b16 %v3492
      %v3581 = vunpack.c.h.b16 %v3492
      %v3582 = vunpack.c.l.b16 %v3493
      %v3583 = vunpack.c.h.b16 %v3493
      %v3584 = vunpack.c.l.b16 %v3494
      %v3585 = vunpack.c.h.b16 %v3494
      %v3586 = vunpack.c.l.b16 %v3495
      %v3587 = vunpack.c.h.b16 %v3495
      %v3588 = vunpack.c.l.b16 %v3496
      %v3589 = vunpack.c.h.b16 %v3496
      %v3590 = vunpack.c.l.b16 %v3497
      %v3591 = vunpack.c.h.b16 %v3497
      %v3592 = vunpack.c.l.b16 %v3498
      %v3593 = vunpack.c.h.b16 %v3498
      %v3594 = vunpack.c.l.b16 %v3499
      %v3595 = vunpack.c.h.b16 %v3499
      %v3596 = vunpack.c.l.b16 %v3500
      %v3597 = vunpack.c.h.b16 %v3500
      %v3598 = vunpack.c.l.b16 %v3501
      %v3599 = vunpack.c.h.b16 %v3501
      %v3600 = vunpack.c.l.b16 %v3502
      %v3601 = vunpack.c.h.b16 %v3502
      %v3602 = vunpack.c.l.b16 %v3503
      %v3603 = vunpack.c.h.b16 %v3503
      %v3604 = vunpack.c.l.b16 %v3504
      %v3605 = vunpack.c.h.b16 %v3504
      %v3606 = vunpack.c.l.b16 %v3505
      %v3607 = vunpack.c.h.b16 %v3505
      %v3608 = vunpack.c.l.b16 %v3506
      %v3609 = vunpack.c.h.b16 %v3506
      %v3610 = vunpack.c.l.b16 %v3507
      %v3611 = vunpack.c.h.b16 %v3507
      %v3612 = vunpack.c.l.b16 %v3508
      %v3613 = vunpack.c.h.b16 %v3508
      %v3614 = vunpack.c.l.b16 %v3509
      %v3615 = vunpack.c.h.b16 %v3509
      %v3616 = vunpack.c.l.b16 %v3510
      %v3617 = vunpack.c.h.b16 %v3510
      %v3618 = vunpack.c.l.b16 %v3511
      %v3619 = vunpack.c.h.b16 %v3511
      %v3620 = vpack.c.b16 %v3558, %v3556
      %v3621 = vpack.c.b16 %v3559, %v3557
      %v3622 = vpack.c.b16 %v3562, %v3560
      %v3623 = vpack.c.b16 %v3563, %v3561
      %v3624 = vpack.c.b16 %v3566, %v3564
      %v3625 = vpack.c.b16 %v3567, %v3565
      %v3626 = vpack.c.b16 %v3570, %v3568
      %v3627 = vpack.c.b16 %v3571, %v3569
      %v3628 = vpack.c.b16 %v3574, %v3572
      %v3629 = vpack.c.b16 %v3575, %v3573
      %v3630 = vpack.c.b16 %v3578, %v3576
      %v3631 = vpack.c.b16 %v3579, %v3577
      %v3632 = vpack.c.b16 %v3582, %v3580
      %v3633 = vpack.c.b16 %v3583, %v3581
      %v3634 = vpack.c.b16 %v3586, %v3584
      %v3635 = vpack.c.b16 %v3587, %v3585
      %v3636 = vpack.c.b16 %v3590, %v3588
      %v3637 = vpack.c.b16 %v3591, %v3589
      %v3638 = vpack.c.b16 %v3594, %v3592
      %v3639 = vpack.c.b16 %v3595, %v3593
      %v3640 = vpack.c.b16 %v3598, %v3596
      %v3641 = vpack.c.b16 %v3599, %v3597
      %v3642 = vpack.c.b16 %v3602, %v3600
      %v3643 = vpack.c.b16 %v3603, %v3601
      %v3644 = vpack.c.b16 %v3606, %v3604
      %v3645 = vpack.c.b16 %v3607, %v3605
      %v3646 = vpack.c.b16 %v3610, %v3608
      %v3647 = vpack.c.b16 %v3611, %v3609
      %v3648 = vpack.c.b16 %v3614, %v3612
      %v3649 = vpack.c.b16 %v3615, %v3613
      %v3650 = vpack.c.b16 %v3618, %v3616
      %v3651 = vpack.c.b16 %v3619, %v3617
      %3684 = vmatprep.subr.bf16.mxu0 %v3621
      %3685 = vmatpush1.bf16.msra.mxu0 %v3620
      %3686 = vmatprep.subr.bf16.mxu0 %v3623
      %3687 = vmatpush1.bf16.msra.mxu0 %v3622
      %3688 = vmatprep.subr.bf16.mxu0 %v3625
      %3689 = vmatpush1.bf16.msra.mxu0 %v3624
      %3690 = vmatprep.subr.bf16.mxu0 %v3627
      %3691 = vmatpush1.bf16.msra.mxu0 %v3626
      %3692 = vmatprep.subr.bf16.mxu0 %v3629
      %3693 = vmatpush1.bf16.msra.mxu0 %v3628
      %3694 = vmatprep.subr.bf16.mxu0 %v3631
      %3695 = vmatpush1.bf16.msra.mxu0 %v3630
      %3696 = vmatprep.subr.bf16.mxu0 %v3633
      %3697 = vmatpush1.bf16.msra.mxu0 %v3632
      %3698 = vmatprep.subr.bf16.mxu0 %v3635
      %3699 = vmatpush1.bf16.msra.mxu0 %v3634
      %3700 = vmatprep.subr.bf16.mxu0 %v3637
      %3701 = vmatpush1.bf16.msra.mxu0 %v3636
      %3702 = vmatprep.subr.bf16.mxu0 %v3639
      %3703 = vmatpush1.bf16.msra.mxu0 %v3638
      %3704 = vmatprep.subr.bf16.mxu0 %v3641
      %3705 = vmatpush1.bf16.msra.mxu0 %v3640
      %3706 = vmatprep.subr.bf16.mxu0 %v3643
      %3707 = vmatpush1.bf16.msra.mxu0 %v3642
      %3708 = vmatprep.subr.bf16.mxu0 %v3645
      %3709 = vmatpush1.bf16.msra.mxu0 %v3644
      %3710 = vmatprep.subr.bf16.mxu0 %v3647
      %3711 = vmatpush1.bf16.msra.mxu0 %v3646
      %3712 = vmatprep.subr.bf16.mxu0 %v3649
      %3713 = vmatpush1.bf16.msra.mxu0 %v3648
      %3714 = vmatprep.subr.bf16.mxu0 %v3651
      %3715 = vmatpush1.bf16.msra.mxu0 %v3650
      %3716 = vmatprep.mubr.bf16.mxu0 %v3473
      %3717 = vmatmul.mubr.bf16.gmra.mrb[0].mxu0 %v3472
      %v3718 = vpop.f32.mrb[0].mxu0
      %v3719 = vadd.f32 %v3517, %v3718
      %v3720 = vpop.f32.mrb[0].mxu0
      %v3721 = vadd.f32 %v3521, %v3720
      %v3722 = vpop.f32.mrb[0].mxu0
      %v3723 = vadd.f32 %v3517, %v3722
      %v3724 = vpop.f32.mrb[0].mxu0
      %v3725 = vadd.f32 %v3521, %v3724
      %3726 = vmatprep.mubr.bf16.mxu0 %v3475
      %3727 = vmatmul.mubr.bf16.gmra.mrb[0].mxu0 %v3474
      %v3728 = vpop.f32.mrb[0].mxu0
      %v3729 = vadd.f32 %v3517, %v3728
      %v3730 = vpop.f32.mrb[0].mxu0
      %v3731 = vadd.f32 %v3521, %v3730
      %v3732 = vpop.f32.mrb[0].mxu0
      %v3733 = vadd.f32 %v3517, %v3732
      %v3734 = vpop.f32.mrb[0].mxu0
      %v3735 = vadd.f32 %v3521, %v3734
      %3736 = vmatprep.mubr.bf16.mxu0 %v3477
      %3737 = vmatmul.mubr.bf16.gmra.mrb[0].mxu0 %v3476
      %v3738 = vpop.f32.mrb[0].mxu0
      %v3739 = vadd.f32 %v3517, %v3738
      %v3740 = vpop.f32.mrb[0].mxu0
      %v3741 = vadd.f32 %v3521, %v3740
      %v3742 = vpop.f32.mrb[0].mxu0
      %v3743 = vadd.f32 %v3517, %v3742
      %v3744 = vpop.f32.mrb[0].mxu0
      %v3745 = vadd.f32 %v3521, %v3744
      %3746 = vmatprep.mubr.bf16.mxu0 %v3479
      %3747 = vmatmul.mubr.bf16.gmra.mrb[0].mxu0 %v3478
      %v3748 = vpop.f32.mrb[0].mxu0
      %v3749 = vadd.f32 %v3517, %v3748
      %v3750 = vpop.f32.mrb[0].mxu0
      %v3751 = vadd.f32 %v3521, %v3750
      %v3752 = vpop.f32.mrb[0].mxu0
      %v3753 = vadd.f32 %v3517, %v3752
      %v3754 = vpop.f32.mrb[0].mxu0
      %v3755 = vadd.f32 %v3521, %v3754
      %3756 = vdwg.mxu0
      %v3757 = vmax.f32 %v3719, 0.0
      %v3758 = vmax.f32 %v3721, 0.0
      %v3759 = vmax.f32 %v3723, 0.0
      %v3760 = vmax.f32 %v3725, 0.0
      %v3761 = vmax.f32 %v3729, 0.0
      %v3762 = vmax.f32 %v3731, 0.0
      %v3763 = vmax.f32 %v3733, 0.0
      %v3764 = vmax.f32 %v3735, 0.0
      %v3765 = vmax.f32 %v3739, 0.0
      %v3766 = vmax.f32 %v3741, 0.0
      %v3767 = vmax.f32 %v3743, 0.0
      %v3768 = vmax.f32 %v3745, 0.0
      %v3769 = vmax.f32 %v3749, 0.0
      %v3770 = vmax.f32 %v3751, 0.0
      %v3771 = vmax.f32 %v3753, 0.0
      %v3772 = vmax.f32 %v3755, 0.0
      %v3773 = vpack.c.bf16 %v3759, %v3757
      %v3774 = vpack.c.bf16 %v3760, %v3758
      %v3775 = vpack.c.bf16 %v3763, %v3761
      %v3776 = vpack.c.bf16 %v3764, %v3762
      %v3777 = vpack.c.bf16 %v3767, %v3765
      %v3778 = vpack.c.bf16 %v3768, %v3766
      %v3779 = vpack.c.bf16 %v3771, %v3769
      %v3780 = vpack.c.bf16 %v3772, %v3770
      %v3781 = vld [vmem:[%s17] sm:$0xff]
      %v3782 = vld [vmem:[%s17 + $0x8] sm:$0xff]
      %v3783 = vld [vmem:[%s17 + $0x10] sm:$0xff]
      %v3784 = vld [vmem:[%s17 + $0x18] sm:$0xff]
      %v3785 = vld [vmem:[%s17 + $0x20] sm:$0xff]
      %v3786 = vld [vmem:[%s17 + $0x28] sm:$0xff]
      %v3787 = vld [vmem:[%s17 + $0x30] sm:$0xff]
      %v3788 = vld [vmem:[%s17 + $0x38] sm:$0xff]
      %v3789 = vld [vmem:[%s17 + $0x40] sm:$0xff]
      %v3790 = vld [vmem:[%s17 + $0x48] sm:$0xff]
      %v3791 = vld [vmem:[%s17 + $0x50] sm:$0xff]
      %v3792 = vld [vmem:[%s17 + $0x58] sm:$0xff]
      %v3793 = vld [vmem:[%s17 + $0x60] sm:$0xff]
      %v3794 = vld [vmem:[%s17 + $0x68] sm:$0xff]
      %v3795 = vld [vmem:[%s17 + $0x70] sm:$0xff]
      %v3796 = vld [vmem:[%s17 + $0x78] sm:$0xff]
      %v3797 = vld [vmem:[%s17 + $0x80] sm:$0xff]
      %v3798 = vld [vmem:[%s17 + $0x88] sm:$0xff]
      %v3799 = vld [vmem:[%s17 + $0x90] sm:$0xff]
      %v3800 = vld [vmem:[%s17 + $0x98] sm:$0xff]
      %v3801 = vld [vmem:[%s17 + $0xa0] sm:$0xff]
      %v3802 = vld [vmem:[%s17 + $0xa8] sm:$0xff]
      %v3803 = vld [vmem:[%s17 + $0xb0] sm:$0xff]
      %v3804 = vld [vmem:[%s17 + $0xb8] sm:$0xff]
      %v3805 = vld [vmem:[%s17 + $0xc0] sm:$0xff]
      %v3806 = vld [vmem:[%s17 + $0xc8] sm:$0xff]
      %v3807 = vld [vmem:[%s17 + $0xd0] sm:$0xff]
      %v3808 = vld [vmem:[%s17 + $0xd8] sm:$0xff]
      %v3809 = vld [vmem:[%s17 + $0xe0] sm:$0xff]
      %v3810 = vld [vmem:[%s17 + $0xe8] sm:$0xff]
      %v3811 = vld [vmem:[%s17 + $0xf0] sm:$0xff]
      %v3812 = vld [vmem:[%s17 + $0xf8] sm:$0xff]
      %v3813 = vld [vmem:[%s18] sm:$0x3]
      %v3815 = vlaneseq
      %v3816 = vshrl.u32 %v3815, 7
      %v3817 = vsub.s32 0, %v3816
      %v3818 = vrot.slane %v3813, %v3817
      %v3819 = vlaneseq
      %v3820 = vshrl.u32 %v3819, 7
      %v3821 = vsub.s32 1, %v3820
      %v3822 = vrot.slane %v3813, %v3821
      %v3857 = vunpack.c.l.b16 %v3781
      %v3858 = vunpack.c.h.b16 %v3781
      %v3859 = vunpack.c.l.b16 %v3782
      %v3860 = vunpack.c.h.b16 %v3782
      %v3861 = vunpack.c.l.b16 %v3783
      %v3862 = vunpack.c.h.b16 %v3783
      %v3863 = vunpack.c.l.b16 %v3784
      %v3864 = vunpack.c.h.b16 %v3784
      %v3865 = vunpack.c.l.b16 %v3785
      %v3866 = vunpack.c.h.b16 %v3785
      %v3867 = vunpack.c.l.b16 %v3786
      %v3868 = vunpack.c.h.b16 %v3786
      %v3869 = vunpack.c.l.b16 %v3787
      %v3870 = vunpack.c.h.b16 %v3787
      %v3871 = vunpack.c.l.b16 %v3788
      %v3872 = vunpack.c.h.b16 %v3788
      %v3873 = vunpack.c.l.b16 %v3789
      %v3874 = vunpack.c.h.b16 %v3789
      %v3875 = vunpack.c.l.b16 %v3790
      %v3876 = vunpack.c.h.b16 %v3790
      %v3877 = vunpack.c.l.b16 %v3791
      %v3878 = vunpack.c.h.b16 %v3791
      %v3879 = vunpack.c.l.b16 %v3792
      %v3880 = vunpack.c.h.b16 %v3792
      %v3881 = vunpack.c.l.b16 %v3793
      %v3882 = vunpack.c.h.b16 %v3793
      %v3883 = vunpack.c.l.b16 %v3794
      %v3884 = vunpack.c.h.b16 %v3794
      %v3885 = vunpack.c.l.b16 %v3795
      %v3886 = vunpack.c.h.b16 %v3795
      %v3887 = vunpack.c.l.b16 %v3796
      %v3888 = vunpack.c.h.b16 %v3796
      %v3889 = vunpack.c.l.b16 %v3797
      %v3890 = vunpack.c.h.b16 %v3797
      %v3891 = vunpack.c.l.b16 %v3798
      %v3892 = vunpack.c.h.b16 %v3798
      %v3893 = vunpack.c.l.b16 %v3799
      %v3894 = vunpack.c.h.b16 %v3799
      %v3895 = vunpack.c.l.b16 %v3800
      %v3896 = vunpack.c.h.b16 %v3800
      %v3897 = vunpack.c.l.b16 %v3801
      %v3898 = vunpack.c.h.b16 %v3801
      %v3899 = vunpack.c.l.b16 %v3802
      %v3900 = vunpack.c.h.b16 %v3802
      %v3901 = vunpack.c.l.b16 %v3803
      %v3902 = vunpack.c.h.b16 %v3803
      %v3903 = vunpack.c.l.b16 %v3804
      %v3904 = vunpack.c.h.b16 %v3804
      %v3905 = vunpack.c.l.b16 %v3805
      %v3906 = vunpack.c.h.b16 %v3805
      %v3907 = vunpack.c.l.b16 %v3806
      %v3908 = vunpack.c.h.b16 %v3806
      %v3909 = vunpack.c.l.b16 %v3807
      %v3910 = vunpack.c.h.b16 %v3807
      %v3911 = vunpack.c.l.b16 %v3808
      %v3912 = vunpack.c.h.b16 %v3808
      %v3913 = vunpack.c.l.b16 %v3809
      %v3914 = vunpack.c.h.b16 %v3809
      %v3915 = vunpack.c.l.b16 %v3810
      %v3916 = vunpack.c.h.b16 %v3810
      %v3917 = vunpack.c.l.b16 %v3811
      %v3918 = vunpack.c.h.b16 %v3811
      %v3919 = vunpack.c.l.b16 %v3812
      %v3920 = vunpack.c.h.b16 %v3812
      %v3921 = vpack.c.b16 %v3859, %v3857
      %v3922 = vpack.c.b16 %v3860, %v3858
      %v3923 = vpack.c.b16 %v3863, %v3861
      %v3924 = vpack.c.b16 %v3864, %v3862
      %v3925 = vpack.c.b16 %v3867, %v3865
      %v3926 = vpack.c.b16 %v3868, %v3866
      %v3927 = vpack.c.b16 %v3871, %v3869
      %v3928 = vpack.c.b16 %v3872, %v3870
      %v3929 = vpack.c.b16 %v3875, %v3873
      %v3930 = vpack.c.b16 %v3876, %v3874
      %v3931 = vpack.c.b16 %v3879, %v3877
      %v3932 = vpack.c.b16 %v3880, %v3878
      %v3933 = vpack.c.b16 %v3883, %v3881
      %v3934 = vpack.c.b16 %v3884, %v3882
      %v3935 = vpack.c.b16 %v3887, %v3885
      %v3936 = vpack.c.b16 %v3888, %v3886
      %v3937 = vpack.c.b16 %v3891, %v3889
      %v3938 = vpack.c.b16 %v3892, %v3890
      %v3939 = vpack.c.b16 %v3895, %v3893
      %v3940 = vpack.c.b16 %v3896, %v3894
      %v3941 = vpack.c.b16 %v3899, %v3897
      %v3942 = vpack.c.b16 %v3900, %v3898
      %v3943 = vpack.c.b16 %v3903, %v3901
      %v3944 = vpack.c.b16 %v3904, %v3902
      %v3945 = vpack.c.b16 %v3907, %v3905
      %v3946 = vpack.c.b16 %v3908, %v3906
      %v3947 = vpack.c.b16 %v3911, %v3909
      %v3948 = vpack.c.b16 %v3912, %v3910
      %v3949 = vpack.c.b16 %v3915, %v3913
      %v3950 = vpack.c.b16 %v3916, %v3914
      %v3951 = vpack.c.b16 %v3919, %v3917
      %v3952 = vpack.c.b16 %v3920, %v3918
      %3985 = vmatprep.subr.bf16.mxu0 %v3922
      %3986 = vmatpush1.bf16.msra.mxu0 %v3921
      %3987 = vmatprep.subr.bf16.mxu0 %v3924
      %3988 = vmatpush1.bf16.msra.mxu0 %v3923
      %3989 = vmatprep.subr.bf16.mxu0 %v3926
      %3990 = vmatpush1.bf16.msra.mxu0 %v3925
      %3991 = vmatprep.subr.bf16.mxu0 %v3928
      %3992 = vmatpush1.bf16.msra.mxu0 %v3927
      %3993 = vmatprep.subr.bf16.mxu0 %v3930
      %3994 = vmatpush1.bf16.msra.mxu0 %v3929
      %3995 = vmatprep.subr.bf16.mxu0 %v3932
      %3996 = vmatpush1.bf16.msra.mxu0 %v3931
      %3997 = vmatprep.subr.bf16.mxu0 %v3934
      %3998 = vmatpush1.bf16.msra.mxu0 %v3933
      %3999 = vmatprep.subr.bf16.mxu0 %v3936
      %4000 = vmatpush1.bf16.msra.mxu0 %v3935
      %4001 = vmatprep.subr.bf16.mxu0 %v3938
      %4002 = vmatpush1.bf16.msra.mxu0 %v3937
      %4003 = vmatprep.subr.bf16.mxu0 %v3940
      %4004 = vmatpush1.bf16.msra.mxu0 %v3939
      %4005 = vmatprep.subr.bf16.mxu0 %v3942
      %4006 = vmatpush1.bf16.msra.mxu0 %v3941
      %4007 = vmatprep.subr.bf16.mxu0 %v3944
      %4008 = vmatpush1.bf16.msra.mxu0 %v3943
      %4009 = vmatprep.subr.bf16.mxu0 %v3946
      %4010 = vmatpush1.bf16.msra.mxu0 %v3945
      %4011 = vmatprep.subr.bf16.mxu0 %v3948
      %4012 = vmatpush1.bf16.msra.mxu0 %v3947
      %4013 = vmatprep.subr.bf16.mxu0 %v3950
      %4014 = vmatpush1.bf16.msra.mxu0 %v3949
      %4015 = vmatprep.subr.bf16.mxu0 %v3952
      %4016 = vmatpush1.bf16.msra.mxu0 %v3951
      %4017 = vmatprep.mubr.bf16.mxu0 %v3774
      %4018 = vmatmul.mubr.bf16.gmra.mrb[0].mxu0 %v3773
      %v4019 = vpop.f32.mrb[0].mxu0
      %v4020 = vadd.f32 %v3818, %v4019
      %v4021 = vpop.f32.mrb[0].mxu0
      %v4022 = vadd.f32 %v3822, %v4021
      %v4023 = vpop.f32.mrb[0].mxu0
      %v4024 = vadd.f32 %v3818, %v4023
      %v4025 = vpop.f32.mrb[0].mxu0
      %v4026 = vadd.f32 %v3822, %v4025
      %4027 = vmatprep.mubr.bf16.mxu0 %v3776
      %4028 = vmatmul.mubr.bf16.gmra.mrb[0].mxu0 %v3775
      %v4029 = vpop.f32.mrb[0].mxu0
      %v4030 = vadd.f32 %v3818, %v4029
      %v4031 = vpop.f32.mrb[0].mxu0
      %v4032 = vadd.f32 %v3822, %v4031
      %v4033 = vpop.f32.mrb[0].mxu0
      %v4034 = vadd.f32 %v3818, %v4033
      %v4035 = vpop.f32.mrb[0].mxu0
      %v4036 = vadd.f32 %v3822, %v4035
      %4037 = vmatprep.mubr.bf16.mxu0 %v3778
      %4038 = vmatmul.mubr.bf16.gmra.mrb[0].mxu0 %v3777
      %v4039 = vpop.f32.mrb[0].mxu0
      %v4040 = vadd.f32 %v3818, %v4039
      %v4041 = vpop.f32.mrb[0].mxu0
      %v4042 = vadd.f32 %v3822, %v4041
      %v4043 = vpop.f32.mrb[0].mxu0
      %v4044 = vadd.f32 %v3818, %v4043
      %v4045 = vpop.f32.mrb[0].mxu0
      %v4046 = vadd.f32 %v3822, %v4045
      %4047 = vmatprep.mubr.bf16.mxu0 %v3780
      %4048 = vmatmul.mubr.bf16.gmra.mrb[0].mxu0 %v3779
      %v4049 = vpop.f32.mrb[0].mxu0
      %v4050 = vadd.f32 %v3818, %v4049
      %v4051 = vpop.f32.mrb[0].mxu0
      %v4052 = vadd.f32 %v3822, %v4051
      %v4053 = vpop.f32.mrb[0].mxu0
      %v4054 = vadd.f32 %v3818, %v4053
      %v4055 = vpop.f32.mrb[0].mxu0
      %v4056 = vadd.f32 %v3822, %v4055
      %4057 = vdwg.mxu0
      %v4058 = vmax.f32 %v4020, 0.0
      %v4059 = vmax.f32 %v4022, 0.0
      %v4060 = vmax.f32 %v4024, 0.0
      %v4061 = vmax.f32 %v4026, 0.0
      %v4062 = vmax.f32 %v4030, 0.0
      %v4063 = vmax.f32 %v4032, 0.0
      %v4064 = vmax.f32 %v4034, 0.0
      %v4065 = vmax.f32 %v4036, 0.0
      %v4066 = vmax.f32 %v4040, 0.0
      %v4067 = vmax.f32 %v4042, 0.0
      %v4068 = vmax.f32 %v4044, 0.0
      %v4069 = vmax.f32 %v4046, 0.0
      %v4070 = vmax.f32 %v4050, 0.0
      %v4071 = vmax.f32 %v4052, 0.0
      %v4072 = vmax.f32 %v4054, 0.0
      %v4073 = vmax.f32 %v4056, 0.0
      %v4074 = vpack.c.bf16 %v4060, %v4058
      %v4075 = vpack.c.bf16 %v4061, %v4059
      %v4076 = vpack.c.bf16 %v4064, %v4062
      %v4077 = vpack.c.bf16 %v4065, %v4063
      %v4078 = vpack.c.bf16 %v4068, %v4066
      %v4079 = vpack.c.bf16 %v4069, %v4067
      %v4080 = vpack.c.bf16 %v4072, %v4070
      %v4081 = vpack.c.bf16 %v4073, %v4071
      %v4082 = vld [vmem:[%s19] sm:$0xff]
      %v4083 = vld [vmem:[%s19 + $0x8] sm:$0xf]
      %v4084 = vld [vmem:[%s19 + $0xc] sm:$0xff]
      %v4085 = vld [vmem:[%s19 + $0x14] sm:$0xf]
      %v4086 = vld [vmem:[%s19 + $0x18] sm:$0xff]
      %v4087 = vld [vmem:[%s19 + $0x20] sm:$0xf]
      %v4088 = vld [vmem:[%s19 + $0x24] sm:$0xff]
      %v4089 = vld [vmem:[%s19 + $0x2c] sm:$0xf]
      %v4090 = vld [vmem:[%s19 + $0x30] sm:$0xff]
      %v4091 = vld [vmem:[%s19 + $0x38] sm:$0xf]
      %v4092 = vld [vmem:[%s19 + $0x3c] sm:$0xff]
      %v4093 = vld [vmem:[%s19 + $0x44] sm:$0xf]
      %v4094 = vld [vmem:[%s19 + $0x48] sm:$0xff]
      %v4095 = vld [vmem:[%s19 + $0x50] sm:$0xf]
      %v4096 = vld [vmem:[%s19 + $0x54] sm:$0xff]
      %v4097 = vld [vmem:[%s19 + $0x5c] sm:$0xf]
      %v4098 = vld [vmem:[%s19 + $0x60] sm:$0xff]
      %v4099 = vld [vmem:[%s19 + $0x68] sm:$0xf]
      %v4100 = vld [vmem:[%s19 + $0x6c] sm:$0xff]
      %v4101 = vld [vmem:[%s19 + $0x74] sm:$0xf]
      %v4102 = vld [vmem:[%s19 + $0x78] sm:$0xff]
      %v4103 = vld [vmem:[%s19 + $0x80] sm:$0xf]
      %v4104 = vld [vmem:[%s19 + $0x84] sm:$0xff]
      %v4105 = vld [vmem:[%s19 + $0x8c] sm:$0xf]
      %v4106 = vld [vmem:[%s19 + $0x90] sm:$0xff]
      %v4107 = vld [vmem:[%s19 + $0x98] sm:$0xf]
      %v4108 = vld [vmem:[%s19 + $0x9c] sm:$0xff]
      %v4109 = vld [vmem:[%s19 + $0xa4] sm:$0xf]
      %v4110 = vld [vmem:[%s19 + $0xa8] sm:$0xff]
      %v4111 = vld [vmem:[%s19 + $0xb0] sm:$0xf]
      %v4112 = vld [vmem:[%s19 + $0xb4] sm:$0xff]
      %v4113 = vld [vmem:[%s19 + $0xbc] sm:$0xf]
      %v4114 = vld [vmem:[%s19 + $0xc0] sm:$0xff]
      %v4115 = vld [vmem:[%s19 + $0xc8] sm:$0xf]
      %v4116 = vld [vmem:[%s19 + $0xcc] sm:$0xff]
      %v4117 = vld [vmem:[%s19 + $0xd4] sm:$0xf]
      %v4118 = vld [vmem:[%s19 + $0xd8] sm:$0xff]
      %v4119 = vld [vmem:[%s19 + $0xe0] sm:$0xf]
      %v4120 = vld [vmem:[%s19 + $0xe4] sm:$0xff]
      %v4121 = vld [vmem:[%s19 + $0xec] sm:$0xf]
      %v4122 = vld [vmem:[%s19 + $0xf0] sm:$0xff]
      %v4123 = vld [vmem:[%s19 + $0xf8] sm:$0xf]
      %v4124 = vld [vmem:[%s19 + $0xfc] sm:$0xff]
      %v4125 = vld [vmem:[%s19 + $0x104] sm:$0xf]
      %v4126 = vld [vmem:[%s19 + $0x108] sm:$0xff]
      %v4127 = vld [vmem:[%s19 + $0x110] sm:$0xf]
      %v4128 = vld [vmem:[%s19 + $0x114] sm:$0xff]
      %v4129 = vld [vmem:[%s19 + $0x11c] sm:$0xf]
      %v4130 = vld [vmem:[%s19 + $0x120] sm:$0xff]
      %v4131 = vld [vmem:[%s19 + $0x128] sm:$0xf]
      %v4132 = vld [vmem:[%s19 + $0x12c] sm:$0xff]
      %v4133 = vld [vmem:[%s19 + $0x134] sm:$0xf]
      %v4134 = vld [vmem:[%s19 + $0x138] sm:$0xff]
      %v4135 = vld [vmem:[%s19 + $0x140] sm:$0xf]
      %v4136 = vld [vmem:[%s19 + $0x144] sm:$0xff]
      %v4137 = vld [vmem:[%s19 + $0x14c] sm:$0xf]
      %v4138 = vld [vmem:[%s19 + $0x150] sm:$0xff]
      %v4139 = vld [vmem:[%s19 + $0x158] sm:$0xf]
      %v4140 = vld [vmem:[%s19 + $0x15c] sm:$0xff]
      %v4141 = vld [vmem:[%s19 + $0x164] sm:$0xf]
      %v4142 = vld [vmem:[%s19 + $0x168] sm:$0xff]
      %v4143 = vld [vmem:[%s19 + $0x170] sm:$0xf]
      %v4144 = vld [vmem:[%s19 + $0x174] sm:$0xff]
      %v4145 = vld [vmem:[%s19 + $0x17c] sm:$0xf]
      %v4146 = vld [vmem:[%s20] sm:$0x7]
      %v4148 = vlaneseq
      %v4149 = vshrl.u32 %v4148, 7
      %v4150 = vsub.s32 0, %v4149
      %v4151 = vrot.slane %v4146, %v4150
      %v4152 = vlaneseq
      %v4153 = vshrl.u32 %v4152, 7
      %v4154 = vsub.s32 1, %v4153
      %v4155 = vrot.slane %v4146, %v4154
      %v4156 = vlaneseq
      %v4157 = vshrl.u32 %v4156, 7
      %v4158 = vsub.s32 2, %v4157
      %v4159 = vrot.slane %v4146, %v4158
      %v4227 = vunpack.c.l.b16 %v4082
      %v4228 = vunpack.c.h.b16 %v4082
      %v4229 = vunpack.c.l.b16 %v4083
      %v4230 = vunpack.c.l.b16 %v4084
      %v4231 = vunpack.c.h.b16 %v4084
      %v4232 = vunpack.c.l.b16 %v4085
      %v4233 = vunpack.c.l.b16 %v4086
      %v4234 = vunpack.c.h.b16 %v4086
      %v4235 = vunpack.c.l.b16 %v4087
      %v4236 = vunpack.c.l.b16 %v4088
      %v4237 = vunpack.c.h.b16 %v4088
      %v4238 = vunpack.c.l.b16 %v4089
      %v4239 = vunpack.c.l.b16 %v4090
      %v4240 = vunpack.c.h.b16 %v4090
      %v4241 = vunpack.c.l.b16 %v4091
      %v4242 = vunpack.c.l.b16 %v4092
      %v4243 = vunpack.c.h.b16 %v4092
      %v4244 = vunpack.c.l.b16 %v4093
      %v4245 = vunpack.c.l.b16 %v4094
      %v4246 = vunpack.c.h.b16 %v4094
      %v4247 = vunpack.c.l.b16 %v4095
      %v4248 = vunpack.c.l.b16 %v4096
      %v4249 = vunpack.c.h.b16 %v4096
      %v4250 = vunpack.c.l.b16 %v4097
      %v4251 = vunpack.c.l.b16 %v4098
      %v4252 = vunpack.c.h.b16 %v4098
      %v4253 = vunpack.c.l.b16 %v4099
      %v4254 = vunpack.c.l.b16 %v4100
      %v4255 = vunpack.c.h.b16 %v4100
      %v4256 = vunpack.c.l.b16 %v4101
      %v4257 = vunpack.c.l.b16 %v4102
      %v4258 = vunpack.c.h.b16 %v4102
      %v4259 = vunpack.c.l.b16 %v4103
      %v4260 = vunpack.c.l.b16 %v4104
      %v4261 = vunpack.c.h.b16 %v4104
      %v4262 = vunpack.c.l.b16 %v4105
      %v4263 = vunpack.c.l.b16 %v4106
      %v4264 = vunpack.c.h.b16 %v4106
      %v4265 = vunpack.c.l.b16 %v4107
      %v4266 = vunpack.c.l.b16 %v4108
      %v4267 = vunpack.c.h.b16 %v4108
      %v4268 = vunpack.c.l.b16 %v4109
      %v4269 = vunpack.c.l.b16 %v4110
      %v4270 = vunpack.c.h.b16 %v4110
      %v4271 = vunpack.c.l.b16 %v4111
      %v4272 = vunpack.c.l.b16 %v4112
      %v4273 = vunpack.c.h.b16 %v4112
      %v4274 = vunpack.c.l.b16 %v4113
      %v4275 = vunpack.c.l.b16 %v4114
      %v4276 = vunpack.c.h.b16 %v4114
      %v4277 = vunpack.c.l.b16 %v4115
      %v4278 = vunpack.c.l.b16 %v4116
      %v4279 = vunpack.c.h.b16 %v4116
      %v4280 = vunpack.c.l.b16 %v4117
      %v4281 = vunpack.c.l.b16 %v4118
      %v4282 = vunpack.c.h.b16 %v4118
      %v4283 = vunpack.c.l.b16 %v4119
      %v4284 = vunpack.c.l.b16 %v4120
      %v4285 = vunpack.c.h.b16 %v4120
      %v4286 = vunpack.c.l.b16 %v4121
      %v4287 = vunpack.c.l.b16 %v4122
      %v4288 = vunpack.c.h.b16 %v4122
      %v4289 = vunpack.c.l.b16 %v4123
      %v4290 = vunpack.c.l.b16 %v4124
      %v4291 = vunpack.c.h.b16 %v4124
      %v4292 = vunpack.c.l.b16 %v4125
      %v4293 = vunpack.c.l.b16 %v4126
      %v4294 = vunpack.c.h.b16 %v4126
      %v4295 = vunpack.c.l.b16 %v4127
      %v4296 = vunpack.c.l.b16 %v4128
      %v4297 = vunpack.c.h.b16 %v4128
      %v4298 = vunpack.c.l.b16 %v4129
      %v4299 = vunpack.c.l.b16 %v4130
      %v4300 = vunpack.c.h.b16 %v4130
      %v4301 = vunpack.c.l.b16 %v4131
      %v4302 = vunpack.c.l.b16 %v4132
      %v4303 = vunpack.c.h.b16 %v4132
      %v4304 = vunpack.c.l.b16 %v4133
      %v4305 = vunpack.c.l.b16 %v4134
      %v4306 = vunpack.c.h.b16 %v4134
      %v4307 = vunpack.c.l.b16 %v4135
      %v4308 = vunpack.c.l.b16 %v4136
      %v4309 = vunpack.c.h.b16 %v4136
      %v4310 = vunpack.c.l.b16 %v4137
      %v4311 = vunpack.c.l.b16 %v4138
      %v4312 = vunpack.c.h.b16 %v4138
      %v4313 = vunpack.c.l.b16 %v4139
      %v4314 = vunpack.c.l.b16 %v4140
      %v4315 = vunpack.c.h.b16 %v4140
      %v4316 = vunpack.c.l.b16 %v4141
      %v4317 = vunpack.c.l.b16 %v4142
      %v4318 = vunpack.c.h.b16 %v4142
      %v4319 = vunpack.c.l.b16 %v4143
      %v4320 = vunpack.c.l.b16 %v4144
      %v4321 = vunpack.c.h.b16 %v4144
      %v4322 = vunpack.c.l.b16 %v4145
      %v4323 = vpack.c.b16 %v4230, %v4227
      %v4324 = vpack.c.b16 %v4231, %v4228
      %v4325 = vpack.c.b16 %v4232, %v4229
      %v4326 = vpack.c.b16 %v4236, %v4233
      %v4327 = vpack.c.b16 %v4237, %v4234
      %v4328 = vpack.c.b16 %v4238, %v4235
      %v4329 = vpack.c.b16 %v4242, %v4239
      %v4330 = vpack.c.b16 %v4243, %v4240
      %v4331 = vpack.c.b16 %v4244, %v4241
      %v4332 = vpack.c.b16 %v4248, %v4245
      %v4333 = vpack.c.b16 %v4249, %v4246
      %v4334 = vpack.c.b16 %v4250, %v4247
      %v4335 = vpack.c.b16 %v4254, %v4251
      %v4336 = vpack.c.b16 %v4255, %v4252
      %v4337 = vpack.c.b16 %v4256, %v4253
      %v4338 = vpack.c.b16 %v4260, %v4257
      %v4339 = vpack.c.b16 %v4261, %v4258
      %v4340 = vpack.c.b16 %v4262, %v4259
      %v4341 = vpack.c.b16 %v4266, %v4263
      %v4342 = vpack.c.b16 %v4267, %v4264
      %v4343 = vpack.c.b16 %v4268, %v4265
      %v4344 = vpack.c.b16 %v4272, %v4269
      %v4345 = vpack.c.b16 %v4273, %v4270
      %v4346 = vpack.c.b16 %v4274, %v4271
      %v4347 = vpack.c.b16 %v4278, %v4275
      %v4348 = vpack.c.b16 %v4279, %v4276
      %v4349 = vpack.c.b16 %v4280, %v4277
      %v4350 = vpack.c.b16 %v4284, %v4281
      %v4351 = vpack.c.b16 %v4285, %v4282
      %v4352 = vpack.c.b16 %v4286, %v4283
      %v4353 = vpack.c.b16 %v4290, %v4287
      %v4354 = vpack.c.b16 %v4291, %v4288
      %v4355 = vpack.c.b16 %v4292, %v4289
      %v4356 = vpack.c.b16 %v4296, %v4293
      %v4357 = vpack.c.b16 %v4297, %v4294
      %v4358 = vpack.c.b16 %v4298, %v4295
      %v4359 = vpack.c.b16 %v4302, %v4299
      %v4360 = vpack.c.b16 %v4303, %v4300
      %v4361 = vpack.c.b16 %v4304, %v4301
      %v4362 = vpack.c.b16 %v4308, %v4305
      %v4363 = vpack.c.b16 %v4309, %v4306
      %v4364 = vpack.c.b16 %v4310, %v4307
      %v4365 = vpack.c.b16 %v4314, %v4311
      %v4366 = vpack.c.b16 %v4315, %v4312
      %v4367 = vpack.c.b16 %v4316, %v4313
      %v4368 = vpack.c.b16 %v4320, %v4317
      %v4369 = vpack.c.b16 %v4321, %v4318
      %v4370 = vpack.c.b16 %v4322, %v4319
      %4419 = vmatprep.subr.bf16.mxu0 %v4324
      %4420 = vmatpush1.bf16.msra.mxu0 %v4323
      %4421 = vmatprep.subr.bf16.mxu0 %v4327
      %4422 = vmatpush1.bf16.msra.mxu0 %v4326
      %4423 = vmatprep.subr.bf16.mxu0 %v4330
      %4424 = vmatpush1.bf16.msra.mxu0 %v4329
      %4425 = vmatprep.subr.bf16.mxu0 %v4333
      %4426 = vmatpush1.bf16.msra.mxu0 %v4332
      %4427 = vmatprep.subr.bf16.mxu0 %v4336
      %4428 = vmatpush1.bf16.msra.mxu0 %v4335
      %4429 = vmatprep.subr.bf16.mxu0 %v4339
      %4430 = vmatpush1.bf16.msra.mxu0 %v4338
      %4431 = vmatprep.subr.bf16.mxu0 %v4342
      %4432 = vmatpush1.bf16.msra.mxu0 %v4341
      %4433 = vmatprep.subr.bf16.mxu0 %v4345
      %4434 = vmatpush1.bf16.msra.mxu0 %v4344
      %4435 = vmatprep.subr.bf16.mxu0 %v4348
      %4436 = vmatpush1.bf16.msra.mxu0 %v4347
      %4437 = vmatprep.subr.bf16.mxu0 %v4351
      %4438 = vmatpush1.bf16.msra.mxu0 %v4350
      %4439 = vmatprep.subr.bf16.mxu0 %v4354
      %4440 = vmatpush1.bf16.msra.mxu0 %v4353
      %4441 = vmatprep.subr.bf16.mxu0 %v4357
      %4442 = vmatpush1.bf16.msra.mxu0 %v4356
      %4443 = vmatprep.subr.bf16.mxu0 %v4360
      %4444 = vmatpush1.bf16.msra.mxu0 %v4359
      %4445 = vmatprep.subr.bf16.mxu0 %v4363
      %4446 = vmatpush1.bf16.msra.mxu0 %v4362
      %4447 = vmatprep.subr.bf16.mxu0 %v4366
      %4448 = vmatpush1.bf16.msra.mxu0 %v4365
      %4449 = vmatprep.subr.bf16.mxu0 %v4369
      %4450 = vmatpush1.bf16.msra.mxu0 %v4368
      %4451 = vmatprep.mubr.bf16.mxu0 %v4075
      %4452 = vmatmul.mubr.bf16.gmra.mrb[0].mxu0 %v4074
      %v4453 = vpop.f32.mrb[0].mxu0
      %v4454 = vadd.f32 %v4151, %v4453
      %v4455 = vpop.f32.mrb[0].mxu0
      %v4456 = vadd.f32 %v4155, %v4455
      %v4457 = vpop.f32.mrb[0].mxu0
      %v4458 = vadd.f32 %v4151, %v4457
      %v4459 = vpop.f32.mrb[0].mxu0
      %v4460 = vadd.f32 %v4155, %v4459
      %4461 = vmatprep.mubr.bf16.mxu0 %v4077
      %4462 = vmatmul.mubr.bf16.gmra.mrb[0].mxu0 %v4076
      %v4463 = vpop.f32.mrb[0].mxu0
      %v4464 = vadd.f32 %v4151, %v4463
      %v4465 = vpop.f32.mrb[0].mxu0
      %v4466 = vadd.f32 %v4155, %v4465
      %v4467 = vpop.f32.mrb[0].mxu0
      %v4468 = vadd.f32 %v4151, %v4467
      %v4469 = vpop.f32.mrb[0].mxu0
      %v4470 = vadd.f32 %v4155, %v4469
      %4471 = vmatprep.mubr.bf16.mxu0 %v4079
      %4472 = vmatmul.mubr.bf16.gmra.mrb[0].mxu0 %v4078
      %v4473 = vpop.f32.mrb[0].mxu0
      %v4474 = vadd.f32 %v4151, %v4473
      %v4475 = vpop.f32.mrb[0].mxu0
      %v4476 = vadd.f32 %v4155, %v4475
      %v4477 = vpop.f32.mrb[0].mxu0
      %v4478 = vadd.f32 %v4151, %v4477
      %v4479 = vpop.f32.mrb[0].mxu0
      %v4480 = vadd.f32 %v4155, %v4479
      %4481 = vmatprep.mubr.bf16.mxu0 %v4081
      %4482 = vmatmul.mubr.bf16.gmra.mrb[0].mxu0 %v4080
      %v4483 = vpop.f32.mrb[0].mxu0
      %v4484 = vadd.f32 %v4151, %v4483
      %v4485 = vpop.f32.mrb[0].mxu0
      %v4486 = vadd.f32 %v4155, %v4485
      %v4487 = vpop.f32.mrb[0].mxu0
      %v4488 = vadd.f32 %v4151, %v4487
      %v4489 = vpop.f32.mrb[0].mxu0
      %v4490 = vadd.f32 %v4155, %v4489
      %4491 = vdwg.mxu0
      %4492 = vmatprep.subr.bf16.mxu0 0
      %4493 = vmatpush1.bf16.msra.mxu0 %v4325
      %4494 = vmatprep.subr.bf16.mxu0 0
      %4495 = vmatpush1.bf16.msra.mxu0 %v4328
      %4496 = vmatprep.subr.bf16.mxu0 0
      %4497 = vmatpush1.bf16.msra.mxu0 %v4331
      %4498 = vmatprep.subr.bf16.mxu0 0
      %4499 = vmatpush1.bf16.msra.mxu0 %v4334
      %4500 = vmatprep.subr.bf16.mxu0 0
      %4501 = vmatpush1.bf16.msra.mxu0 %v4337
      %4502 = vmatprep.subr.bf16.mxu0 0
      %4503 = vmatpush1.bf16.msra.mxu0 %v4340
      %4504 = vmatprep.subr.bf16.mxu0 0
      %4505 = vmatpush1.bf16.msra.mxu0 %v4343
      %4506 = vmatprep.subr.bf16.mxu0 0
      %4507 = vmatpush1.bf16.msra.mxu0 %v4346
      %4508 = vmatprep.subr.bf16.mxu0 0
      %4509 = vmatpush1.bf16.msra.mxu0 %v4349
      %4510 = vmatprep.subr.bf16.mxu0 0
      %4511 = vmatpush1.bf16.msra.mxu0 %v4352
      %4512 = vmatprep.subr.bf16.mxu0 0
      %4513 = vmatpush1.bf16.msra.mxu0 %v4355
      %4514 = vmatprep.subr.bf16.mxu0 0
      %4515 = vmatpush1.bf16.msra.mxu0 %v4358
      %4516 = vmatprep.subr.bf16.mxu0 0
      %4517 = vmatpush1.bf16.msra.mxu0 %v4361
      %4518 = vmatprep.subr.bf16.mxu0 0
      %4519 = vmatpush1.bf16.msra.mxu0 %v4364
      %4520 = vmatprep.subr.bf16.mxu0 0
      %4521 = vmatpush1.bf16.msra.mxu0 %v4367
      %4522 = vmatprep.subr.bf16.mxu0 0
      %4523 = vmatpush1.bf16.msra.mxu0 %v4370
      %4524 = vmatprep.mubr.bf16.mxu0 %v4075
      %4525 = vmatmul.mubr.bf16.gmra.mrb[0].mxu0 %v4074
      %v4526 = vpop.f32.mrb[0].mxu0
      %v4527 = vadd.f32 %v4159, %v4526
      %v4528 = vpop.f32.mrb[0].mxu0
      %v4529 = vpop.f32.mrb[0].mxu0
      %v4530 = vadd.f32 %v4159, %v4529
      %v4531 = vpop.f32.mrb[0].mxu0
      %4532 = vmatprep.mubr.bf16.mxu0 %v4077
      %4533 = vmatmul.mubr.bf16.gmra.mrb[0].mxu0 %v4076
      %v4534 = vpop.f32.mrb[0].mxu0
      %v4535 = vadd.f32 %v4159, %v4534
      %v4536 = vpop.f32.mrb[0].mxu0
      %v4537 = vpop.f32.mrb[0].mxu0
      %v4538 = vadd.f32 %v4159, %v4537
      %v4539 = vpop.f32.mrb[0].mxu0
      %4540 = vmatprep.mubr.bf16.mxu0 %v4079
      %4541 = vmatmul.mubr.bf16.gmra.mrb[0].mxu0 %v4078
      %v4542 = vpop.f32.mrb[0].mxu0
      %v4543 = vadd.f32 %v4159, %v4542
      %v4544 = vpop.f32.mrb[0].mxu0
      %v4545 = vpop.f32.mrb[0].mxu0
      %v4546 = vadd.f32 %v4159, %v4545
      %v4547 = vpop.f32.mrb[0].mxu0
      %4548 = vmatprep.mubr.bf16.mxu0 %v4081
      %4549 = vmatmul.mubr.bf16.gmra.mrb[0].mxu0 %v4080
      %v4550 = vpop.f32.mrb[0].mxu0
      %v4551 = vadd.f32 %v4159, %v4550
      %v4552 = vpop.f32.mrb[0].mxu0
      %v4553 = vpop.f32.mrb[0].mxu0
      %v4554 = vadd.f32 %v4159, %v4553
      %v4555 = vpop.f32.mrb[0].mxu0
      %4556 = vdwg.mxu0
      %v4557 = vadd.f32 %v4527, -1.0
      %v4558 = vadd.f32 %v4530, -1.0
      %v4559 = vadd.f32 %v4535, -1.0
      %v4560 = vadd.f32 %v4538, -1.0
      %v4561 = vadd.f32 %v4543, -1.0
      %v4562 = vadd.f32 %v4546, -1.0
      %v4563 = vadd.f32 %v4551, -1.0
      %v4564 = vadd.f32 %v4554, -1.0
      %v4565 = vmax.f32 %v4557, 0.0
      %v4566 = vmax.f32 %v4558, 0.0
      %v4567 = vmax.f32 %v4559, 0.0
      %v4568 = vmax.f32 %v4560, 0.0
      %v4569 = vmax.f32 %v4561, 0.0
      %v4570 = vmax.f32 %v4562, 0.0
      %v4571 = vmax.f32 %v4563, 0.0
      %v4572 = vmax.f32 %v4564, 0.0
      %vm4573 = vcmp.ne.f32.partialorder %v4557, %v4557
      %vm4574 = vcmp.ne.f32.partialorder %v4558, %v4558
      %vm4575 = vcmp.ne.f32.partialorder %v4559, %v4559
      %vm4576 = vcmp.ne.f32.partialorder %v4560, %v4560
      %vm4577 = vcmp.ne.f32.partialorder %v4561, %v4561
      %vm4578 = vcmp.ne.f32.partialorder %v4562, %v4562
      %vm4579 = vcmp.ne.f32.partialorder %v4563, %v4563
      %vm4580 = vcmp.ne.f32.partialorder %v4564, %v4564
      %v4581 = vadd.f32 %v4557, 0.0
      %v4582 = vadd.f32 %v4558, 0.0
      %v4583 = vadd.f32 %v4559, 0.0
      %v4584 = vadd.f32 %v4560, 0.0
      %v4585 = vadd.f32 %v4561, 0.0
      %v4586 = vadd.f32 %v4562, 0.0
      %v4587 = vadd.f32 %v4563, 0.0
      %v4588 = vadd.f32 %v4564, 0.0
      %v4589 = vand.u32 2147483647, %v4557
      %v4590 = vand.u32 2147483647, %v4558
      %v4591 = vand.u32 2147483647, %v4559
      %v4592 = vand.u32 2147483647, %v4560
      %v4593 = vand.u32 2147483647, %v4561
      %v4594 = vand.u32 2147483647, %v4562
      %v4595 = vand.u32 2147483647, %v4563
      %v4596 = vand.u32 2147483647, %v4564
      %v4597 = vsub.f32 0.0, %v4589
      %v4598 = vsub.f32 0.0, %v4590
      %v4599 = vsub.f32 0.0, %v4591
      %v4600 = vsub.f32 0.0, %v4592
      %v4601 = vsub.f32 0.0, %v4593
      %v4602 = vsub.f32 0.0, %v4594
      %v4603 = vsub.f32 0.0, %v4595
      %v4604 = vsub.f32 0.0, %v4596
      %v4605 = vmul.f32 %v4597, 1.442695
      %v4606 = vpow.pop %v4605
      %v4607 = vmul.f32 %v4598, 1.442695
      %v4608 = vpow.pop %v4607
      %v4609 = vmul.f32 %v4599, 1.442695
      %v4610 = vpow.pop %v4609
      %v4611 = vmul.f32 %v4600, 1.442695
      %v4612 = vpow.pop %v4611
      %v4613 = vmul.f32 %v4601, 1.442695
      %v4614 = vpow.pop %v4613
      %v4615 = vmul.f32 %v4602, 1.442695
      %v4616 = vpow.pop %v4615
      %v4617 = vmul.f32 %v4603, 1.442695
      %v4618 = vpow.pop %v4617
      %v4619 = vmul.f32 %v4604, 1.442695
      %v4620 = vpow.pop %v4619
      %v4621 = vadd.f32 %v4606, 1.0
      %v4622 = vlog2.pop %v4621
      %v4623 = vmul.f32 %v4622, 0.6931472
      %v4624 = vmul.f32 -0.5, %v4606
      %v4625 = vadd.f32 %v4624, 1.0
      %v4626 = vmul.f32 %v4625, %v4606
      %v4627 = vand.u32 2147483647, %v4606
      %vm4628 = vcmp.lt.f32.partialorder %v4627, 0.0004427343
      %v4629 = vsel %vm4628, %v4626, %v4623
      %v4630 = vadd.f32 %v4608, 1.0
      %v4631 = vlog2.pop %v4630
      %v4632 = vmul.f32 %v4631, 0.6931472
      %v4633 = vmul.f32 -0.5, %v4608
      %v4634 = vadd.f32 %v4633, 1.0
      %v4635 = vmul.f32 %v4634, %v4608
      %v4636 = vand.u32 2147483647, %v4608
      %vm4637 = vcmp.lt.f32.partialorder %v4636, 0.0004427343
      %v4638 = vsel %vm4637, %v4635, %v4632
      %v4639 = vadd.f32 %v4610, 1.0
      %v4640 = vlog2.pop %v4639
      %v4641 = vmul.f32 %v4640, 0.6931472
      %v4642 = vmul.f32 -0.5, %v4610
      %v4643 = vadd.f32 %v4642, 1.0
      %v4644 = vmul.f32 %v4643, %v4610
      %v4645 = vand.u32 2147483647, %v4610
      %vm4646 = vcmp.lt.f32.partialorder %v4645, 0.0004427343
      %v4647 = vsel %vm4646, %v4644, %v4641
      %v4648 = vadd.f32 %v4612, 1.0
      %v4649 = vlog2.pop %v4648
      %v4650 = vmul.f32 %v4649, 0.6931472
      %v4651 = vmul.f32 -0.5, %v4612
      %v4652 = vadd.f32 %v4651, 1.0
      %v4653 = vmul.f32 %v4652, %v4612
      %v4654 = vand.u32 2147483647, %v4612
      %vm4655 = vcmp.lt.f32.partialorder %v4654, 0.0004427343
      %v4656 = vsel %vm4655, %v4653, %v4650
      %v4657 = vadd.f32 %v4614, 1.0
      %v4658 = vlog2.pop %v4657
      %v4659 = vmul.f32 %v4658, 0.6931472
      %v4660 = vmul.f32 -0.5, %v4614
      %v4661 = vadd.f32 %v4660, 1.0
      %v4662 = vmul.f32 %v4661, %v4614
      %v4663 = vand.u32 2147483647, %v4614
      %vm4664 = vcmp.lt.f32.partialorder %v4663, 0.0004427343
      %v4665 = vsel %vm4664, %v4662, %v4659
      %v4666 = vadd.f32 %v4616, 1.0
      %v4667 = vlog2.pop %v4666
      %v4668 = vmul.f32 %v4667, 0.6931472
      %v4669 = vmul.f32 -0.5, %v4616
      %v4670 = vadd.f32 %v4669, 1.0
      %v4671 = vmul.f32 %v4670, %v4616
      %v4672 = vand.u32 2147483647, %v4616
      %vm4673 = vcmp.lt.f32.partialorder %v4672, 0.0004427343
      %v4674 = vsel %vm4673, %v4671, %v4668
      %v4675 = vadd.f32 %v4618, 1.0
      %v4676 = vlog2.pop %v4675
      %v4677 = vmul.f32 %v4676, 0.6931472
      %v4678 = vmul.f32 -0.5, %v4618
      %v4679 = vadd.f32 %v4678, 1.0
      %v4680 = vmul.f32 %v4679, %v4618
      %v4681 = vand.u32 2147483647, %v4618
      %vm4682 = vcmp.lt.f32.partialorder %v4681, 0.0004427343
      %v4683 = vsel %vm4682, %v4680, %v4677
      %v4684 = vadd.f32 %v4620, 1.0
      %v4685 = vlog2.pop %v4684
      %v4686 = vmul.f32 %v4685, 0.6931472
      %v4687 = vmul.f32 -0.5, %v4620
      %v4688 = vadd.f32 %v4687, 1.0
      %v4689 = vmul.f32 %v4688, %v4620
      %v4690 = vand.u32 2147483647, %v4620
      %vm4691 = vcmp.lt.f32.partialorder %v4690, 0.0004427343
      %v4692 = vsel %vm4691, %v4689, %v4686
      %v4693 = vadd.f32 %v4565, %v4629
      %v4694 = vadd.f32 %v4566, %v4638
      %v4695 = vadd.f32 %v4567, %v4647
      %v4696 = vadd.f32 %v4568, %v4656
      %v4697 = vadd.f32 %v4569, %v4665
      %v4698 = vadd.f32 %v4570, %v4674
      %v4699 = vadd.f32 %v4571, %v4683
      %v4700 = vadd.f32 %v4572, %v4692
      %v4701 = vsel %vm4573, %v4581, %v4693
      %v4702 = vsel %vm4574, %v4582, %v4694
      %v4703 = vsel %vm4575, %v4583, %v4695
      %v4704 = vsel %vm4576, %v4584, %v4696
      %v4705 = vsel %vm4577, %v4585, %v4697
      %v4706 = vsel %vm4578, %v4586, %v4698
      %v4707 = vsel %vm4579, %v4587, %v4699
      %v4708 = vsel %vm4580, %v4588, %v4700
      %v4709 = vpack.c.bf16 %v4458, %v4454
      %v4710 = vpack.c.bf16 %v4460, %v4456
      %v4711 = vpack.c.bf16 %v4468, %v4464
      %v4712 = vpack.c.bf16 %v4470, %v4466
      %v4713 = vpack.c.bf16 %v4478, %v4474
      %v4714 = vpack.c.bf16 %v4480, %v4476
      %v4715 = vpack.c.bf16 %v4488, %v4484
      %v4716 = vpack.c.bf16 %v4490, %v4486
      %v4717 = vld [vmem:[%s21] sm:$0xf]
      %v4718 = vld [vmem:[%s21 + $0x4] sm:$0xf]
      %v4719 = vld [vmem:[%s21 + $0x8] sm:$0xf]
      %v4720 = vld [vmem:[%s21 + $0xc] sm:$0xf]
      %v4721 = vld [vmem:[%s21 + $0x10] sm:$0xf]
      %v4722 = vld [vmem:[%s21 + $0x14] sm:$0xf]
      %v4723 = vld [vmem:[%s21 + $0x18] sm:$0xf]
      %v4724 = vld [vmem:[%s21 + $0x1c] sm:$0xf]
      %v4725 = vld [vmem:[%s21 + $0x20] sm:$0xf]
      %v4726 = vld [vmem:[%s21 + $0x24] sm:$0xf]
      %v4727 = vld [vmem:[%s21 + $0x28] sm:$0xf]
      %v4728 = vld [vmem:[%s21 + $0x2c] sm:$0xf]
      %v4729 = vld [vmem:[%s21 + $0x30] sm:$0xf]
      %v4730 = vld [vmem:[%s21 + $0x34] sm:$0xf]
      %v4731 = vld [vmem:[%s21 + $0x38] sm:$0xf]
      %v4732 = vld [vmem:[%s21 + $0x3c] sm:$0xf]
      %v4733 = vld [vmem:[%s21 + $0x40] sm:$0xf]
      %v4734 = vld [vmem:[%s21 + $0x44] sm:$0xf]
      %v4735 = vld [vmem:[%s21 + $0x48] sm:$0xf]
      %v4736 = vld [vmem:[%s21 + $0x4c] sm:$0xf]
      %v4737 = vld [vmem:[%s21 + $0x50] sm:$0xf]
      %v4738 = vld [vmem:[%s21 + $0x54] sm:$0xf]
      %v4739 = vld [vmem:[%s21 + $0x58] sm:$0xf]
      %v4740 = vld [vmem:[%s21 + $0x5c] sm:$0xf]
      %v4741 = vld [vmem:[%s21 + $0x60] sm:$0xf]
      %v4742 = vld [vmem:[%s21 + $0x64] sm:$0xf]
      %v4743 = vld [vmem:[%s21 + $0x68] sm:$0xf]
      %v4744 = vld [vmem:[%s21 + $0x6c] sm:$0xf]
      %v4745 = vld [vmem:[%s21 + $0x70] sm:$0xf]
      %v4746 = vld [vmem:[%s21 + $0x74] sm:$0xf]
      %v4747 = vld [vmem:[%s21 + $0x78] sm:$0xf]
      %v4748 = vld [vmem:[%s21 + $0x7c] sm:$0xf]
      %v4749 = vld [vmem:[%s758] sm:$0xff]
      %v4750 = vld [vmem:[%s758 + $0x8] sm:$0xff]
      %v4751 = vld [vmem:[%s758 + $0x10] sm:$0xff]
      %v4752 = vld [vmem:[%s758 + $0x18] sm:$0xff]
      %v4753 = vld [vmem:[%s758 + $0x20] sm:$0xff]
      %v4754 = vld [vmem:[%s758 + $0x28] sm:$0xff]
      %v4755 = vld [vmem:[%s758 + $0x30] sm:$0xff]
      %v4756 = vld [vmem:[%s758 + $0x38] sm:$0xff]
      %v4789 = vunpack.c.l.b16 %v4717
      %v4790 = vunpack.c.l.b16 %v4718
      %v4791 = vunpack.c.l.b16 %v4719
      %v4792 = vunpack.c.l.b16 %v4720
      %v4793 = vunpack.c.l.b16 %v4721
      %v4794 = vunpack.c.l.b16 %v4722
      %v4795 = vunpack.c.l.b16 %v4723
      %v4796 = vunpack.c.l.b16 %v4724
      %v4797 = vunpack.c.l.b16 %v4725
      %v4798 = vunpack.c.l.b16 %v4726
      %v4799 = vunpack.c.l.b16 %v4727
      %v4800 = vunpack.c.l.b16 %v4728
      %v4801 = vunpack.c.l.b16 %v4729
      %v4802 = vunpack.c.l.b16 %v4730
      %v4803 = vunpack.c.l.b16 %v4731
      %v4804 = vunpack.c.l.b16 %v4732
      %v4805 = vunpack.c.l.b16 %v4733
      %v4806 = vunpack.c.l.b16 %v4734
      %v4807 = vunpack.c.l.b16 %v4735
      %v4808 = vunpack.c.l.b16 %v4736
      %v4809 = vunpack.c.l.b16 %v4737
      %v4810 = vunpack.c.l.b16 %v4738
      %v4811 = vunpack.c.l.b16 %v4739
      %v4812 = vunpack.c.l.b16 %v4740
      %v4813 = vunpack.c.l.b16 %v4741
      %v4814 = vunpack.c.l.b16 %v4742
      %v4815 = vunpack.c.l.b16 %v4743
      %v4816 = vunpack.c.l.b16 %v4744
      %v4817 = vunpack.c.l.b16 %v4745
      %v4818 = vunpack.c.l.b16 %v4746
      %v4819 = vunpack.c.l.b16 %v4747
      %v4820 = vunpack.c.l.b16 %v4748
      %v4821 = vpack.c.b16 %v4790, %v4789
      %v4822 = vpack.c.b16 %v4792, %v4791
      %v4823 = vpack.c.b16 %v4794, %v4793
      %v4824 = vpack.c.b16 %v4796, %v4795
      %v4825 = vpack.c.b16 %v4798, %v4797
      %v4826 = vpack.c.b16 %v4800, %v4799
      %v4827 = vpack.c.b16 %v4802, %v4801
      %v4828 = vpack.c.b16 %v4804, %v4803
      %v4829 = vpack.c.b16 %v4806, %v4805
      %v4830 = vpack.c.b16 %v4808, %v4807
      %v4831 = vpack.c.b16 %v4810, %v4809
      %v4832 = vpack.c.b16 %v4812, %v4811
      %v4833 = vpack.c.b16 %v4814, %v4813
      %v4834 = vpack.c.b16 %v4816, %v4815
      %v4835 = vpack.c.b16 %v4818, %v4817
      %v4836 = vpack.c.b16 %v4820, %v4819
      %4853 = vmatprep.subr.bf16.mxu0 0
      %4854 = vmatpush1.bf16.msra.mxu0 %v4821
      %4855 = vmatprep.subr.bf16.mxu0 0
      %4856 = vmatpush1.bf16.msra.mxu0 %v4822
      %4857 = vmatprep.subr.bf16.mxu0 0
      %4858 = vmatpush1.bf16.msra.mxu0 %v4823
      %4859 = vmatprep.subr.bf16.mxu0 0
      %4860 = vmatpush1.bf16.msra.mxu0 %v4824
      %4861 = vmatprep.subr.bf16.mxu0 0
      %4862 = vmatpush1.bf16.msra.mxu0 %v4825
      %4863 = vmatprep.subr.bf16.mxu0 0
      %4864 = vmatpush1.bf16.msra.mxu0 %v4826
      %4865 = vmatprep.subr.bf16.mxu0 0
      %4866 = vmatpush1.bf16.msra.mxu0 %v4827
      %4867 = vmatprep.subr.bf16.mxu0 0
      %4868 = vmatpush1.bf16.msra.mxu0 %v4828
      %4869 = vmatprep.subr.bf16.mxu0 0
      %4870 = vmatpush1.bf16.msra.mxu0 %v4829
      %4871 = vmatprep.subr.bf16.mxu0 0
      %4872 = vmatpush1.bf16.msra.mxu0 %v4830
      %4873 = vmatprep.subr.bf16.mxu0 0
      %4874 = vmatpush1.bf16.msra.mxu0 %v4831
      %4875 = vmatprep.subr.bf16.mxu0 0
      %4876 = vmatpush1.bf16.msra.mxu0 %v4832
      %4877 = vmatprep.subr.bf16.mxu0 0
      %4878 = vmatpush1.bf16.msra.mxu0 %v4833
      %4879 = vmatprep.subr.bf16.mxu0 0
      %4880 = vmatpush1.bf16.msra.mxu0 %v4834
      %4881 = vmatprep.subr.bf16.mxu0 0
      %4882 = vmatpush1.bf16.msra.mxu0 %v4835
      %4883 = vmatprep.subr.bf16.mxu0 0
      %4884 = vmatpush1.bf16.msra.mxu0 %v4836
      %4885 = vmatprep.mubr.bf16.mxu0 %v4710
      %4886 = vmatmul.mubr.bf16.gmra.mrb[0].mxu0 %v4709
      %v4887 = vpop.f32.mrb[0].mxu0
      %v4888 = vadd.f32 %v4749, %v4887
      %v4889 = vpop.f32.mrb[0].mxu0
      %v4890 = vpop.f32.mrb[0].mxu0
      %v4891 = vadd.f32 %v4750, %v4890
      %v4892 = vpop.f32.mrb[0].mxu0
      %4893 = vmatprep.mubr.bf16.mxu0 %v4712
      %4894 = vmatmul.mubr.bf16.gmra.mrb[0].mxu0 %v4711
      %v4895 = vpop.f32.mrb[0].mxu0
      %v4896 = vadd.f32 %v4751, %v4895
      %v4897 = vpop.f32.mrb[0].mxu0
      %v4898 = vpop.f32.mrb[0].mxu0
      %v4899 = vadd.f32 %v4752, %v4898
      %v4900 = vpop.f32.mrb[0].mxu0
      %4901 = vmatprep.mubr.bf16.mxu0 %v4714
      %4902 = vmatmul.mubr.bf16.gmra.mrb[0].mxu0 %v4713
      %v4903 = vpop.f32.mrb[0].mxu0
      %v4904 = vadd.f32 %v4753, %v4903
      %v4905 = vpop.f32.mrb[0].mxu0
      %v4906 = vpop.f32.mrb[0].mxu0
      %v4907 = vadd.f32 %v4754, %v4906
      %v4908 = vpop.f32.mrb[0].mxu0
      %4909 = vmatprep.mubr.bf16.mxu0 %v4716
      %4910 = vmatmul.mubr.bf16.gmra.mrb[0].mxu0 %v4715
      %v4911 = vpop.f32.mrb[0].mxu0
      %v4912 = vadd.f32 %v4755, %v4911
      %v4913 = vpop.f32.mrb[0].mxu0
      %v4914 = vpop.f32.mrb[0].mxu0
      %v4915 = vadd.f32 %v4756, %v4914
      %v4916 = vpop.f32.mrb[0].mxu0
      %4917 = vdwg.mxu0
      %v4918 = vmax.f32 %v4888, 0.0
      %v4919 = vmax.f32 %v4891, 0.0
      %v4920 = vmax.f32 %v4896, 0.0
      %v4921 = vmax.f32 %v4899, 0.0
      %v4922 = vmax.f32 %v4904, 0.0
      %v4923 = vmax.f32 %v4907, 0.0
      %v4924 = vmax.f32 %v4912, 0.0
      %v4925 = vmax.f32 %v4915, 0.0
      %v4926 = vpack.c.bf16 %v4919, %v4918
      %v4927 = vpack.c.bf16 %v4921, %v4920
      %v4928 = vpack.c.bf16 %v4923, %v4922
      %v4929 = vpack.c.bf16 %v4925, %v4924
      %v4930 = vld [vmem:[%s22] sm:$0xf]
      %v4931 = vld [vmem:[%s22 + $0x4] sm:$0xf]
      %v4932 = vld [vmem:[%s22 + $0x8] sm:$0xf]
      %v4933 = vld [vmem:[%s22 + $0xc] sm:$0xf]
      %v4934 = vld [vmem:[%s22 + $0x10] sm:$0xf]
      %v4935 = vld [vmem:[%s22 + $0x14] sm:$0xf]
      %v4936 = vld [vmem:[%s22 + $0x18] sm:$0xf]
      %v4937 = vld [vmem:[%s22 + $0x1c] sm:$0xf]
      %v4938 = vld [vmem:[%s22 + $0x20] sm:$0xf]
      %v4939 = vld [vmem:[%s22 + $0x24] sm:$0xf]
      %v4940 = vld [vmem:[%s22 + $0x28] sm:$0xf]
      %v4941 = vld [vmem:[%s22 + $0x2c] sm:$0xf]
      %v4942 = vld [vmem:[%s22 + $0x30] sm:$0xf]
      %v4943 = vld [vmem:[%s22 + $0x34] sm:$0xf]
      %v4944 = vld [vmem:[%s22 + $0x38] sm:$0xf]
      %v4945 = vld [vmem:[%s22 + $0x3c] sm:$0xf]
      %v4946 = vld [vmem:[%s23] sm:$0x1]
      %v4948 = vlaneseq
      %v4949 = vshrl.u32 %v4948, 7
      %v4950 = vsub.s32 0, %v4949
      %v4951 = vrot.slane %v4946, %v4950
      %v4969 = vunpack.c.l.b16 %v4930
      %v4970 = vunpack.c.l.b16 %v4931
      %v4971 = vunpack.c.l.b16 %v4932
      %v4972 = vunpack.c.l.b16 %v4933
      %v4973 = vunpack.c.l.b16 %v4934
      %v4974 = vunpack.c.l.b16 %v4935
      %v4975 = vunpack.c.l.b16 %v4936
      %v4976 = vunpack.c.l.b16 %v4937
      %v4977 = vunpack.c.l.b16 %v4938
      %v4978 = vunpack.c.l.b16 %v4939
      %v4979 = vunpack.c.l.b16 %v4940
      %v4980 = vunpack.c.l.b16 %v4941
      %v4981 = vunpack.c.l.b16 %v4942
      %v4982 = vunpack.c.l.b16 %v4943
      %v4983 = vunpack.c.l.b16 %v4944
      %v4984 = vunpack.c.l.b16 %v4945
      %v4985 = vpack.c.b16 %v4970, %v4969
      %v4986 = vpack.c.b16 %v4972, %v4971
      %v4987 = vpack.c.b16 %v4974, %v4973
      %v4988 = vpack.c.b16 %v4976, %v4975
      %v4989 = vpack.c.b16 %v4978, %v4977
      %v4990 = vpack.c.b16 %v4980, %v4979
      %v4991 = vpack.c.b16 %v4982, %v4981
      %v4992 = vpack.c.b16 %v4984, %v4983
      %5001 = vmatprep.subr.bf16.mxu0 0
      %5002 = vmatpush1.bf16.msra.mxu0 %v4985
      %5003 = vmatprep.subr.bf16.mxu0 0
      %5004 = vmatpush1.bf16.msra.mxu0 %v4986
      %5005 = vmatprep.subr.bf16.mxu0 0
      %5006 = vmatpush1.bf16.msra.mxu0 %v4987
      %5007 = vmatprep.subr.bf16.mxu0 0
      %5008 = vmatpush1.bf16.msra.mxu0 %v4988
      %5009 = vmatprep.subr.bf16.mxu0 0
      %5010 = vmatpush1.bf16.msra.mxu0 %v4989
      %5011 = vmatprep.subr.bf16.mxu0 0
      %5012 = vmatpush1.bf16.msra.mxu0 %v4990
      %5013 = vmatprep.subr.bf16.mxu0 0
      %5014 = vmatpush1.bf16.msra.mxu0 %v4991
      %5015 = vmatprep.subr.bf16.mxu0 0
      %5016 = vmatpush1.bf16.msra.mxu0 %v4992
      %5017 = vmatprep.subr.bf16.mxu0 0
      %5018 = vmatpush1.bf16.msra.mxu0 0
      %5019 = vmatprep.subr.bf16.mxu0 0
      %5020 = vmatpush1.bf16.msra.mxu0 0
      %5021 = vmatprep.subr.bf16.mxu0 0
      %5022 = vmatpush1.bf16.msra.mxu0 0
      %5023 = vmatprep.subr.bf16.mxu0 0
      %5024 = vmatpush1.bf16.msra.mxu0 0
      %5025 = vmatprep.subr.bf16.mxu0 0
      %5026 = vmatpush1.bf16.msra.mxu0 0
      %5027 = vmatprep.subr.bf16.mxu0 0
      %5028 = vmatpush1.bf16.msra.mxu0 0
      %5029 = vmatprep.subr.bf16.mxu0 0
      %5030 = vmatpush1.bf16.msra.mxu0 0
      %5031 = vmatprep.subr.bf16.mxu0 0
      %5032 = vmatpush1.bf16.msra.mxu0 0
      %5033 = vmatprep.mubr.bf16.mxu0 0
      %5034 = vmatmul.mubr.bf16.gmra.mrb[0].mxu0 %v4926
      %v5035 = vpop.f32.mrb[0].mxu0
      %v5036 = vadd.f32 %v4951, %v5035
      %v5037 = vpop.f32.mrb[0].mxu0
      %v5038 = vpop.f32.mrb[0].mxu0
      %v5039 = vadd.f32 %v4951, %v5038
      %v5040 = vpop.f32.mrb[0].mxu0
      %5041 = vmatprep.mubr.bf16.mxu0 0
      %5042 = vmatmul.mubr.bf16.gmra.mrb[0].mxu0 %v4927
      %v5043 = vpop.f32.mrb[0].mxu0
      %v5044 = vadd.f32 %v4951, %v5043
      %v5045 = vpop.f32.mrb[0].mxu0
      %v5046 = vpop.f32.mrb[0].mxu0
      %v5047 = vadd.f32 %v4951, %v5046
      %v5048 = vpop.f32.mrb[0].mxu0
      %5049 = vmatprep.mubr.bf16.mxu0 0
      %5050 = vmatmul.mubr.bf16.gmra.mrb[0].mxu0 %v4928
      %v5051 = vpop.f32.mrb[0].mxu0
      %v5052 = vadd.f32 %v4951, %v5051
      %v5053 = vpop.f32.mrb[0].mxu0
      %v5054 = vpop.f32.mrb[0].mxu0
      %v5055 = vadd.f32 %v4951, %v5054
      %v5056 = vpop.f32.mrb[0].mxu0
      %5057 = vmatprep.mubr.bf16.mxu0 0
      %5058 = vmatmul.mubr.bf16.gmra.mrb[0].mxu0 %v4929
      %v5059 = vpop.f32.mrb[0].mxu0
      %v5060 = vadd.f32 %v4951, %v5059
      %v5061 = vpop.f32.mrb[0].mxu0
      %v5062 = vpop.f32.mrb[0].mxu0
      %v5063 = vadd.f32 %v4951, %v5062
      %v5064 = vpop.f32.mrb[0].mxu0
      %5065 = vdwg.mxu0
      %v5066 = vadd.f32 %v5036, 0.0
      %v5067 = vadd.f32 %v5039, 0.0
      %v5068 = vadd.f32 %v5044, 0.0
      %v5069 = vadd.f32 %v5047, 0.0
      %v5070 = vadd.f32 %v5052, 0.0
      %v5071 = vadd.f32 %v5055, 0.0
      %v5072 = vadd.f32 %v5060, 0.0
      %v5073 = vadd.f32 %v5063, 0.0
      %v5074 = vxor.u32 %v5066, 2147483648
      %v5075 = vxor.u32 %v5067, 2147483648
      %v5076 = vxor.u32 %v5068, 2147483648
      %v5077 = vxor.u32 %v5069, 2147483648
      %v5078 = vxor.u32 %v5070, 2147483648
      %v5079 = vxor.u32 %v5071, 2147483648
      %v5080 = vxor.u32 %v5072, 2147483648
      %v5081 = vxor.u32 %v5073, 2147483648
      %v5082 = vmul.f32 %v5074, 1.442695
      %v5083 = vpow.pop %v5082
      %v5084 = vmul.f32 %v5075, 1.442695
      %v5085 = vpow.pop %v5084
      %v5086 = vmul.f32 %v5076, 1.442695
      %v5087 = vpow.pop %v5086
      %v5088 = vmul.f32 %v5077, 1.442695
      %v5089 = vpow.pop %v5088
      %v5090 = vmul.f32 %v5078, 1.442695
      %v5091 = vpow.pop %v5090
      %v5092 = vmul.f32 %v5079, 1.442695
      %v5093 = vpow.pop %v5092
      %v5094 = vmul.f32 %v5080, 1.442695
      %v5095 = vpow.pop %v5094
      %v5096 = vmul.f32 %v5081, 1.442695
      %v5097 = vpow.pop %v5096
      %v5098 = vadd.f32 %v5083, 1.0
      %v5099 = vadd.f32 %v5085, 1.0
      %v5100 = vadd.f32 %v5087, 1.0
      %v5101 = vadd.f32 %v5089, 1.0
      %v5102 = vadd.f32 %v5091, 1.0
      %v5103 = vadd.f32 %v5093, 1.0
      %v5104 = vadd.f32 %v5095, 1.0
      %v5105 = vadd.f32 %v5097, 1.0
      %v5106 = vrcp.pop %v5098
      %v5107 = vmul.f32 1.0, %v5106
      %v5108 = vrcp.pop %v5099
      %v5109 = vmul.f32 1.0, %v5108
      %v5110 = vrcp.pop %v5100
      %v5111 = vmul.f32 1.0, %v5110
      %v5112 = vrcp.pop %v5101
      %v5113 = vmul.f32 1.0, %v5112
      %v5114 = vrcp.pop %v5102
      %v5115 = vmul.f32 1.0, %v5114
      %v5116 = vrcp.pop %v5103
      %v5117 = vmul.f32 1.0, %v5116
      %v5118 = vrcp.pop %v5104
      %v5119 = vmul.f32 1.0, %v5118
      %v5120 = vrcp.pop %v5105
      %v5121 = vmul.f32 1.0, %v5120
      %v5122 = vmul.f32 %v5107, 1.002
      %v5123 = vmul.f32 %v5109, 1.002
      %v5124 = vmul.f32 %v5111, 1.002
      %v5125 = vmul.f32 %v5113, 1.002
      %v5126 = vmul.f32 %v5115, 1.002
      %v5127 = vmul.f32 %v5117, 1.002
      %v5128 = vmul.f32 %v5119, 1.002
      %v5129 = vmul.f32 %v5121, 1.002
      %v5130 = vsub.f32 %v5122, 0.001
      %v5131 = vsub.f32 %v5123, 0.001
      %v5132 = vsub.f32 %v5124, 0.001
      %v5133 = vsub.f32 %v5125, 0.001
      %v5134 = vsub.f32 %v5126, 0.001
      %v5135 = vsub.f32 %v5127, 0.001
      %v5136 = vsub.f32 %v5128, 0.001
      %v5137 = vsub.f32 %v5129, 0.001
      %v5138 = vlaneseq
      %v5139 = vand.u32 %v5138, 127
      %vm5140 = vcmp.eq.s32.totalorder %v5139, 0
      %5142 = vset.pattern.permute.xlu0 0
      %5143 = vperm.xlu0 %5142, %v4701
      %v5144 = vpop.permute.xlu0 %5143
      %5147 = vset.pattern.permute.xlu0 0
      %5148 = vperm.xlu0 %5147, %v4702
      %v5149 = vpop.permute.xlu0 %5148
      %5152 = vset.pattern.permute.xlu0 0
      %5153 = vperm.xlu0 %5152, %v4703
      %v5154 = vpop.permute.xlu0 %5153
      %5157 = vset.pattern.permute.xlu0 0
      %5158 = vperm.xlu0 %5157, %v4704
      %v5159 = vpop.permute.xlu0 %5158
      %5162 = vset.pattern.permute.xlu0 0
      %5163 = vperm.xlu0 %5162, %v4705
      %v5164 = vpop.permute.xlu0 %5163
      %5167 = vset.pattern.permute.xlu0 0
      %5168 = vperm.xlu0 %5167, %v4706
      %v5169 = vpop.permute.xlu0 %5168
      %5172 = vset.pattern.permute.xlu0 0
      %5173 = vperm.xlu0 %5172, %v4707
      %v5174 = vpop.permute.xlu0 %5173
      %5177 = vset.pattern.permute.xlu0 0
      %5178 = vperm.xlu0 %5177, %v4708
      %v5179 = vpop.permute.xlu0 %5178
      %v5181 = vsel %vm5140, %v5144, %v5130
      %v5182 = vsel %vm5140, %v5149, %v5131
      %v5183 = vsel %vm5140, %v5154, %v5132
      %v5184 = vsel %vm5140, %v5159, %v5133
      %v5185 = vsel %vm5140, %v5164, %v5134
      %v5186 = vsel %vm5140, %v5169, %v5135
      %v5187 = vsel %vm5140, %v5174, %v5136
      %v5188 = vsel %vm5140, %v5179, %v5137
      %5189 = vst [vmem:[%s764] sm:$0xff] %v5181
      %5190 = vst [vmem:[%s764 + $0x8] sm:$0xff] %v5182
      %5191 = vst [vmem:[%s764 + $0x10] sm:$0xff] %v5183
      %5192 = vst [vmem:[%s764 + $0x18] sm:$0xff] %v5184
      %5193 = vst [vmem:[%s764 + $0x20] sm:$0xff] %v5185
      %5194 = vst [vmem:[%s764 + $0x28] sm:$0xff] %v5186
      %5195 = vst [vmem:[%s764 + $0x30] sm:$0xff] %v5187
      %5196 = vst [vmem:[%s764 + $0x38] sm:$0xff] %v5188
      %s5197 = smul.u32 8, %s35
      %p5198 = scmp.lt.s32.totalorder %s5197, 15
      %s5199 = scalar_select %p5198, %s5197, 15
      %s5200 = smul.addr %s5199, 8
      %s5201 = scalar_lea.vmem %s24, %s5200
      // Predicated region
      $region117: #{mipnerf360_mlp_forward.1} parent=115 // pred_check
        %p5202 = pneg %p567
      $region118: #{mipnerf360_mlp_forward.1} parent=115 // pred_check_branch
        %5204 = sbr.rel (%p5202) target = $region120
      $region119: #{mipnerf360_mlp_forward.1} parent=115 // pred_region
        %s5205 = smul.u32 8, %s35
      $region120: #{mipnerf360_mlp_forward.1} parent=115 // pred_fallthru
        _
    $region116: #{mipnerf360_mlp_forward.1} parent=5 // pred_fallthru
      _
    %p5206 = scmp.le.s32.totalorder 2, %s30
    // Predicated region
    $region121: #{mipnerf360_mlp_forward.1} parent=5 // pred_check
      %p5207 = pneg %p5206
    $region122: #{mipnerf360_mlp_forward.1} parent=5 // pred_check_branch
      %5209 = sbr.rel (%p5207) target = $region124
    $region123: #{mipnerf360_mlp_forward.1} parent=5 // pred_region
      %s5210 = ssub.s32 %s30, 2
      // Predicated region
      $region125: #{mipnerf360_mlp_forward.1} parent=123 // pred_check
        %p5211 = pneg %p573
      $region126: #{mipnerf360_mlp_forward.1} parent=123 // pred_check_branch
        %5213 = sbr.rel (%p5211) target = $region128
      $region127: #{mipnerf360_mlp_forward.1} parent=123 // pred_region
        %s5214 = smul.u32 8, %s36
        %p5215 = scmp.lt.s32.totalorder %s5214, 15
        %s5216 = scalar_select %p5215, %s5214, 15
        %s5217 = smul.addr %s5216, 8
        %s5218 = scalar_lea.vmem %s24, %s5217
      $region128: #{mipnerf360_mlp_forward.1} parent=123 // pred_fallthru
        _
    $region124: #{mipnerf360_mlp_forward.1} parent=5 // pred_fallthru
      _
  $region6: #{mipnerf360_mlp_forward.1} parent=0 // loop_footer
    %s34 = sadd.s32 1, %s30
  $region7: #{mipnerf360_mlp_forward.1} parent=0 // loop_footer_branch
    %29 = sbr.rel target = $region3
  $region8: #{mipnerf360_mlp_forward.1} parent=0 // loop_exit
    _

</llo_original>
